<compile_context>
chip_gen: v7x
topology: tpu7x:2x2x1
jax: 0.10.0
libtpu: 0.0.40
codegen_flags: <defaults>
</compile_context>

<pallas_src>
import functools

import jax
import jax.numpy as jnp
from jax.experimental import pallas as pl
from jax.experimental.pallas import tpu as pltpu

# Scoped VMEM budget for all kernels (fits v7x's 64 MiB physical with headroom).
VMEM_LIMIT = 48 * 1024 * 1024


# ----------------------------------------------------------------------------
# Generic tiled linear kernel: out = x @ w + b  (x cast to w.dtype, f32 accum).
# Used for the hoisted LSTM input projection and the JointNet projections.
# ----------------------------------------------------------------------------
def _linear_kernel(x_ref, w_ref, b_ref, out_ref):
    x = x_ref[...].astype(w_ref.dtype)                          # (Mt, K)
    acc = jnp.dot(x, w_ref[...], preferred_element_type=jnp.float32)
    out_ref[...] = (acc + b_ref[...]).astype(out_ref.dtype)


def linear(x2d, w, b_row, *, out_dtype=jnp.float32, m_tile=512):
    """x2d: (M, K), w: (K, N) (bf16), b_row: (1, N) f32 -> (M, N) out_dtype."""
    M, K = x2d.shape
    N = w.shape[1]
    mt = M if M <= m_tile else m_tile
    grid = (pl.cdiv(M, mt),)
    return pl.pallas_call(
        _linear_kernel,
        out_shape=jax.ShapeDtypeStruct((M, N), out_dtype),
        grid_spec=pltpu.PrefetchScalarGridSpec(
            num_scalar_prefetch=0,
            grid=grid,
            in_specs=[
                pl.BlockSpec((mt, K), lambda i: (i, 0)),
                pl.BlockSpec((K, N), lambda i: (0, 0)),
                pl.BlockSpec((1, N), lambda i: (0, 0)),
            ],
            out_specs=pl.BlockSpec((mt, N), lambda i: (i, 0)),
        ),
        compiler_params=pltpu.CompilerParams(
            dimension_semantics=("parallel",),
            vmem_limit_bytes=VMEM_LIMIT),
    )(x2d, w, b_row)


# ----------------------------------------------------------------------------
# LSTM recurrence kernel: consumes precomputed input gates gx = x@W_ih + bias
# (time-major), carries h/c in fp32 VMEM scratch, chunk of timesteps per grid
# step.  Grid = (batch_tiles [parallel], time_chunks [arbitrary]).
# PyTorch gate order: i, f, g, o.
# ----------------------------------------------------------------------------
def _lstm_recurrence_kernel(gx_ref, whh_ref, out_ref, h_ref, c_ref):
    tc = pl.program_id(1)

    @pl.when(tc == 0)
    def _():
        h_ref[...] = jnp.zeros_like(h_ref)
        c_ref[...] = jnp.zeros_like(c_ref)

    t_chunk = gx_ref.shape[0]
    H = h_ref.shape[-1]

    def step(i, carry):
        del carry
        # Only the recurrent matmul stays on the sequential critical path.
        gates = gx_ref[i] + jnp.dot(
            h_ref[...].astype(whh_ref.dtype), whh_ref[...],
            preferred_element_type=jnp.float32)                 # (Bb, 4H) f32
        # NOTE: for production sizes pick H as a multiple of 128 so these gate
        # slices are lane-aligned (pure VPU, no XLU shuffles).
        i_g = jax.nn.sigmoid(gates[:, 0 * H:1 * H])
        f_g = jax.nn.sigmoid(gates[:, 1 * H:2 * H])
        g_g = jnp.tanh(gates[:, 2 * H:3 * H])
        o_g = jax.nn.sigmoid(gates[:, 3 * H:4 * H])
        c = f_g * c_ref[...] + i_g * g_g
        h = o_g * jnp.tanh(c)
        c_ref[...] = c
        h_ref[...] = h
        out_ref[i] = h.astype(out_ref.dtype)
        return 0

    jax.lax.fori_loop(0, t_chunk, step, 0, unroll=t_chunk <= 8)


def lstm_layer_time_major(x_tbf, w_ih_t, w_hh_t, bias_row, *,
                          out_dtype=jnp.bfloat16, t_chunk=None, b_tile=None):
    """One LSTM layer, time-major.  x_tbf: (T, B, F) -> (T, B, H), zero init state.

    w_ih_t: (F, 4H) bf16, w_hh_t: (H, 4H) bf16, bias_row: (1, 4H) f32 (b_ih+b_hh).
    """
    T, B, F = x_tbf.shape
    H = w_hh_t.shape[0]

    # (1) Hoisted, time-independent input projection: one big MXU matmul.
    gx = linear(x_tbf.reshape(T * B, F), w_ih_t, bias_row,
                out_dtype=jnp.float32)
    gx = gx.reshape(T, B, 4 * H)                                # (T, B, 4H) f32

    # (2) Chunked sequential recurrence.
    tc = t_chunk if t_chunk is not None else (T if T <= 32 else 16)
    bb = b_tile if b_tile is not None else B                    # if set: multiple of 8
    grid = (pl.cdiv(B, bb), pl.cdiv(T, tc))

    # NOTE: W_hh has a constant index_map; at production H consider
    # single-buffering it (pipeline_mode) to halve its VMEM footprint.
    out = pl.pallas_call(
        _lstm_recurrence_kernel,
        out_shape=jax.ShapeDtypeStruct((T, B, H), out_dtype),
        grid_spec=pltpu.PrefetchScalarGridSpec(
            num_scalar_prefetch=0,
            grid=grid,
            in_specs=[
                pl.BlockSpec((tc, bb, 4 * H), lambda b, t: (t, b, 0)),
                pl.BlockSpec((H, 4 * H), lambda b, t: (0, 0)),
            ],
            out_specs=pl.BlockSpec((tc, bb, H), lambda b, t: (t, b, 0)),
            scratch_shapes=[pltpu.VMEM((bb, H), jnp.float32),
                            pltpu.VMEM((bb, H), jnp.float32)],
        ),
        compiler_params=pltpu.CompilerParams(
            dimension_semantics=("parallel", "arbitrary"),
            vmem_limit_bytes=VMEM_LIMIT),
    )(gx, w_hh_t)
    return out


def lstm_stack(x_btf, layers, *, t_chunk=None, b_tile=None):
    """Stacked LSTM, batch-first in/out; time-major internally (one transpose each way)."""
    x = jnp.transpose(x_btf, (1, 0, 2))                         # (T, B, F) once
    for (w_ih_t, w_hh_t, bias_row) in layers:
        # Inter-layer dropout is identity at inference.
        x = lstm_layer_time_major(x, w_ih_t, w_hh_t, bias_row,
                                  t_chunk=t_chunk, b_tile=b_tile)
    return jnp.transpose(x, (1, 0, 2))                          # (B, T, H) once


# ----------------------------------------------------------------------------
# JointNet combine kernel: tiles over (B, T, U1); per tile
#   tanh(e_tile[:,None,:] + p_tile[None,:,:]) reshaped to 2-D, @ Wo + bo.
# e / p are precomputed with the `linear` kernel above.
# ----------------------------------------------------------------------------
def _joint_combine_kernel(e_ref, p_ref, wo_ref, bo_ref, out_ref):
    e = e_ref[...]                                              # (Tt, J) f32
    p = p_ref[...]                                              # (Ut, J) f32
    h = jnp.tanh(e[:, None, :] + p[None, :, :])                 # (Tt, Ut, J) f32
    Tt, Ut, J = h.shape
    logits = jnp.dot(h.reshape(Tt * Ut, J).astype(wo_ref.dtype), wo_ref[...],
                     preferred_element_type=jnp.float32) + bo_ref[...]
    out_ref[...] = logits.reshape(Tt, Ut, -1).astype(out_ref.dtype)


def jointnet(enc, pred, joint_params, *, t_tile=None, u_tile=None):
    """enc: (B, T, He), pred: (B, U1, Hp) -> logits (B, T, U1, V) float32."""
    we, be, wp, bp, wo, bo = joint_params   # we:(He,J) wp:(Hp,J) wo:(J,V) bf16; biases (1,·) f32
    B, T, He = enc.shape
    _, U1, Hp = pred.shape
    J = we.shape[1]
    V = wo.shape[1]

    # Standalone projections as large MXU matmuls.
    e = linear(enc.reshape(B * T, He), we, be).reshape(B, T, J)      # f32
    p = linear(pred.reshape(B * U1, Hp), wp, bp).reshape(B, U1, J)   # f32

    tt = t_tile if t_tile is not None else (T if T <= 128 else 128)
    ut = u_tile if u_tile is not None else (U1 if U1 <= 64 else 64)
    grid = (B, pl.cdiv(T, tt), pl.cdiv(U1, ut))

    return pl.pallas_call(
        _joint_combine_kernel,
        out_shape=jax.ShapeDtypeStruct((B, T, U1, V), jnp.float32),
        grid_spec=pltpu.PrefetchScalarGridSpec(
            num_scalar_prefetch=0,
            grid=grid,
            in_specs=[
                pl.BlockSpec((None, tt, J), lambda b, ti, ui: (b, ti, 0)),
                pl.BlockSpec((None, ut, J), lambda b, ti, ui: (b, ui, 0)),
                pl.BlockSpec((J, V), lambda b, ti, ui: (0, 0)),
                pl.BlockSpec((1, V), lambda b, ti, ui: (0, 0)),
            ],
            out_specs=pl.BlockSpec((None, tt, ut, V),
                                   lambda b, ti, ui: (b, ti, ui, 0)),
        ),
        compiler_params=pltpu.CompilerParams(
            dimension_semantics=("parallel", "parallel", "parallel"),
            vmem_limit_bytes=VMEM_LIMIT),
    )(e, p, wo, bo)


# ----------------------------------------------------------------------------
# Parameter init (PyTorch-like layout/uniform) and kernel-friendly preparation.
# ----------------------------------------------------------------------------
def _init_lstm_stack(key, input_size, hidden_size, num_layers):
    layers = []
    k = 1.0 / (hidden_size ** 0.5)
    for l in range(num_layers):
        in_sz = input_size if l == 0 else hidden_size
        key, k0, k1, k2, k3 = jax.random.split(key, 5)
        w_ih = jax.random.uniform(k0, (4 * hidden_size, in_sz), jnp.float32, -k, k)
        w_hh = jax.random.uniform(k1, (4 * hidden_size, hidden_size), jnp.float32, -k, k)
        b_ih = jax.random.uniform(k2, (4 * hidden_size,), jnp.float32, -k, k)
        b_hh = jax.random.uniform(k3, (4 * hidden_size,), jnp.float32, -k, k)
        layers.append((w_ih, w_hh, b_ih, b_hh))
    return layers, key


def init_params(key, *, encoder_input_size, encoder_hidden_size,
                encoder_num_layers, vocab_size, embedding_size,
                predictor_hidden_size, predictor_num_layers,
                jointnet_hidden_size):
    enc_layers, key = _init_lstm_stack(key, encoder_input_size,
                                       encoder_hidden_size, encoder_num_layers)
    key, ke = jax.random.split(key)
    embedding = jax.random.normal(ke, (vocab_size, embedding_size), jnp.float32) * 0.1
    pred_layers, key = _init_lstm_stack(key, embedding_size,
                                        predictor_hidden_size, predictor_num_layers)
    key, k0, k1, k2, k3, k4, k5 = jax.random.split(key, 7)
    scale = 0.1
    we = jax.random.normal(k0, (encoder_hidden_size, jointnet_hidden_size), jnp.float32) * scale
    be = jax.random.normal(k1, (jointnet_hidden_size,), jnp.float32) * scale
    wp = jax.random.normal(k2, (predictor_hidden_size, jointnet_hidden_size), jnp.float32) * scale
    bp = jax.random.normal(k3, (jointnet_hidden_size,), jnp.float32) * scale
    wo = jax.random.normal(k4, (jointnet_hidden_size, vocab_size), jnp.float32) * scale
    bo = jax.random.normal(k5, (vocab_size,), jnp.float32) * scale
    return {
        "encoder": enc_layers,
        "embedding": embedding,
        "predictor": pred_layers,
        "joint": (we, be, wp, bp, wo, bo),
    }, key


def prepare_params(params):
    """Transpose + cast weights once (bf16 for MXU, fp32 fused bias rows)."""
    def prep_lstm(layers):
        prepped = []
        for (w_ih, w_hh, b_ih, b_hh) in layers:
            prepped.append((
                jnp.transpose(w_ih).astype(jnp.bfloat16),            # (F, 4H)
                jnp.transpose(w_hh).astype(jnp.bfloat16),            # (H, 4H)
                (b_ih + b_hh).reshape(1, -1).astype(jnp.float32),    # (1, 4H)
            ))
        return prepped

    we, be, wp, bp, wo, bo = params["joint"]
    return {
        "encoder": prep_lstm(params["encoder"]),
        "embedding": params["embedding"],
        "predictor": prep_lstm(params["predictor"]),
        "joint": (we.astype(jnp.bfloat16), be.reshape(1, -1).astype(jnp.float32),
                  wp.astype(jnp.bfloat16), bp.reshape(1, -1).astype(jnp.float32),
                  wo.astype(jnp.bfloat16), bo.reshape(1, -1).astype(jnp.float32)),
    }


# ----------------------------------------------------------------------------
# Full forward (mirrors LSTMModel.forward).
# ----------------------------------------------------------------------------
@functools.partial(jax.jit, static_argnums=(5,))
def rnnt_forward(params, padded_enc_input, padded_pred_input,
                 enc_input_lengths, pred_input_lengths, blank_idx):
    # Encoder: stacked LSTM (inter-layer dropout is identity at inference).
    padded_enc_output = lstm_stack(padded_enc_input, params["encoder"])
    # TODO(synk): LSTMEncoder source not provided; no time subsampling applied,
    # so "subsampled" lengths pass through unchanged.
    subsampled_enc_input_lengths = enc_input_lengths

    # Predictor: prepend blank token, embed (XLA gather glue), stacked LSTM.
    B, U = padded_pred_input.shape
    tokens = jnp.concatenate(
        [jnp.full((B, 1), blank_idx, padded_pred_input.dtype), padded_pred_input],
        axis=1)                                                  # (B, U+1)
    emb = jnp.take(params["embedding"], tokens, axis=0)          # (B, U+1, E)
    padded_pred_output = lstm_stack(emb, params["predictor"])    # (B, U+1, Hp)

    # JointNet -> (B, T, U+1, V)
    padded_output = jointnet(padded_enc_output, padded_pred_output,
                             params["joint"])
    return padded_output, subsampled_enc_input_lengths


if __name__ == "__main__":
    key = jax.random.PRNGKey(0)

    # Small config consistent with the module's constructor signature.
    B, T, U = 2, 8, 6
    encoder_input_size = 16
    encoder_hidden_size = 32
    encoder_num_layers = 2
    vocab_size = 16
    embedding_size = 16
    predictor_hidden_size = 32
    predictor_num_layers = 1
    jointnet_hidden_size = 32
    blank_idx = 0

    raw_params, key = init_params(
        key,
        encoder_input_size=encoder_input_size,
        encoder_hidden_size=encoder_hidden_size,
        encoder_num_layers=encoder_num_layers,
        vocab_size=vocab_size,
        embedding_size=embedding_size,
        predictor_hidden_size=predictor_hidden_size,
        predictor_num_layers=predictor_num_layers,
        jointnet_hidden_size=jointnet_hidden_size,
    )
    params = prepare_params(raw_params)

    k1, k2 = jax.random.split(key)
    padded_enc_input = jax.random.normal(k1, (B, T, encoder_input_size), jnp.float32)
    padded_pred_input = jax.random.randint(k2, (B, U), 1, vocab_size, jnp.int32)
    enc_input_lengths = jnp.array([T, T - 2], jnp.int32)
    pred_input_lengths = jnp.array([U, U - 1], jnp.int32)

    logits, out_lens = rnnt_forward(params, padded_enc_input, padded_pred_input,
                                    enc_input_lengths, pred_input_lengths,
                                    blank_idx)
    jax.block_until_ready((logits, out_lens))
    assert logits.shape == (B, T, U + 1, vocab_size), logits.shape
    assert out_lens.shape == (B,), out_lens.shape
    assert bool(jnp.all(jnp.isfinite(logits)))
    print("KERNEL_OK")
</pallas_src>

<mosaic_0001>
module attributes {stable_mosaic.version = 11 : i64} {
  func.func @_linear_kernel(%arg0: i32, %arg1: memref<14x16xf32, #tpu.memory_space<vmem>>, %arg2: memref<16x128xbf16, #tpu.memory_space<vmem>>, %arg3: memref<1x128xf32, #tpu.memory_space<vmem>>, %arg4: memref<14x128xf32, #tpu.memory_space<vmem>>) attributes {dimension_semantics = [#tpu.dimension_semantics<parallel>], iteration_bounds = array<i64: 1>, scalar_prefetch = 0 : i64, scratch_operands = 0 : i64, tpu.core_type = #tpu.core_type<tc>, window_params = [{transform_indices = @transform_0, window_bounds = array<i64: 14, 16>}, {pipeline_mode = #tpu.pipeline_mode<synchronous>, transform_indices = @transform_1, window_bounds = array<i64: 16, 128>}, {pipeline_mode = #tpu.pipeline_mode<synchronous>, transform_indices = @transform_2, window_bounds = array<i64: 1, 128>}, {transform_indices = @transform_3, window_bounds = array<i64: 14, 128>}]} {
    %c0 = arith.constant 0 : index
    %c0_0 = arith.constant 0 : index
    %0 = vector.load %arg1[%c0, %c0_0] : memref<14x16xf32, #tpu.memory_space<vmem>>, vector<14x16xf32>
    %1 = arith.truncf %0 : vector<14x16xf32> to vector<14x16xbf16>
    %c0_1 = arith.constant 0 : index
    %c0_2 = arith.constant 0 : index
    %2 = vector.load %arg2[%c0_1, %c0_2] : memref<16x128xbf16, #tpu.memory_space<vmem>>, vector<16x128xbf16>
    %cst = arith.constant dense<0.000000e+00> : vector<14x128xf32>
    %3 = tpu.matmul %1, %2, %cst {dimension_numbers = #tpu.dot_dimension_numbers<[1], [0], [0], [1], [0, 0, 1, 1], [], []>} : vector<14x16xbf16>, vector<16x128xbf16>, vector<14x128xf32> -> vector<14x128xf32>
    %c0_3 = arith.constant 0 : index
    %c0_4 = arith.constant 0 : index
    %4 = vector.load %arg3[%c0_3, %c0_4] : memref<1x128xf32, #tpu.memory_space<vmem>>, vector<1x128xf32>
    %5 = vector.broadcast %4 : vector<1x128xf32> to vector<14x128xf32>
    %6 = arith.addf %3, %5 : vector<14x128xf32>
    %c0_5 = arith.constant 0 : index
    %c0_6 = arith.constant 0 : index
    %7 = vector.load %arg4[%c0_5, %c0_6] : memref<14x128xf32, #tpu.memory_space<vmem>>, vector<14x128xf32>
    tpu.vector_store %arg4[%c0_5, %c0_6], %6 {strides = array<i32>} : memref<14x128xf32, #tpu.memory_space<vmem>>, vector<14x128xf32>,
    return
  }
  func.func @transform_0(%arg0: i32) -> (i32, i32) {
    %c0_i32 = arith.constant 0 : i32
    %c0_i32_0 = arith.constant 0 : i32
    return %arg0, %c0_i32 : i32, i32
  }
  func.func @transform_1(%arg0: i32) -> (i32, i32) {
    %c0_i32 = arith.constant 0 : i32
    %c0_i32_0 = arith.constant 0 : i32
    %c0_i32_1 = arith.constant 0 : i32
    return %c0_i32, %c0_i32_0 : i32, i32
  }
  func.func @transform_2(%arg0: i32) -> (i32, i32) {
    %c0_i32 = arith.constant 0 : i32
    %c0_i32_0 = arith.constant 0 : i32
    %c0_i32_1 = arith.constant 0 : i32
    return %c0_i32, %c0_i32_0 : i32, i32
  }
  func.func @transform_3(%arg0: i32) -> (i32, i32) {
    %c0_i32 = arith.constant 0 : i32
    %c0_i32_0 = arith.constant 0 : i32
    return %arg0, %c0_i32 : i32, i32
  }
}

module attributes {stable_mosaic.version = 11 : i64} {
  func.func @_linear_kernel(%arg0: i32, %arg1: memref<14x32xbf16, #tpu.memory_space<vmem>>, %arg2: memref<32x32xbf16, #tpu.memory_space<vmem>>, %arg3: memref<1x32xf32, #tpu.memory_space<vmem>>, %arg4: memref<14x32xf32, #tpu.memory_space<vmem>>) attributes {dimension_semantics = [#tpu.dimension_semantics<parallel>], iteration_bounds = array<i64: 1>, scalar_prefetch = 0 : i64, scratch_operands = 0 : i64, tpu.core_type = #tpu.core_type<tc>, window_params = [{transform_indices = @transform_0, window_bounds = array<i64: 14, 32>}, {pipeline_mode = #tpu.pipeline_mode<synchronous>, transform_indices = @transform_1, window_bounds = array<i64: 32, 32>}, {pipeline_mode = #tpu.pipeline_mode<synchronous>, transform_indices = @transform_2, window_bounds = array<i64: 1, 32>}, {transform_indices = @transform_3, window_bounds = array<i64: 14, 32>}]} {
    %c0 = arith.constant 0 : index
    %c0_0 = arith.constant 0 : index
    %0 = vector.load %arg1[%c0, %c0_0] : memref<14x32xbf16, #tpu.memory_space<vmem>>, vector<14x32xbf16>
    %c0_1 = arith.constant 0 : index
    %c0_2 = arith.constant 0 : index
    %1 = vector.load %arg2[%c0_1, %c0_2] : memref<32x32xbf16, #tpu.memory_space<vmem>>, vector<32x32xbf16>
    %cst = arith.constant dense<0.000000e+00> : vector<14x32xf32>
    %2 = tpu.matmul %0, %1, %cst {dimension_numbers = #tpu.dot_dimension_numbers<[1], [0], [0], [1], [0, 0, 1, 1], [], []>} : vector<14x32xbf16>, vector<32x32xbf16>, vector<14x32xf32> -> vector<14x32xf32>
    %c0_3 = arith.constant 0 : index
    %c0_4 = arith.constant 0 : index
    %3 = vector.load %arg3[%c0_3, %c0_4] : memref<1x32xf32, #tpu.memory_space<vmem>>, vector<1x32xf32>
    %4 = vector.broadcast %3 : vector<1x32xf32> to vector<14x32xf32>
    %5 = arith.addf %2, %4 : vector<14x32xf32>
    %c0_5 = arith.constant 0 : index
    %c0_6 = arith.constant 0 : index
    %6 = vector.load %arg4[%c0_5, %c0_6] : memref<14x32xf32, #tpu.memory_space<vmem>>, vector<14x32xf32>
    tpu.vector_store %arg4[%c0_5, %c0_6], %5 {strides = array<i32>} : memref<14x32xf32, #tpu.memory_space<vmem>>, vector<14x32xf32>,
    return
  }
  func.func @transform_0(%arg0: i32) -> (i32, i32) {
    %c0_i32 = arith.constant 0 : i32
    %c0_i32_0 = arith.constant 0 : i32
    return %arg0, %c0_i32 : i32, i32
  }
  func.func @transform_1(%arg0: i32) -> (i32, i32) {
    %c0_i32 = arith.constant 0 : i32
    %c0_i32_0 = arith.constant 0 : i32
    %c0_i32_1 = arith.constant 0 : i32
    return %c0_i32, %c0_i32_0 : i32, i32
  }
  func.func @transform_2(%arg0: i32) -> (i32, i32) {
    %c0_i32 = arith.constant 0 : i32
    %c0_i32_0 = arith.constant 0 : i32
    %c0_i32_1 = arith.constant 0 : i32
    return %c0_i32, %c0_i32_0 : i32, i32
  }
  func.func @transform_3(%arg0: i32) -> (i32, i32) {
    %c0_i32 = arith.constant 0 : i32
    %c0_i32_0 = arith.constant 0 : i32
    return %arg0, %c0_i32 : i32, i32
  }
}

module attributes {stable_mosaic.version = 11 : i64} {
  func.func @_lstm_recurrence_kernel(%arg0: i32, %arg1: i32, %arg2: memref<7x2x128xf32, #tpu.memory_space<vmem>>, %arg3: memref<32x128xbf16, #tpu.memory_space<vmem>>, %arg4: memref<7x2x32xbf16, #tpu.memory_space<vmem>>, %arg5: memref<2x32xf32, #tpu.memory_space<vmem>>, %arg6: memref<2x32xf32, #tpu.memory_space<vmem>>) attributes {dimension_semantics = [#tpu.dimension_semantics<parallel>, #tpu.dimension_semantics<arbitrary>], iteration_bounds = array<i64: 1, 1>, scalar_prefetch = 0 : i64, scratch_operands = 2 : i64, tpu.core_type = #tpu.core_type<tc>, window_params = [{transform_indices = @transform_0, window_bounds = array<i64: 7, 2, 128>}, {pipeline_mode = #tpu.pipeline_mode<synchronous>, transform_indices = @transform_1, window_bounds = array<i64: 32, 128>}, {transform_indices = @transform_2, window_bounds = array<i64: 7, 2, 32>}]} {
    %c0_i32 = arith.constant 0 : i32
    %0 = arith.cmpi eq, %arg1, %c0_i32 : i32
    %1 = arith.extui %0 : i1 to i32
    %c0_i32_0 = arith.constant 0 : i32
    %2 = arith.cmpi ne, %1, %c0_i32_0 : i32
    scf.if %2 {
      %cst_126 = arith.constant 0.000000e+00 : f32
      %290 = vector.broadcast %cst_126 : f32 to vector<2x32xf32>
      %c0_127 = arith.constant 0 : index
      %c0_128 = arith.constant 0 : index
      %291 = vector.load %arg5[%c0_127, %c0_128] : memref<2x32xf32, #tpu.memory_space<vmem>>, vector<2x32xf32>
      tpu.vector_store %arg5[%c0_127, %c0_128], %290 {strides = array<i32>} : memref<2x32xf32, #tpu.memory_space<vmem>>, vector<2x32xf32>,
      %cst_129 = arith.constant 0.000000e+00 : f32
      %292 = vector.broadcast %cst_129 : f32 to vector<2x32xf32>
      %c0_130 = arith.constant 0 : index
      %c0_131 = arith.constant 0 : index
      %293 = vector.load %arg6[%c0_130, %c0_131] : memref<2x32xf32, #tpu.memory_space<vmem>>, vector<2x32xf32>
      tpu.vector_store %arg6[%c0_130, %c0_131], %292 {strides = array<i32>} : memref<2x32xf32, #tpu.memory_space<vmem>>, vector<2x32xf32>,
    } else {
    }
    %c0_i32_1 = arith.constant 0 : i32
    %3 = arith.index_cast %c0_i32_1 : i32 to index
    %c0 = arith.constant 0 : index
    %c0_2 = arith.constant 0 : index
    %4 = vector.load %arg2[%3, %c0, %c0_2] : memref<7x2x128xf32, #tpu.memory_space<vmem>>, vector<1x2x128xf32>
    %5 = vector.shape_cast %4 : vector<1x2x128xf32> to vector<2x128xf32>
    %c0_3 = arith.constant 0 : index
    %c0_4 = arith.constant 0 : index
    %6 = vector.load %arg5[%c0_3, %c0_4] : memref<2x32xf32, #tpu.memory_space<vmem>>, vector<2x32xf32>
    %7 = arith.truncf %6 : vector<2x32xf32> to vector<2x32xbf16>
    %c0_5 = arith.constant 0 : index
    %c0_6 = arith.constant 0 : index
    %8 = vector.load %arg3[%c0_5, %c0_6] : memref<32x128xbf16, #tpu.memory_space<vmem>>, vector<32x128xbf16>
    %cst = arith.constant dense<0.000000e+00> : vector<2x128xf32>
    %9 = tpu.matmul %7, %8, %cst {dimension_numbers = #tpu.dot_dimension_numbers<[1], [0], [0], [1], [0, 0, 1, 1], [], []>} : vector<2x32xbf16>, vector<32x128xbf16>, vector<2x128xf32> -> vector<2x128xf32>
    %10 = arith.addf %5, %9 : vector<2x128xf32>
    %11 = vector.extract_strided_slice %10 {offsets = [0, 0], sizes = [2, 32], strides = [1, 1]} : vector<2x128xf32> to vector<2x32xf32>
    %12 = arith.negf %11 : vector<2x32xf32>
    %13 = math.exp %12 : vector<2x32xf32>
    %cst_7 = arith.constant 1.000000e+00 : f32
    %14 = vector.broadcast %cst_7 : f32 to vector<2x32xf32>
    %15 = arith.addf %14, %13 : vector<2x32xf32>
    %16 = arith.divf %14, %15 : vector<2x32xf32>
    %17 = vector.extract_strided_slice %10 {offsets = [0, 32], sizes = [2, 32], strides = [1, 1]} : vector<2x128xf32> to vector<2x32xf32>
    %18 = arith.negf %17 : vector<2x32xf32>
    %19 = math.exp %18 : vector<2x32xf32>
    %cst_8 = arith.constant 1.000000e+00 : f32
    %20 = vector.broadcast %cst_8 : f32 to vector<2x32xf32>
    %21 = arith.addf %20, %19 : vector<2x32xf32>
    %22 = arith.divf %20, %21 : vector<2x32xf32>
    %23 = vector.extract_strided_slice %10 {offsets = [0, 64], sizes = [2, 32], strides = [1, 1]} : vector<2x128xf32> to vector<2x32xf32>
    %24 = math.tanh %23 : vector<2x32xf32>
    %25 = vector.extract_strided_slice %10 {offsets = [0, 96], sizes = [2, 32], strides = [1, 1]} : vector<2x128xf32> to vector<2x32xf32>
    %26 = arith.negf %25 : vector<2x32xf32>
    %27 = math.exp %26 : vector<2x32xf32>
    %cst_9 = arith.constant 1.000000e+00 : f32
    %28 = vector.broadcast %cst_9 : f32 to vector<2x32xf32>
    %29 = arith.addf %28, %27 : vector<2x32xf32>
    %30 = arith.divf %28, %29 : vector<2x32xf32>
    %c0_10 = arith.constant 0 : index
    %c0_11 = arith.constant 0 : index
    %31 = vector.load %arg6[%c0_10, %c0_11] : memref<2x32xf32, #tpu.memory_space<vmem>>, vector<2x32xf32>
    %32 = arith.mulf %22, %31 : vector<2x32xf32>
    %33 = arith.mulf %16, %24 : vector<2x32xf32>
    %34 = arith.addf %32, %33 : vector<2x32xf32>
    %35 = math.tanh %34 : vector<2x32xf32>
    %36 = arith.mulf %30, %35 : vector<2x32xf32>
    %c0_12 = arith.constant 0 : index
    %c0_13 = arith.constant 0 : index
    %37 = vector.load %arg6[%c0_12, %c0_13] : memref<2x32xf32, #tpu.memory_space<vmem>>, vector<2x32xf32>
    tpu.vector_store %arg6[%c0_12, %c0_13], %34 {strides = array<i32>} : memref<2x32xf32, #tpu.memory_space<vmem>>, vector<2x32xf32>,
    %c0_14 = arith.constant 0 : index
    %c0_15 = arith.constant 0 : index
    %38 = vector.load %arg5[%c0_14, %c0_15] : memref<2x32xf32, #tpu.memory_space<vmem>>, vector<2x32xf32>
    tpu.vector_store %arg5[%c0_14, %c0_15], %36 {strides = array<i32>} : memref<2x32xf32, #tpu.memory_space<vmem>>, vector<2x32xf32>,
    %39 = arith.truncf %36 : vector<2x32xf32> to vector<2x32xbf16>
    %40 = arith.index_cast %c0_i32_1 : i32 to index
    %c0_16 = arith.constant 0 : index
    %c0_17 = arith.constant 0 : index
    %41 = vector.load %arg4[%40, %c0_16, %c0_17] : memref<7x2x32xbf16, #tpu.memory_space<vmem>>, vector<1x2x32xbf16>
    %42 = vector.shape_cast %41 : vector<1x2x32xbf16> to vector<2x32xbf16>
    %43 = vector.shape_cast %39 : vector<2x32xbf16> to vector<1x2x32xbf16>
    tpu.vector_store %arg4[%40, %c0_16, %c0_17], %43 {strides = array<i32>} : memref<7x2x32xbf16, #tpu.memory_space<vmem>>, vector<1x2x32xbf16>,
    %c1_i32 = arith.constant 1 : i32
    %44 = arith.index_cast %c1_i32 : i32 to index
    %c0_18 = arith.constant 0 : index
    %c0_19 = arith.constant 0 : index
    %45 = vector.load %arg2[%44, %c0_18, %c0_19] : memref<7x2x128xf32, #tpu.memory_space<vmem>>, vector<1x2x128xf32>
    %46 = vector.shape_cast %45 : vector<1x2x128xf32> to vector<2x128xf32>
    %c0_20 = arith.constant 0 : index
    %c0_21 = arith.constant 0 : index
    %47 = vector.load %arg5[%c0_20, %c0_21] : memref<2x32xf32, #tpu.memory_space<vmem>>, vector<2x32xf32>
    %48 = arith.truncf %47 : vector<2x32xf32> to vector<2x32xbf16>
    %c0_22 = arith.constant 0 : index
    %c0_23 = arith.constant 0 : index
    %49 = vector.load %arg3[%c0_22, %c0_23] : memref<32x128xbf16, #tpu.memory_space<vmem>>, vector<32x128xbf16>
    %cst_24 = arith.constant dense<0.000000e+00> : vector<2x128xf32>
    %50 = tpu.matmul %48, %49, %cst_24 {dimension_numbers = #tpu.dot_dimension_numbers<[1], [0], [0], [1], [0, 0, 1, 1], [], []>} : vector<2x32xbf16>, vector<32x128xbf16>, vector<2x128xf32> -> vector<2x128xf32>
    %51 = arith.addf %46, %50 : vector<2x128xf32>
    %52 = vector.extract_strided_slice %51 {offsets = [0, 0], sizes = [2, 32], strides = [1, 1]} : vector<2x128xf32> to vector<2x32xf32>
    %53 = arith.negf %52 : vector<2x32xf32>
    %54 = math.exp %53 : vector<2x32xf32>
    %cst_25 = arith.constant 1.000000e+00 : f32
    %55 = vector.broadcast %cst_25 : f32 to vector<2x32xf32>
    %56 = arith.addf %55, %54 : vector<2x32xf32>
    %57 = arith.divf %55, %56 : vector<2x32xf32>
    %58 = vector.extract_strided_slice %51 {offsets = [0, 32], sizes = [2, 32], strides = [1, 1]} : vector<2x128xf32> to vector<2x32xf32>
    %59 = arith.negf %58 : vector<2x32xf32>
    %60 = math.exp %59 : vector<2x32xf32>
    %cst_26 = arith.constant 1.000000e+00 : f32
    %61 = vector.broadcast %cst_26 : f32 to vector<2x32xf32>
    %62 = arith.addf %61, %60 : vector<2x32xf32>
    %63 = arith.divf %61, %62 : vector<2x32xf32>
    %64 = vector.extract_strided_slice %51 {offsets = [0, 64], sizes = [2, 32], strides = [1, 1]} : vector<2x128xf32> to vector<2x32xf32>
    %65 = math.tanh %64 : vector<2x32xf32>
    %66 = vector.extract_strided_slice %51 {offsets = [0, 96], sizes = [2, 32], strides = [1, 1]} : vector<2x128xf32> to vector<2x32xf32>
    %67 = arith.negf %66 : vector<2x32xf32>
    %68 = math.exp %67 : vector<2x32xf32>
    %cst_27 = arith.constant 1.000000e+00 : f32
    %69 = vector.broadcast %cst_27 : f32 to vector<2x32xf32>
    %70 = arith.addf %69, %68 : vector<2x32xf32>
    %71 = arith.divf %69, %70 : vector<2x32xf32>
    %c0_28 = arith.constant 0 : index
    %c0_29 = arith.constant 0 : index
    %72 = vector.load %arg6[%c0_28, %c0_29] : memref<2x32xf32, #tpu.memory_space<vmem>>, vector<2x32xf32>
    %73 = arith.mulf %63, %72 : vector<2x32xf32>
    %74 = arith.mulf %57, %65 : vector<2x32xf32>
    %75 = arith.addf %73, %74 : vector<2x32xf32>
    %76 = math.tanh %75 : vector<2x32xf32>
    %77 = arith.mulf %71, %76 : vector<2x32xf32>
    %c0_30 = arith.constant 0 : index
    %c0_31 = arith.constant 0 : index
    %78 = vector.load %arg6[%c0_30, %c0_31] : memref<2x32xf32, #tpu.memory_space<vmem>>, vector<2x32xf32>
    tpu.vector_store %arg6[%c0_30, %c0_31], %75 {strides = array<i32>} : memref<2x32xf32, #tpu.memory_space<vmem>>, vector<2x32xf32>,
    %c0_32 = arith.constant 0 : index
    %c0_33 = arith.constant 0 : index
    %79 = vector.load %arg5[%c0_32, %c0_33] : memref<2x32xf32, #tpu.memory_space<vmem>>, vector<2x32xf32>
    tpu.vector_store %arg5[%c0_32, %c0_33], %77 {strides = array<i32>} : memref<2x32xf32, #tpu.memory_space<vmem>>, vector<2x32xf32>,
    %80 = arith.truncf %77 : vector<2x32xf32> to vector<2x32xbf16>
    %81 = arith.index_cast %c1_i32 : i32 to index
    %c0_34 = arith.constant 0 : index
    %c0_35 = arith.constant 0 : index
    %82 = vector.load %arg4[%81, %c0_34, %c0_35] : memref<7x2x32xbf16, #tpu.memory_space<vmem>>, vector<1x2x32xbf16>
    %83 = vector.shape_cast %82 : vector<1x2x32xbf16> to vector<2x32xbf16>
    %84 = vector.shape_cast %80 : vector<2x32xbf16> to vector<1x2x32xbf16>
    tpu.vector_store %arg4[%81, %c0_34, %c0_35], %84 {strides = array<i32>} : memref<7x2x32xbf16, #tpu.memory_space<vmem>>, vector<1x2x32xbf16>,
    %c2_i32 = arith.constant 2 : i32
    %85 = arith.index_cast %c2_i32 : i32 to index
    %c0_36 = arith.constant 0 : index
    %c0_37 = arith.constant 0 : index
    %86 = vector.load %arg2[%85, %c0_36, %c0_37] : memref<7x2x128xf32, #tpu.memory_space<vmem>>, vector<1x2x128xf32>
    %87 = vector.shape_cast %86 : vector<1x2x128xf32> to vector<2x128xf32>
    %c0_38 = arith.constant 0 : index
    %c0_39 = arith.constant 0 : index
    %88 = vector.load %arg5[%c0_38, %c0_39] : memref<2x32xf32, #tpu.memory_space<vmem>>, vector<2x32xf32>
    %89 = arith.truncf %88 : vector<2x32xf32> to vector<2x32xbf16>
    %c0_40 = arith.constant 0 : index
    %c0_41 = arith.constant 0 : index
    %90 = vector.load %arg3[%c0_40, %c0_41] : memref<32x128xbf16, #tpu.memory_space<vmem>>, vector<32x128xbf16>
    %cst_42 = arith.constant dense<0.000000e+00> : vector<2x128xf32>
    %91 = tpu.matmul %89, %90, %cst_42 {dimension_numbers = #tpu.dot_dimension_numbers<[1], [0], [0], [1], [0, 0, 1, 1], [], []>} : vector<2x32xbf16>, vector<32x128xbf16>, vector<2x128xf32> -> vector<2x128xf32>
    %92 = arith.addf %87, %91 : vector<2x128xf32>
    %93 = vector.extract_strided_slice %92 {offsets = [0, 0], sizes = [2, 32], strides = [1, 1]} : vector<2x128xf32> to vector<2x32xf32>
    %94 = arith.negf %93 : vector<2x32xf32>
    %95 = math.exp %94 : vector<2x32xf32>
    %cst_43 = arith.constant 1.000000e+00 : f32
    %96 = vector.broadcast %cst_43 : f32 to vector<2x32xf32>
    %97 = arith.addf %96, %95 : vector<2x32xf32>
    %98 = arith.divf %96, %97 : vector<2x32xf32>
    %99 = vector.extract_strided_slice %92 {offsets = [0, 32], sizes = [2, 32], strides = [1, 1]} : vector<2x128xf32> to vector<2x32xf32>
    %100 = arith.negf %99 : vector<2x32xf32>
    %101 = math.exp %100 : vector<2x32xf32>
    %cst_44 = arith.constant 1.000000e+00 : f32
    %102 = vector.broadcast %cst_44 : f32 to vector<2x32xf32>
    %103 = arith.addf %102, %101 : vector<2x32xf32>
    %104 = arith.divf %102, %103 : vector<2x32xf32>
    %105 = vector.extract_strided_slice %92 {offsets = [0, 64], sizes = [2, 32], strides = [1, 1]} : vector<2x128xf32> to vector<2x32xf32>
    %106 = math.tanh %105 : vector<2x32xf32>
    %107 = vector.extract_strided_slice %92 {offsets = [0, 96], sizes = [2, 32], strides = [1, 1]} : vector<2x128xf32> to vector<2x32xf32>
    %108 = arith.negf %107 : vector<2x32xf32>
    %109 = math.exp %108 : vector<2x32xf32>
    %cst_45 = arith.constant 1.000000e+00 : f32
    %110 = vector.broadcast %cst_45 : f32 to vector<2x32xf32>
    %111 = arith.addf %110, %109 : vector<2x32xf32>
    %112 = arith.divf %110, %111 : vector<2x32xf32>
    %c0_46 = arith.constant 0 : index
    %c0_47 = arith.constant 0 : index
    %113 = vector.load %arg6[%c0_46, %c0_47] : memref<2x32xf32, #tpu.memory_space<vmem>>, vector<2x32xf32>
    %114 = arith.mulf %104, %113 : vector<2x32xf32>
    %115 = arith.mulf %98, %106 : vector<2x32xf32>
    %116 = arith.addf %114, %115 : vector<2x32xf32>
    %117 = math.tanh %116 : vector<2x32xf32>
    %118 = arith.mulf %112, %117 : vector<2x32xf32>
    %c0_48 = arith.constant 0 : index
    %c0_49 = arith.constant 0 : index
    %119 = vector.load %arg6[%c0_48, %c0_49] : memref<2x32xf32, #tpu.memory_space<vmem>>, vector<2x32xf32>
    tpu.vector_store %arg6[%c0_48, %c0_49], %116 {strides = array<i32>} : memref<2x32xf32, #tpu.memory_space<vmem>>, vector<2x32xf32>,
    %c0_50 = arith.constant 0 : index
    %c0_51 = arith.constant 0 : index
    %120 = vector.load %arg5[%c0_50, %c0_51] : memref<2x32xf32, #tpu.memory_space<vmem>>, vector<2x32xf32>
    tpu.vector_store %arg5[%c0_50, %c0_51], %118 {strides = array<i32>} : memref<2x32xf32, #tpu.memory_space<vmem>>, vector<2x32xf32>,
    %121 = arith.truncf %118 : vector<2x32xf32> to vector<2x32xbf16>
    %122 = arith.index_cast %c2_i32 : i32 to index
    %c0_52 = arith.constant 0 : index
    %c0_53 = arith.constant 0 : index
    %123 = vector.load %arg4[%122, %c0_52, %c0_53] : memref<7x2x32xbf16, #tpu.memory_space<vmem>>, vector<1x2x32xbf16>
    %124 = vector.shape_cast %123 : vector<1x2x32xbf16> to vector<2x32xbf16>
    %125 = vector.shape_cast %121 : vector<2x32xbf16> to vector<1x2x32xbf16>
    tpu.vector_store %arg4[%122, %c0_52, %c0_53], %125 {strides = array<i32>} : memref<7x2x32xbf16, #tpu.memory_space<vmem>>, vector<1x2x32xbf16>,
    %c3_i32 = arith.constant 3 : i32
    %126 = arith.index_cast %c3_i32 : i32 to index
    %c0_54 = arith.constant 0 : index
    %c0_55 = arith.constant 0 : index
    %127 = vector.load %arg2[%126, %c0_54, %c0_55] : memref<7x2x128xf32, #tpu.memory_space<vmem>>, vector<1x2x128xf32>
    %128 = vector.shape_cast %127 : vector<1x2x128xf32> to vector<2x128xf32>
    %c0_56 = arith.constant 0 : index
    %c0_57 = arith.constant 0 : index
    %129 = vector.load %arg5[%c0_56, %c0_57] : memref<2x32xf32, #tpu.memory_space<vmem>>, vector<2x32xf32>
    %130 = arith.truncf %129 : vector<2x32xf32> to vector<2x32xbf16>
    %c0_58 = arith.constant 0 : index
    %c0_59 = arith.constant 0 : index
    %131 = vector.load %arg3[%c0_58, %c0_59] : memref<32x128xbf16, #tpu.memory_space<vmem>>, vector<32x128xbf16>
    %cst_60 = arith.constant dense<0.000000e+00> : vector<2x128xf32>
    %132 = tpu.matmul %130, %131, %cst_60 {dimension_numbers = #tpu.dot_dimension_numbers<[1], [0], [0], [1], [0, 0, 1, 1], [], []>} : vector<2x32xbf16>, vector<32x128xbf16>, vector<2x128xf32> -> vector<2x128xf32>
    %133 = arith.addf %128, %132 : vector<2x128xf32>
    %134 = vector.extract_strided_slice %133 {offsets = [0, 0], sizes = [2, 32], strides = [1, 1]} : vector<2x128xf32> to vector<2x32xf32>
    %135 = arith.negf %134 : vector<2x32xf32>
    %136 = math.exp %135 : vector<2x32xf32>
    %cst_61 = arith.constant 1.000000e+00 : f32
    %137 = vector.broadcast %cst_61 : f32 to vector<2x32xf32>
    %138 = arith.addf %137, %136 : vector<2x32xf32>
    %139 = arith.divf %137, %138 : vector<2x32xf32>
    %140 = vector.extract_strided_slice %133 {offsets = [0, 32], sizes = [2, 32], strides = [1, 1]} : vector<2x128xf32> to vector<2x32xf32>
    %141 = arith.negf %140 : vector<2x32xf32>
    %142 = math.exp %141 : vector<2x32xf32>
    %cst_62 = arith.constant 1.000000e+00 : f32
    %143 = vector.broadcast %cst_62 : f32 to vector<2x32xf32>
    %144 = arith.addf %143, %142 : vector<2x32xf32>
    %145 = arith.divf %143, %144 : vector<2x32xf32>
    %146 = vector.extract_strided_slice %133 {offsets = [0, 64], sizes = [2, 32], strides = [1, 1]} : vector<2x128xf32> to vector<2x32xf32>
    %147 = math.tanh %146 : vector<2x32xf32>
    %148 = vector.extract_strided_slice %133 {offsets = [0, 96], sizes = [2, 32], strides = [1, 1]} : vector<2x128xf32> to vector<2x32xf32>
    %149 = arith.negf %148 : vector<2x32xf32>
    %150 = math.exp %149 : vector<2x32xf32>
    %cst_63 = arith.constant 1.000000e+00 : f32
    %151 = vector.broadcast %cst_63 : f32 to vector<2x32xf32>
    %152 = arith.addf %151, %150 : vector<2x32xf32>
    %153 = arith.divf %151, %152 : vector<2x32xf32>
    %c0_64 = arith.constant 0 : index
    %c0_65 = arith.constant 0 : index
    %154 = vector.load %arg6[%c0_64, %c0_65] : memref<2x32xf32, #tpu.memory_space<vmem>>, vector<2x32xf32>
    %155 = arith.mulf %145, %154 : vector<2x32xf32>
    %156 = arith.mulf %139, %147 : vector<2x32xf32>
    %157 = arith.addf %155, %156 : vector<2x32xf32>
    %158 = math.tanh %157 : vector<2x32xf32>
    %159 = arith.mulf %153, %158 : vector<2x32xf32>
    %c0_66 = arith.constant 0 : index
    %c0_67 = arith.constant 0 : index
    %160 = vector.load %arg6[%c0_66, %c0_67] : memref<2x32xf32, #tpu.memory_space<vmem>>, vector<2x32xf32>
    tpu.vector_store %arg6[%c0_66, %c0_67], %157 {strides = array<i32>} : memref<2x32xf32, #tpu.memory_space<vmem>>, vector<2x32xf32>,
    %c0_68 = arith.constant 0 : index
    %c0_69 = arith.constant 0 : index
    %161 = vector.load %arg5[%c0_68, %c0_69] : memref<2x32xf32, #tpu.memory_space<vmem>>, vector<2x32xf32>
    tpu.vector_store %arg5[%c0_68, %c0_69], %159 {strides = array<i32>} : memref<2x32xf32, #tpu.memory_space<vmem>>, vector<2x32xf32>,
    %162 = arith.truncf %159 : vector<2x32xf32> to vector<2x32xbf16>
    %163 = arith.index_cast %c3_i32 : i32 to index
    %c0_70 = arith.constant 0 : index
    %c0_71 = arith.constant 0 : index
    %164 = vector.load %arg4[%163, %c0_70, %c0_71] : memref<7x2x32xbf16, #tpu.memory_space<vmem>>, vector<1x2x32xbf16>
    %165 = vector.shape_cast %164 : vector<1x2x32xbf16> to vector<2x32xbf16>
    %166 = vector.shape_cast %162 : vector<2x32xbf16> to vector<1x2x32xbf16>
    tpu.vector_store %arg4[%163, %c0_70, %c0_71], %166 {strides = array<i32>} : memref<7x2x32xbf16, #tpu.memory_space<vmem>>, vector<1x2x32xbf16>,
    %c4_i32 = arith.constant 4 : i32
    %167 = arith.index_cast %c4_i32 : i32 to index
    %c0_72 = arith.constant 0 : index
    %c0_73 = arith.constant 0 : index
    %168 = vector.load %arg2[%167, %c0_72, %c0_73] : memref<7x2x128xf32, #tpu.memory_space<vmem>>, vector<1x2x128xf32>
    %169 = vector.shape_cast %168 : vector<1x2x128xf32> to vector<2x128xf32>
    %c0_74 = arith.constant 0 : index
    %c0_75 = arith.constant 0 : index
    %170 = vector.load %arg5[%c0_74, %c0_75] : memref<2x32xf32, #tpu.memory_space<vmem>>, vector<2x32xf32>
    %171 = arith.truncf %170 : vector<2x32xf32> to vector<2x32xbf16>
    %c0_76 = arith.constant 0 : index
    %c0_77 = arith.constant 0 : index
    %172 = vector.load %arg3[%c0_76, %c0_77] : memref<32x128xbf16, #tpu.memory_space<vmem>>, vector<32x128xbf16>
    %cst_78 = arith.constant dense<0.000000e+00> : vector<2x128xf32>
    %173 = tpu.matmul %171, %172, %cst_78 {dimension_numbers = #tpu.dot_dimension_numbers<[1], [0], [0], [1], [0, 0, 1, 1], [], []>} : vector<2x32xbf16>, vector<32x128xbf16>, vector<2x128xf32> -> vector<2x128xf32>
    %174 = arith.addf %169, %173 : vector<2x128xf32>
    %175 = vector.extract_strided_slice %174 {offsets = [0, 0], sizes = [2, 32], strides = [1, 1]} : vector<2x128xf32> to vector<2x32xf32>
    %176 = arith.negf %175 : vector<2x32xf32>
    %177 = math.exp %176 : vector<2x32xf32>
    %cst_79 = arith.constant 1.000000e+00 : f32
    %178 = vector.broadcast %cst_79 : f32 to vector<2x32xf32>
    %179 = arith.addf %178, %177 : vector<2x32xf32>
    %180 = arith.divf %178, %179 : vector<2x32xf32>
    %181 = vector.extract_strided_slice %174 {offsets = [0, 32], sizes = [2, 32], strides = [1, 1]} : vector<2x128xf32> to vector<2x32xf32>
    %182 = arith.negf %181 : vector<2x32xf32>
    %183 = math.exp %182 : vector<2x32xf32>
    %cst_80 = arith.constant 1.000000e+00 : f32
    %184 = vector.broadcast %cst_80 : f32 to vector<2x32xf32>
    %185 = arith.addf %184, %183 : vector<2x32xf32>
    %186 = arith.divf %184, %185 : vector<2x32xf32>
    %187 = vector.extract_strided_slice %174 {offsets = [0, 64], sizes = [2, 32], strides = [1, 1]} : vector<2x128xf32> to vector<2x32xf32>
    %188 = math.tanh %187 : vector<2x32xf32>
    %189 = vector.extract_strided_slice %174 {offsets = [0, 96], sizes = [2, 32], strides = [1, 1]} : vector<2x128xf32> to vector<2x32xf32>
    %190 = arith.negf %189 : vector<2x32xf32>
    %191 = math.exp %190 : vector<2x32xf32>
    %cst_81 = arith.constant 1.000000e+00 : f32
    %192 = vector.broadcast %cst_81 : f32 to vector<2x32xf32>
    %193 = arith.addf %192, %191 : vector<2x32xf32>
    %194 = arith.divf %192, %193 : vector<2x32xf32>
    %c0_82 = arith.constant 0 : index
    %c0_83 = arith.constant 0 : index
    %195 = vector.load %arg6[%c0_82, %c0_83] : memref<2x32xf32, #tpu.memory_space<vmem>>, vector<2x32xf32>
    %196 = arith.mulf %186, %195 : vector<2x32xf32>
    %197 = arith.mulf %180, %188 : vector<2x32xf32>
    %198 = arith.addf %196, %197 : vector<2x32xf32>
    %199 = math.tanh %198 : vector<2x32xf32>
    %200 = arith.mulf %194, %199 : vector<2x32xf32>
    %c0_84 = arith.constant 0 : index
    %c0_85 = arith.constant 0 : index
    %201 = vector.load %arg6[%c0_84, %c0_85] : memref<2x32xf32, #tpu.memory_space<vmem>>, vector<2x32xf32>
    tpu.vector_store %arg6[%c0_84, %c0_85], %198 {strides = array<i32>} : memref<2x32xf32, #tpu.memory_space<vmem>>, vector<2x32xf32>,
    %c0_86 = arith.constant 0 : index
    %c0_87 = arith.constant 0 : index
    %202 = vector.load %arg5[%c0_86, %c0_87] : memref<2x32xf32, #tpu.memory_space<vmem>>, vector<2x32xf32>
    tpu.vector_store %arg5[%c0_86, %c0_87], %200 {strides = array<i32>} : memref<2x32xf32, #tpu.memory_space<vmem>>, vector<2x32xf32>,
    %203 = arith.truncf %200 : vector<2x32xf32> to vector<2x32xbf16>
    %204 = arith.index_cast %c4_i32 : i32 to index
    %c0_88 = arith.constant 0 : index
    %c0_89 = arith.constant 0 : index
    %205 = vector.load %arg4[%204, %c0_88, %c0_89] : memref<7x2x32xbf16, #tpu.memory_space<vmem>>, vector<1x2x32xbf16>
    %206 = vector.shape_cast %205 : vector<1x2x32xbf16> to vector<2x32xbf16>
    %207 = vector.shape_cast %203 : vector<2x32xbf16> to vector<1x2x32xbf16>
    tpu.vector_store %arg4[%204, %c0_88, %c0_89], %207 {strides = array<i32>} : memref<7x2x32xbf16, #tpu.memory_space<vmem>>, vector<1x2x32xbf16>,
    %c5_i32 = arith.constant 5 : i32
    %208 = arith.index_cast %c5_i32 : i32 to index
    %c0_90 = arith.constant 0 : index
    %c0_91 = arith.constant 0 : index
    %209 = vector.load %arg2[%208, %c0_90, %c0_91] : memref<7x2x128xf32, #tpu.memory_space<vmem>>, vector<1x2x128xf32>
    %210 = vector.shape_cast %209 : vector<1x2x128xf32> to vector<2x128xf32>
    %c0_92 = arith.constant 0 : index
    %c0_93 = arith.constant 0 : index
    %211 = vector.load %arg5[%c0_92, %c0_93] : memref<2x32xf32, #tpu.memory_space<vmem>>, vector<2x32xf32>
    %212 = arith.truncf %211 : vector<2x32xf32> to vector<2x32xbf16>
    %c0_94 = arith.constant 0 : index
    %c0_95 = arith.constant 0 : index
    %213 = vector.load %arg3[%c0_94, %c0_95] : memref<32x128xbf16, #tpu.memory_space<vmem>>, vector<32x128xbf16>
    %cst_96 = arith.constant dense<0.000000e+00> : vector<2x128xf32>
    %214 = tpu.matmul %212, %213, %cst_96 {dimension_numbers = #tpu.dot_dimension_numbers<[1], [0], [0], [1], [0, 0, 1, 1], [], []>} : vector<2x32xbf16>, vector<32x128xbf16>, vector<2x128xf32> -> vector<2x128xf32>
    %215 = arith.addf %210, %214 : vector<2x128xf32>
    %216 = vector.extract_strided_slice %215 {offsets = [0, 0], sizes = [2, 32], strides = [1, 1]} : vector<2x128xf32> to vector<2x32xf32>
    %217 = arith.negf %216 : vector<2x32xf32>
    %218 = math.exp %217 : vector<2x32xf32>
    %cst_97 = arith.constant 1.000000e+00 : f32
    %219 = vector.broadcast %cst_97 : f32 to vector<2x32xf32>
    %220 = arith.addf %219, %218 : vector<2x32xf32>
    %221 = arith.divf %219, %220 : vector<2x32xf32>
    %222 = vector.extract_strided_slice %215 {offsets = [0, 32], sizes = [2, 32], strides = [1, 1]} : vector<2x128xf32> to vector<2x32xf32>
    %223 = arith.negf %222 : vector<2x32xf32>
    %224 = math.exp %223 : vector<2x32xf32>
    %cst_98 = arith.constant 1.000000e+00 : f32
    %225 = vector.broadcast %cst_98 : f32 to vector<2x32xf32>
    %226 = arith.addf %225, %224 : vector<2x32xf32>
    %227 = arith.divf %225, %226 : vector<2x32xf32>
    %228 = vector.extract_strided_slice %215 {offsets = [0, 64], sizes = [2, 32], strides = [1, 1]} : vector<2x128xf32> to vector<2x32xf32>
    %229 = math.tanh %228 : vector<2x32xf32>
    %230 = vector.extract_strided_slice %215 {offsets = [0, 96], sizes = [2, 32], strides = [1, 1]} : vector<2x128xf32> to vector<2x32xf32>
    %231 = arith.negf %230 : vector<2x32xf32>
    %232 = math.exp %231 : vector<2x32xf32>
    %cst_99 = arith.constant 1.000000e+00 : f32
    %233 = vector.broadcast %cst_99 : f32 to vector<2x32xf32>
    %234 = arith.addf %233, %232 : vector<2x32xf32>
    %235 = arith.divf %233, %234 : vector<2x32xf32>
    %c0_100 = arith.constant 0 : index
    %c0_101 = arith.constant 0 : index
    %236 = vector.load %arg6[%c0_100, %c0_101] : memref<2x32xf32, #tpu.memory_space<vmem>>, vector<2x32xf32>
    %237 = arith.mulf %227, %236 : vector<2x32xf32>
    %238 = arith.mulf %221, %229 : vector<2x32xf32>
    %239 = arith.addf %237, %238 : vector<2x32xf32>
    %240 = math.tanh %239 : vector<2x32xf32>
    %241 = arith.mulf %235, %240 : vector<2x32xf32>
    %c0_102 = arith.constant 0 : index
    %c0_103 = arith.constant 0 : index
    %242 = vector.load %arg6[%c0_102, %c0_103] : memref<2x32xf32, #tpu.memory_space<vmem>>, vector<2x32xf32>
    tpu.vector_store %arg6[%c0_102, %c0_103], %239 {strides = array<i32>} : memref<2x32xf32, #tpu.memory_space<vmem>>, vector<2x32xf32>,
    %c0_104 = arith.constant 0 : index
    %c0_105 = arith.constant 0 : index
    %243 = vector.load %arg5[%c0_104, %c0_105] : memref<2x32xf32, #tpu.memory_space<vmem>>, vector<2x32xf32>
    tpu.vector_store %arg5[%c0_104, %c0_105], %241 {strides = array<i32>} : memref<2x32xf32, #tpu.memory_space<vmem>>, vector<2x32xf32>,
    %244 = arith.truncf %241 : vector<2x32xf32> to vector<2x32xbf16>
    %245 = arith.index_cast %c5_i32 : i32 to index
    %c0_106 = arith.constant 0 : index
    %c0_107 = arith.constant 0 : index
    %246 = vector.load %arg4[%245, %c0_106, %c0_107] : memref<7x2x32xbf16, #tpu.memory_space<vmem>>, vector<1x2x32xbf16>
    %247 = vector.shape_cast %246 : vector<1x2x32xbf16> to vector<2x32xbf16>
    %248 = vector.shape_cast %244 : vector<2x32xbf16> to vector<1x2x32xbf16>
    tpu.vector_store %arg4[%245, %c0_106, %c0_107], %248 {strides = array<i32>} : memref<7x2x32xbf16, #tpu.memory_space<vmem>>, vector<1x2x32xbf16>,
    %c6_i32 = arith.constant 6 : i32
    %249 = arith.index_cast %c6_i32 : i32 to index
    %c0_108 = arith.constant 0 : index
    %c0_109 = arith.constant 0 : index
    %250 = vector.load %arg2[%249, %c0_108, %c0_109] : memref<7x2x128xf32, #tpu.memory_space<vmem>>, vector<1x2x128xf32>
    %251 = vector.shape_cast %250 : vector<1x2x128xf32> to vector<2x128xf32>
    %c0_110 = arith.constant 0 : index
    %c0_111 = arith.constant 0 : index
    %252 = vector.load %arg5[%c0_110, %c0_111] : memref<2x32xf32, #tpu.memory_space<vmem>>, vector<2x32xf32>
    %253 = arith.truncf %252 : vector<2x32xf32> to vector<2x32xbf16>
    %c0_112 = arith.constant 0 : index
    %c0_113 = arith.constant 0 : index
    %254 = vector.load %arg3[%c0_112, %c0_113] : memref<32x128xbf16, #tpu.memory_space<vmem>>, vector<32x128xbf16>
    %cst_114 = arith.constant dense<0.000000e+00> : vector<2x128xf32>
    %255 = tpu.matmul %253, %254, %cst_114 {dimension_numbers = #tpu.dot_dimension_numbers<[1], [0], [0], [1], [0, 0, 1, 1], [], []>} : vector<2x32xbf16>, vector<32x128xbf16>, vector<2x128xf32> -> vector<2x128xf32>
    %256 = arith.addf %251, %255 : vector<2x128xf32>
    %257 = vector.extract_strided_slice %256 {offsets = [0, 0], sizes = [2, 32], strides = [1, 1]} : vector<2x128xf32> to vector<2x32xf32>
    %258 = arith.negf %257 : vector<2x32xf32>
    %259 = math.exp %258 : vector<2x32xf32>
    %cst_115 = arith.constant 1.000000e+00 : f32
    %260 = vector.broadcast %cst_115 : f32 to vector<2x32xf32>
    %261 = arith.addf %260, %259 : vector<2x32xf32>
    %262 = arith.divf %260, %261 : vector<2x32xf32>
    %263 = vector.extract_strided_slice %256 {offsets = [0, 32], sizes = [2, 32], strides = [1, 1]} : vector<2x128xf32> to vector<2x32xf32>
    %264 = arith.negf %263 : vector<2x32xf32>
    %265 = math.exp %264 : vector<2x32xf32>
    %cst_116 = arith.constant 1.000000e+00 : f32
    %266 = vector.broadcast %cst_116 : f32 to vector<2x32xf32>
    %267 = arith.addf %266, %265 : vector<2x32xf32>
    %268 = arith.divf %266, %267 : vector<2x32xf32>
    %269 = vector.extract_strided_slice %256 {offsets = [0, 64], sizes = [2, 32], strides = [1, 1]} : vector<2x128xf32> to vector<2x32xf32>
    %270 = math.tanh %269 : vector<2x32xf32>
    %271 = vector.extract_strided_slice %256 {offsets = [0, 96], sizes = [2, 32], strides = [1, 1]} : vector<2x128xf32> to vector<2x32xf32>
    %272 = arith.negf %271 : vector<2x32xf32>
    %273 = math.exp %272 : vector<2x32xf32>
    %cst_117 = arith.constant 1.000000e+00 : f32
    %274 = vector.broadcast %cst_117 : f32 to vector<2x32xf32>
    %275 = arith.addf %274, %273 : vector<2x32xf32>
    %276 = arith.divf %274, %275 : vector<2x32xf32>
    %c0_118 = arith.constant 0 : index
    %c0_119 = arith.constant 0 : index
    %277 = vector.load %arg6[%c0_118, %c0_119] : memref<2x32xf32, #tpu.memory_space<vmem>>, vector<2x32xf32>
    %278 = arith.mulf %268, %277 : vector<2x32xf32>
    %279 = arith.mulf %262, %270 : vector<2x32xf32>
    %280 = arith.addf %278, %279 : vector<2x32xf32>
    %281 = math.tanh %280 : vector<2x32xf32>
    %282 = arith.mulf %276, %281 : vector<2x32xf32>
    %c0_120 = arith.constant 0 : index
    %c0_121 = arith.constant 0 : index
    %283 = vector.load %arg6[%c0_120, %c0_121] : memref<2x32xf32, #tpu.memory_space<vmem>>, vector<2x32xf32>
    tpu.vector_store %arg6[%c0_120, %c0_121], %280 {strides = array<i32>} : memref<2x32xf32, #tpu.memory_space<vmem>>, vector<2x32xf32>,
    %c0_122 = arith.constant 0 : index
    %c0_123 = arith.constant 0 : index
    %284 = vector.load %arg5[%c0_122, %c0_123] : memref<2x32xf32, #tpu.memory_space<vmem>>, vector<2x32xf32>
    tpu.vector_store %arg5[%c0_122, %c0_123], %282 {strides = array<i32>} : memref<2x32xf32, #tpu.memory_space<vmem>>, vector<2x32xf32>,
    %285 = arith.truncf %282 : vector<2x32xf32> to vector<2x32xbf16>
    %286 = arith.index_cast %c6_i32 : i32 to index
    %c0_124 = arith.constant 0 : index
    %c0_125 = arith.constant 0 : index
    %287 = vector.load %arg4[%286, %c0_124, %c0_125] : memref<7x2x32xbf16, #tpu.memory_space<vmem>>, vector<1x2x32xbf16>
    %288 = vector.shape_cast %287 : vector<1x2x32xbf16> to vector<2x32xbf16>
    %289 = vector.shape_cast %285 : vector<2x32xbf16> to vector<1x2x32xbf16>
    tpu.vector_store %arg4[%286, %c0_124, %c0_125], %289 {strides = array<i32>} : memref<7x2x32xbf16, #tpu.memory_space<vmem>>, vector<1x2x32xbf16>,
    %c7_i32 = arith.constant 7 : i32
    return
  }
  func.func @transform_0(%arg0: i32, %arg1: i32) -> (i32, i32, i32) {
    %c0_i32 = arith.constant 0 : i32
    %c0_i32_0 = arith.constant 0 : i32
    return %arg1, %arg0, %c0_i32 : i32, i32, i32
  }
  func.func @transform_1(%arg0: i32, %arg1: i32) -> (i32, i32) {
    %c0_i32 = arith.constant 0 : i32
    %c0_i32_0 = arith.constant 0 : i32
    %c0_i32_1 = arith.constant 0 : i32
    return %c0_i32, %c0_i32_0 : i32, i32
  }
  func.func @transform_2(%arg0: i32, %arg1: i32) -> (i32, i32, i32) {
    %c0_i32 = arith.constant 0 : i32
    %c0_i32_0 = arith.constant 0 : i32
    return %arg1, %arg0, %c0_i32 : i32, i32, i32
  }
}

module attributes {stable_mosaic.version = 11 : i64} {
  func.func @_linear_kernel(%arg0: i32, %arg1: memref<16x16xf32, #tpu.memory_space<vmem>>, %arg2: memref<16x128xbf16, #tpu.memory_space<vmem>>, %arg3: memref<1x128xf32, #tpu.memory_space<vmem>>, %arg4: memref<16x128xf32, #tpu.memory_space<vmem>>) attributes {dimension_semantics = [#tpu.dimension_semantics<parallel>], iteration_bounds = array<i64: 1>, scalar_prefetch = 0 : i64, scratch_operands = 0 : i64, tpu.core_type = #tpu.core_type<tc>, window_params = [{transform_indices = @transform_0, window_bounds = array<i64: 16, 16>}, {pipeline_mode = #tpu.pipeline_mode<synchronous>, transform_indices = @transform_1, window_bounds = array<i64: 16, 128>}, {pipeline_mode = #tpu.pipeline_mode<synchronous>, transform_indices = @transform_2, window_bounds = array<i64: 1, 128>}, {transform_indices = @transform_3, window_bounds = array<i64: 16, 128>}]} {
    %c0 = arith.constant 0 : index
    %c0_0 = arith.constant 0 : index
    %0 = vector.load %arg1[%c0, %c0_0] : memref<16x16xf32, #tpu.memory_space<vmem>>, vector<16x16xf32>
    %1 = arith.truncf %0 : vector<16x16xf32> to vector<16x16xbf16>
    %c0_1 = arith.constant 0 : index
    %c0_2 = arith.constant 0 : index
    %2 = vector.load %arg2[%c0_1, %c0_2] : memref<16x128xbf16, #tpu.memory_space<vmem>>, vector<16x128xbf16>
    %cst = arith.constant dense<0.000000e+00> : vector<16x128xf32>
    %3 = tpu.matmul %1, %2, %cst {dimension_numbers = #tpu.dot_dimension_numbers<[1], [0], [0], [1], [0, 0, 1, 1], [], []>} : vector<16x16xbf16>, vector<16x128xbf16>, vector<16x128xf32> -> vector<16x128xf32>
    %c0_3 = arith.constant 0 : index
    %c0_4 = arith.constant 0 : index
    %4 = vector.load %arg3[%c0_3, %c0_4] : memref<1x128xf32, #tpu.memory_space<vmem>>, vector<1x128xf32>
    %5 = vector.broadcast %4 : vector<1x128xf32> to vector<16x128xf32>
    %6 = arith.addf %3, %5 : vector<16x128xf32>
    %c0_5 = arith.constant 0 : index
    %c0_6 = arith.constant 0 : index
    %7 = vector.load %arg4[%c0_5, %c0_6] : memref<16x128xf32, #tpu.memory_space<vmem>>, vector<16x128xf32>
    tpu.vector_store %arg4[%c0_5, %c0_6], %6 {strides = array<i32>} : memref<16x128xf32, #tpu.memory_space<vmem>>, vector<16x128xf32>,
    return
  }
  func.func @transform_0(%arg0: i32) -> (i32, i32) {
    %c0_i32 = arith.constant 0 : i32
    %c0_i32_0 = arith.constant 0 : i32
    return %arg0, %c0_i32 : i32, i32
  }
  func.func @transform_1(%arg0: i32) -> (i32, i32) {
    %c0_i32 = arith.constant 0 : i32
    %c0_i32_0 = arith.constant 0 : i32
    %c0_i32_1 = arith.constant 0 : i32
    return %c0_i32, %c0_i32_0 : i32, i32
  }
  func.func @transform_2(%arg0: i32) -> (i32, i32) {
    %c0_i32 = arith.constant 0 : i32
    %c0_i32_0 = arith.constant 0 : i32
    %c0_i32_1 = arith.constant 0 : i32
    return %c0_i32, %c0_i32_0 : i32, i32
  }
  func.func @transform_3(%arg0: i32) -> (i32, i32) {
    %c0_i32 = arith.constant 0 : i32
    %c0_i32_0 = arith.constant 0 : i32
    return %arg0, %c0_i32 : i32, i32
  }
}

module attributes {stable_mosaic.version = 11 : i64} {
  func.func @_linear_kernel(%arg0: i32, %arg1: memref<16x32xbf16, #tpu.memory_space<vmem>>, %arg2: memref<32x128xbf16, #tpu.memory_space<vmem>>, %arg3: memref<1x128xf32, #tpu.memory_space<vmem>>, %arg4: memref<16x128xf32, #tpu.memory_space<vmem>>) attributes {dimension_semantics = [#tpu.dimension_semantics<parallel>], iteration_bounds = array<i64: 1>, scalar_prefetch = 0 : i64, scratch_operands = 0 : i64, tpu.core_type = #tpu.core_type<tc>, window_params = [{transform_indices = @transform_0, window_bounds = array<i64: 16, 32>}, {pipeline_mode = #tpu.pipeline_mode<synchronous>, transform_indices = @transform_1, window_bounds = array<i64: 32, 128>}, {pipeline_mode = #tpu.pipeline_mode<synchronous>, transform_indices = @transform_2, window_bounds = array<i64: 1, 128>}, {transform_indices = @transform_3, window_bounds = array<i64: 16, 128>}]} {
    %c0 = arith.constant 0 : index
    %c0_0 = arith.constant 0 : index
    %0 = vector.load %arg1[%c0, %c0_0] : memref<16x32xbf16, #tpu.memory_space<vmem>>, vector<16x32xbf16>
    %c0_1 = arith.constant 0 : index
    %c0_2 = arith.constant 0 : index
    %1 = vector.load %arg2[%c0_1, %c0_2] : memref<32x128xbf16, #tpu.memory_space<vmem>>, vector<32x128xbf16>
    %cst = arith.constant dense<0.000000e+00> : vector<16x128xf32>
    %2 = tpu.matmul %0, %1, %cst {dimension_numbers = #tpu.dot_dimension_numbers<[1], [0], [0], [1], [0, 0, 1, 1], [], []>} : vector<16x32xbf16>, vector<32x128xbf16>, vector<16x128xf32> -> vector<16x128xf32>
    %c0_3 = arith.constant 0 : index
    %c0_4 = arith.constant 0 : index
    %3 = vector.load %arg3[%c0_3, %c0_4] : memref<1x128xf32, #tpu.memory_space<vmem>>, vector<1x128xf32>
    %4 = vector.broadcast %3 : vector<1x128xf32> to vector<16x128xf32>
    %5 = arith.addf %2, %4 : vector<16x128xf32>
    %c0_5 = arith.constant 0 : index
    %c0_6 = arith.constant 0 : index
    %6 = vector.load %arg4[%c0_5, %c0_6] : memref<16x128xf32, #tpu.memory_space<vmem>>, vector<16x128xf32>
    tpu.vector_store %arg4[%c0_5, %c0_6], %5 {strides = array<i32>} : memref<16x128xf32, #tpu.memory_space<vmem>>, vector<16x128xf32>,
    return
  }
  func.func @transform_0(%arg0: i32) -> (i32, i32) {
    %c0_i32 = arith.constant 0 : i32
    %c0_i32_0 = arith.constant 0 : i32
    return %arg0, %c0_i32 : i32, i32
  }
  func.func @transform_1(%arg0: i32) -> (i32, i32) {
    %c0_i32 = arith.constant 0 : i32
    %c0_i32_0 = arith.constant 0 : i32
    %c0_i32_1 = arith.constant 0 : i32
    return %c0_i32, %c0_i32_0 : i32, i32
  }
  func.func @transform_2(%arg0: i32) -> (i32, i32) {
    %c0_i32 = arith.constant 0 : i32
    %c0_i32_0 = arith.constant 0 : i32
    %c0_i32_1 = arith.constant 0 : i32
    return %c0_i32, %c0_i32_0 : i32, i32
  }
  func.func @transform_3(%arg0: i32) -> (i32, i32) {
    %c0_i32 = arith.constant 0 : i32
    %c0_i32_0 = arith.constant 0 : i32
    return %arg0, %c0_i32 : i32, i32
  }
}

module attributes {stable_mosaic.version = 11 : i64} {
  func.func @_linear_kernel(%arg0: i32, %arg1: memref<16x32xbf16, #tpu.memory_space<vmem>>, %arg2: memref<32x32xbf16, #tpu.memory_space<vmem>>, %arg3: memref<1x32xf32, #tpu.memory_space<vmem>>, %arg4: memref<16x32xf32, #tpu.memory_space<vmem>>) attributes {dimension_semantics = [#tpu.dimension_semantics<parallel>], iteration_bounds = array<i64: 1>, scalar_prefetch = 0 : i64, scratch_operands = 0 : i64, tpu.core_type = #tpu.core_type<tc>, window_params = [{transform_indices = @transform_0, window_bounds = array<i64: 16, 32>}, {pipeline_mode = #tpu.pipeline_mode<synchronous>, transform_indices = @transform_1, window_bounds = array<i64: 32, 32>}, {pipeline_mode = #tpu.pipeline_mode<synchronous>, transform_indices = @transform_2, window_bounds = array<i64: 1, 32>}, {transform_indices = @transform_3, window_bounds = array<i64: 16, 32>}]} {
    %c0 = arith.constant 0 : index
    %c0_0 = arith.constant 0 : index
    %0 = vector.load %arg1[%c0, %c0_0] : memref<16x32xbf16, #tpu.memory_space<vmem>>, vector<16x32xbf16>
    %c0_1 = arith.constant 0 : index
    %c0_2 = arith.constant 0 : index
    %1 = vector.load %arg2[%c0_1, %c0_2] : memref<32x32xbf16, #tpu.memory_space<vmem>>, vector<32x32xbf16>
    %cst = arith.constant dense<0.000000e+00> : vector<16x32xf32>
    %2 = tpu.matmul %0, %1, %cst {dimension_numbers = #tpu.dot_dimension_numbers<[1], [0], [0], [1], [0, 0, 1, 1], [], []>} : vector<16x32xbf16>, vector<32x32xbf16>, vector<16x32xf32> -> vector<16x32xf32>
    %c0_3 = arith.constant 0 : index
    %c0_4 = arith.constant 0 : index
    %3 = vector.load %arg3[%c0_3, %c0_4] : memref<1x32xf32, #tpu.memory_space<vmem>>, vector<1x32xf32>
    %4 = vector.broadcast %3 : vector<1x32xf32> to vector<16x32xf32>
    %5 = arith.addf %2, %4 : vector<16x32xf32>
    %c0_5 = arith.constant 0 : index
    %c0_6 = arith.constant 0 : index
    %6 = vector.load %arg4[%c0_5, %c0_6] : memref<16x32xf32, #tpu.memory_space<vmem>>, vector<16x32xf32>
    tpu.vector_store %arg4[%c0_5, %c0_6], %5 {strides = array<i32>} : memref<16x32xf32, #tpu.memory_space<vmem>>, vector<16x32xf32>,
    return
  }
  func.func @transform_0(%arg0: i32) -> (i32, i32) {
    %c0_i32 = arith.constant 0 : i32
    %c0_i32_0 = arith.constant 0 : i32
    return %arg0, %c0_i32 : i32, i32
  }
  func.func @transform_1(%arg0: i32) -> (i32, i32) {
    %c0_i32 = arith.constant 0 : i32
    %c0_i32_0 = arith.constant 0 : i32
    %c0_i32_1 = arith.constant 0 : i32
    return %c0_i32, %c0_i32_0 : i32, i32
  }
  func.func @transform_2(%arg0: i32) -> (i32, i32) {
    %c0_i32 = arith.constant 0 : i32
    %c0_i32_0 = arith.constant 0 : i32
    %c0_i32_1 = arith.constant 0 : i32
    return %c0_i32, %c0_i32_0 : i32, i32
  }
  func.func @transform_3(%arg0: i32) -> (i32, i32) {
    %c0_i32 = arith.constant 0 : i32
    %c0_i32_0 = arith.constant 0 : i32
    return %arg0, %c0_i32 : i32, i32
  }
}

module attributes {stable_mosaic.version = 11 : i64} {
  func.func @_lstm_recurrence_kernel(%arg0: i32, %arg1: i32, %arg2: memref<8x2x128xf32, #tpu.memory_space<vmem>>, %arg3: memref<32x128xbf16, #tpu.memory_space<vmem>>, %arg4: memref<8x2x32xbf16, #tpu.memory_space<vmem>>, %arg5: memref<2x32xf32, #tpu.memory_space<vmem>>, %arg6: memref<2x32xf32, #tpu.memory_space<vmem>>) attributes {dimension_semantics = [#tpu.dimension_semantics<parallel>, #tpu.dimension_semantics<arbitrary>], iteration_bounds = array<i64: 1, 1>, scalar_prefetch = 0 : i64, scratch_operands = 2 : i64, tpu.core_type = #tpu.core_type<tc>, window_params = [{transform_indices = @transform_0, window_bounds = array<i64: 8, 2, 128>}, {pipeline_mode = #tpu.pipeline_mode<synchronous>, transform_indices = @transform_1, window_bounds = array<i64: 32, 128>}, {transform_indices = @transform_2, window_bounds = array<i64: 8, 2, 32>}]} {
    %c0_i32 = arith.constant 0 : i32
    %0 = arith.cmpi eq, %arg1, %c0_i32 : i32
    %1 = arith.extui %0 : i1 to i32
    %c0_i32_0 = arith.constant 0 : i32
    %2 = arith.cmpi ne, %1, %c0_i32_0 : i32
    scf.if %2 {
      %cst_144 = arith.constant 0.000000e+00 : f32
      %331 = vector.broadcast %cst_144 : f32 to vector<2x32xf32>
      %c0_145 = arith.constant 0 : index
      %c0_146 = arith.constant 0 : index
      %332 = vector.load %arg5[%c0_145, %c0_146] : memref<2x32xf32, #tpu.memory_space<vmem>>, vector<2x32xf32>
      tpu.vector_store %arg5[%c0_145, %c0_146], %331 {strides = array<i32>} : memref<2x32xf32, #tpu.memory_space<vmem>>, vector<2x32xf32>,
      %cst_147 = arith.constant 0.000000e+00 : f32
      %333 = vector.broadcast %cst_147 : f32 to vector<2x32xf32>
      %c0_148 = arith.constant 0 : index
      %c0_149 = arith.constant 0 : index
      %334 = vector.load %arg6[%c0_148, %c0_149] : memref<2x32xf32, #tpu.memory_space<vmem>>, vector<2x32xf32>
      tpu.vector_store %arg6[%c0_148, %c0_149], %333 {strides = array<i32>} : memref<2x32xf32, #tpu.memory_space<vmem>>, vector<2x32xf32>,
    } else {
    }
    %c0_i32_1 = arith.constant 0 : i32
    %3 = arith.index_cast %c0_i32_1 : i32 to index
    %c0 = arith.constant 0 : index
    %c0_2 = arith.constant 0 : index
    %4 = vector.load %arg2[%3, %c0, %c0_2] : memref<8x2x128xf32, #tpu.memory_space<vmem>>, vector<1x2x128xf32>
    %5 = vector.shape_cast %4 : vector<1x2x128xf32> to vector<2x128xf32>
    %c0_3 = arith.constant 0 : index
    %c0_4 = arith.constant 0 : index
    %6 = vector.load %arg5[%c0_3, %c0_4] : memref<2x32xf32, #tpu.memory_space<vmem>>, vector<2x32xf32>
    %7 = arith.truncf %6 : vector<2x32xf32> to vector<2x32xbf16>
    %c0_5 = arith.constant 0 : index
    %c0_6 = arith.constant 0 : index
    %8 = vector.load %arg3[%c0_5, %c0_6] : memref<32x128xbf16, #tpu.memory_space<vmem>>, vector<32x128xbf16>
    %cst = arith.constant dense<0.000000e+00> : vector<2x128xf32>
    %9 = tpu.matmul %7, %8, %cst {dimension_numbers = #tpu.dot_dimension_numbers<[1], [0], [0], [1], [0, 0, 1, 1], [], []>} : vector<2x32xbf16>, vector<32x128xbf16>, vector<2x128xf32> -> vector<2x128xf32>
    %10 = arith.addf %5, %9 : vector<2x128xf32>
    %11 = vector.extract_strided_slice %10 {offsets = [0, 0], sizes = [2, 32], strides = [1, 1]} : vector<2x128xf32> to vector<2x32xf32>
    %12 = arith.negf %11 : vector<2x32xf32>
    %13 = math.exp %12 : vector<2x32xf32>
    %cst_7 = arith.constant 1.000000e+00 : f32
    %14 = vector.broadcast %cst_7 : f32 to vector<2x32xf32>
    %15 = arith.addf %14, %13 : vector<2x32xf32>
    %16 = arith.divf %14, %15 : vector<2x32xf32>
    %17 = vector.extract_strided_slice %10 {offsets = [0, 32], sizes = [2, 32], strides = [1, 1]} : vector<2x128xf32> to vector<2x32xf32>
    %18 = arith.negf %17 : vector<2x32xf32>
    %19 = math.exp %18 : vector<2x32xf32>
    %cst_8 = arith.constant 1.000000e+00 : f32
    %20 = vector.broadcast %cst_8 : f32 to vector<2x32xf32>
    %21 = arith.addf %20, %19 : vector<2x32xf32>
    %22 = arith.divf %20, %21 : vector<2x32xf32>
    %23 = vector.extract_strided_slice %10 {offsets = [0, 64], sizes = [2, 32], strides = [1, 1]} : vector<2x128xf32> to vector<2x32xf32>
    %24 = math.tanh %23 : vector<2x32xf32>
    %25 = vector.extract_strided_slice %10 {offsets = [0, 96], sizes = [2, 32], strides = [1, 1]} : vector<2x128xf32> to vector<2x32xf32>
    %26 = arith.negf %25 : vector<2x32xf32>
    %27 = math.exp %26 : vector<2x32xf32>
    %cst_9 = arith.constant 1.000000e+00 : f32
    %28 = vector.broadcast %cst_9 : f32 to vector<2x32xf32>
    %29 = arith.addf %28, %27 : vector<2x32xf32>
    %30 = arith.divf %28, %29 : vector<2x32xf32>
    %c0_10 = arith.constant 0 : index
    %c0_11 = arith.constant 0 : index
    %31 = vector.load %arg6[%c0_10, %c0_11] : memref<2x32xf32, #tpu.memory_space<vmem>>, vector<2x32xf32>
    %32 = arith.mulf %22, %31 : vector<2x32xf32>
    %33 = arith.mulf %16, %24 : vector<2x32xf32>
    %34 = arith.addf %32, %33 : vector<2x32xf32>
    %35 = math.tanh %34 : vector<2x32xf32>
    %36 = arith.mulf %30, %35 : vector<2x32xf32>
    %c0_12 = arith.constant 0 : index
    %c0_13 = arith.constant 0 : index
    %37 = vector.load %arg6[%c0_12, %c0_13] : memref<2x32xf32, #tpu.memory_space<vmem>>, vector<2x32xf32>
    tpu.vector_store %arg6[%c0_12, %c0_13], %34 {strides = array<i32>} : memref<2x32xf32, #tpu.memory_space<vmem>>, vector<2x32xf32>,
    %c0_14 = arith.constant 0 : index
    %c0_15 = arith.constant 0 : index
    %38 = vector.load %arg5[%c0_14, %c0_15] : memref<2x32xf32, #tpu.memory_space<vmem>>, vector<2x32xf32>
    tpu.vector_store %arg5[%c0_14, %c0_15], %36 {strides = array<i32>} : memref<2x32xf32, #tpu.memory_space<vmem>>, vector<2x32xf32>,
    %39 = arith.truncf %36 : vector<2x32xf32> to vector<2x32xbf16>
    %40 = arith.index_cast %c0_i32_1 : i32 to index
    %c0_16 = arith.constant 0 : index
    %c0_17 = arith.constant 0 : index
    %41 = vector.load %arg4[%40, %c0_16, %c0_17] : memref<8x2x32xbf16, #tpu.memory_space<vmem>>, vector<1x2x32xbf16>
    %42 = vector.shape_cast %41 : vector<1x2x32xbf16> to vector<2x32xbf16>
    %43 = vector.shape_cast %39 : vector<2x32xbf16> to vector<1x2x32xbf16>
    tpu.vector_store %arg4[%40, %c0_16, %c0_17], %43 {strides = array<i32>} : memref<8x2x32xbf16, #tpu.memory_space<vmem>>, vector<1x2x32xbf16>,
    %c1_i32 = arith.constant 1 : i32
    %44 = arith.index_cast %c1_i32 : i32 to index
    %c0_18 = arith.constant 0 : index
    %c0_19 = arith.constant 0 : index
    %45 = vector.load %arg2[%44, %c0_18, %c0_19] : memref<8x2x128xf32, #tpu.memory_space<vmem>>, vector<1x2x128xf32>
    %46 = vector.shape_cast %45 : vector<1x2x128xf32> to vector<2x128xf32>
    %c0_20 = arith.constant 0 : index
    %c0_21 = arith.constant 0 : index
    %47 = vector.load %arg5[%c0_20, %c0_21] : memref<2x32xf32, #tpu.memory_space<vmem>>, vector<2x32xf32>
    %48 = arith.truncf %47 : vector<2x32xf32> to vector<2x32xbf16>
    %c0_22 = arith.constant 0 : index
    %c0_23 = arith.constant 0 : index
    %49 = vector.load %arg3[%c0_22, %c0_23] : memref<32x128xbf16, #tpu.memory_space<vmem>>, vector<32x128xbf16>
    %cst_24 = arith.constant dense<0.000000e+00> : vector<2x128xf32>
    %50 = tpu.matmul %48, %49, %cst_24 {dimension_numbers = #tpu.dot_dimension_numbers<[1], [0], [0], [1], [0, 0, 1, 1], [], []>} : vector<2x32xbf16>, vector<32x128xbf16>, vector<2x128xf32> -> vector<2x128xf32>
    %51 = arith.addf %46, %50 : vector<2x128xf32>
    %52 = vector.extract_strided_slice %51 {offsets = [0, 0], sizes = [2, 32], strides = [1, 1]} : vector<2x128xf32> to vector<2x32xf32>
    %53 = arith.negf %52 : vector<2x32xf32>
    %54 = math.exp %53 : vector<2x32xf32>
    %cst_25 = arith.constant 1.000000e+00 : f32
    %55 = vector.broadcast %cst_25 : f32 to vector<2x32xf32>
    %56 = arith.addf %55, %54 : vector<2x32xf32>
    %57 = arith.divf %55, %56 : vector<2x32xf32>
    %58 = vector.extract_strided_slice %51 {offsets = [0, 32], sizes = [2, 32], strides = [1, 1]} : vector<2x128xf32> to vector<2x32xf32>
    %59 = arith.negf %58 : vector<2x32xf32>
    %60 = math.exp %59 : vector<2x32xf32>
    %cst_26 = arith.constant 1.000000e+00 : f32
    %61 = vector.broadcast %cst_26 : f32 to vector<2x32xf32>
    %62 = arith.addf %61, %60 : vector<2x32xf32>
    %63 = arith.divf %61, %62 : vector<2x32xf32>
    %64 = vector.extract_strided_slice %51 {offsets = [0, 64], sizes = [2, 32], strides = [1, 1]} : vector<2x128xf32> to vector<2x32xf32>
    %65 = math.tanh %64 : vector<2x32xf32>
    %66 = vector.extract_strided_slice %51 {offsets = [0, 96], sizes = [2, 32], strides = [1, 1]} : vector<2x128xf32> to vector<2x32xf32>
    %67 = arith.negf %66 : vector<2x32xf32>
    %68 = math.exp %67 : vector<2x32xf32>
    %cst_27 = arith.constant 1.000000e+00 : f32
    %69 = vector.broadcast %cst_27 : f32 to vector<2x32xf32>
    %70 = arith.addf %69, %68 : vector<2x32xf32>
    %71 = arith.divf %69, %70 : vector<2x32xf32>
    %c0_28 = arith.constant 0 : index
    %c0_29 = arith.constant 0 : index
    %72 = vector.load %arg6[%c0_28, %c0_29] : memref<2x32xf32, #tpu.memory_space<vmem>>, vector<2x32xf32>
    %73 = arith.mulf %63, %72 : vector<2x32xf32>
    %74 = arith.mulf %57, %65 : vector<2x32xf32>
    %75 = arith.addf %73, %74 : vector<2x32xf32>
    %76 = math.tanh %75 : vector<2x32xf32>
    %77 = arith.mulf %71, %76 : vector<2x32xf32>
    %c0_30 = arith.constant 0 : index
    %c0_31 = arith.constant 0 : index
    %78 = vector.load %arg6[%c0_30, %c0_31] : memref<2x32xf32, #tpu.memory_space<vmem>>, vector<2x32xf32>
    tpu.vector_store %arg6[%c0_30, %c0_31], %75 {strides = array<i32>} : memref<2x32xf32, #tpu.memory_space<vmem>>, vector<2x32xf32>,
    %c0_32 = arith.constant 0 : index
    %c0_33 = arith.constant 0 : index
    %79 = vector.load %arg5[%c0_32, %c0_33] : memref<2x32xf32, #tpu.memory_space<vmem>>, vector<2x32xf32>
    tpu.vector_store %arg5[%c0_32, %c0_33], %77 {strides = array<i32>} : memref<2x32xf32, #tpu.memory_space<vmem>>, vector<2x32xf32>,
    %80 = arith.truncf %77 : vector<2x32xf32> to vector<2x32xbf16>
    %81 = arith.index_cast %c1_i32 : i32 to index
    %c0_34 = arith.constant 0 : index
    %c0_35 = arith.constant 0 : index
    %82 = vector.load %arg4[%81, %c0_34, %c0_35] : memref<8x2x32xbf16, #tpu.memory_space<vmem>>, vector<1x2x32xbf16>
    %83 = vector.shape_cast %82 : vector<1x2x32xbf16> to vector<2x32xbf16>
    %84 = vector.shape_cast %80 : vector<2x32xbf16> to vector<1x2x32xbf16>
    tpu.vector_store %arg4[%81, %c0_34, %c0_35], %84 {strides = array<i32>} : memref<8x2x32xbf16, #tpu.memory_space<vmem>>, vector<1x2x32xbf16>,
    %c2_i32 = arith.constant 2 : i32
    %85 = arith.index_cast %c2_i32 : i32 to index
    %c0_36 = arith.constant 0 : index
    %c0_37 = arith.constant 0 : index
    %86 = vector.load %arg2[%85, %c0_36, %c0_37] : memref<8x2x128xf32, #tpu.memory_space<vmem>>, vector<1x2x128xf32>
    %87 = vector.shape_cast %86 : vector<1x2x128xf32> to vector<2x128xf32>
    %c0_38 = arith.constant 0 : index
    %c0_39 = arith.constant 0 : index
    %88 = vector.load %arg5[%c0_38, %c0_39] : memref<2x32xf32, #tpu.memory_space<vmem>>, vector<2x32xf32>
    %89 = arith.truncf %88 : vector<2x32xf32> to vector<2x32xbf16>
    %c0_40 = arith.constant 0 : index
    %c0_41 = arith.constant 0 : index
    %90 = vector.load %arg3[%c0_40, %c0_41] : memref<32x128xbf16, #tpu.memory_space<vmem>>, vector<32x128xbf16>
    %cst_42 = arith.constant dense<0.000000e+00> : vector<2x128xf32>
    %91 = tpu.matmul %89, %90, %cst_42 {dimension_numbers = #tpu.dot_dimension_numbers<[1], [0], [0], [1], [0, 0, 1, 1], [], []>} : vector<2x32xbf16>, vector<32x128xbf16>, vector<2x128xf32> -> vector<2x128xf32>
    %92 = arith.addf %87, %91 : vector<2x128xf32>
    %93 = vector.extract_strided_slice %92 {offsets = [0, 0], sizes = [2, 32], strides = [1, 1]} : vector<2x128xf32> to vector<2x32xf32>
    %94 = arith.negf %93 : vector<2x32xf32>
    %95 = math.exp %94 : vector<2x32xf32>
    %cst_43 = arith.constant 1.000000e+00 : f32
    %96 = vector.broadcast %cst_43 : f32 to vector<2x32xf32>
    %97 = arith.addf %96, %95 : vector<2x32xf32>
    %98 = arith.divf %96, %97 : vector<2x32xf32>
    %99 = vector.extract_strided_slice %92 {offsets = [0, 32], sizes = [2, 32], strides = [1, 1]} : vector<2x128xf32> to vector<2x32xf32>
    %100 = arith.negf %99 : vector<2x32xf32>
    %101 = math.exp %100 : vector<2x32xf32>
    %cst_44 = arith.constant 1.000000e+00 : f32
    %102 = vector.broadcast %cst_44 : f32 to vector<2x32xf32>
    %103 = arith.addf %102, %101 : vector<2x32xf32>
    %104 = arith.divf %102, %103 : vector<2x32xf32>
    %105 = vector.extract_strided_slice %92 {offsets = [0, 64], sizes = [2, 32], strides = [1, 1]} : vector<2x128xf32> to vector<2x32xf32>
    %106 = math.tanh %105 : vector<2x32xf32>
    %107 = vector.extract_strided_slice %92 {offsets = [0, 96], sizes = [2, 32], strides = [1, 1]} : vector<2x128xf32> to vector<2x32xf32>
    %108 = arith.negf %107 : vector<2x32xf32>
    %109 = math.exp %108 : vector<2x32xf32>
    %cst_45 = arith.constant 1.000000e+00 : f32
    %110 = vector.broadcast %cst_45 : f32 to vector<2x32xf32>
    %111 = arith.addf %110, %109 : vector<2x32xf32>
    %112 = arith.divf %110, %111 : vector<2x32xf32>
    %c0_46 = arith.constant 0 : index
    %c0_47 = arith.constant 0 : index
    %113 = vector.load %arg6[%c0_46, %c0_47] : memref<2x32xf32, #tpu.memory_space<vmem>>, vector<2x32xf32>
    %114 = arith.mulf %104, %113 : vector<2x32xf32>
    %115 = arith.mulf %98, %106 : vector<2x32xf32>
    %116 = arith.addf %114, %115 : vector<2x32xf32>
    %117 = math.tanh %116 : vector<2x32xf32>
    %118 = arith.mulf %112, %117 : vector<2x32xf32>
    %c0_48 = arith.constant 0 : index
    %c0_49 = arith.constant 0 : index
    %119 = vector.load %arg6[%c0_48, %c0_49] : memref<2x32xf32, #tpu.memory_space<vmem>>, vector<2x32xf32>
    tpu.vector_store %arg6[%c0_48, %c0_49], %116 {strides = array<i32>} : memref<2x32xf32, #tpu.memory_space<vmem>>, vector<2x32xf32>,
    %c0_50 = arith.constant 0 : index
    %c0_51 = arith.constant 0 : index
    %120 = vector.load %arg5[%c0_50, %c0_51] : memref<2x32xf32, #tpu.memory_space<vmem>>, vector<2x32xf32>
    tpu.vector_store %arg5[%c0_50, %c0_51], %118 {strides = array<i32>} : memref<2x32xf32, #tpu.memory_space<vmem>>, vector<2x32xf32>,
    %121 = arith.truncf %118 : vector<2x32xf32> to vector<2x32xbf16>
    %122 = arith.index_cast %c2_i32 : i32 to index
    %c0_52 = arith.constant 0 : index
    %c0_53 = arith.constant 0 : index
    %123 = vector.load %arg4[%122, %c0_52, %c0_53] : memref<8x2x32xbf16, #tpu.memory_space<vmem>>, vector<1x2x32xbf16>
    %124 = vector.shape_cast %123 : vector<1x2x32xbf16> to vector<2x32xbf16>
    %125 = vector.shape_cast %121 : vector<2x32xbf16> to vector<1x2x32xbf16>
    tpu.vector_store %arg4[%122, %c0_52, %c0_53], %125 {strides = array<i32>} : memref<8x2x32xbf16, #tpu.memory_space<vmem>>, vector<1x2x32xbf16>,
    %c3_i32 = arith.constant 3 : i32
    %126 = arith.index_cast %c3_i32 : i32 to index
    %c0_54 = arith.constant 0 : index
    %c0_55 = arith.constant 0 : index
    %127 = vector.load %arg2[%126, %c0_54, %c0_55] : memref<8x2x128xf32, #tpu.memory_space<vmem>>, vector<1x2x128xf32>
    %128 = vector.shape_cast %127 : vector<1x2x128xf32> to vector<2x128xf32>
    %c0_56 = arith.constant 0 : index
    %c0_57 = arith.constant 0 : index
    %129 = vector.load %arg5[%c0_56, %c0_57] : memref<2x32xf32, #tpu.memory_space<vmem>>, vector<2x32xf32>
    %130 = arith.truncf %129 : vector<2x32xf32> to vector<2x32xbf16>
    %c0_58 = arith.constant 0 : index
    %c0_59 = arith.constant 0 : index
    %131 = vector.load %arg3[%c0_58, %c0_59] : memref<32x128xbf16, #tpu.memory_space<vmem>>, vector<32x128xbf16>
    %cst_60 = arith.constant dense<0.000000e+00> : vector<2x128xf32>
    %132 = tpu.matmul %130, %131, %cst_60 {dimension_numbers = #tpu.dot_dimension_numbers<[1], [0], [0], [1], [0, 0, 1, 1], [], []>} : vector<2x32xbf16>, vector<32x128xbf16>, vector<2x128xf32> -> vector<2x128xf32>
    %133 = arith.addf %128, %132 : vector<2x128xf32>
    %134 = vector.extract_strided_slice %133 {offsets = [0, 0], sizes = [2, 32], strides = [1, 1]} : vector<2x128xf32> to vector<2x32xf32>
    %135 = arith.negf %134 : vector<2x32xf32>
    %136 = math.exp %135 : vector<2x32xf32>
    %cst_61 = arith.constant 1.000000e+00 : f32
    %137 = vector.broadcast %cst_61 : f32 to vector<2x32xf32>
    %138 = arith.addf %137, %136 : vector<2x32xf32>
    %139 = arith.divf %137, %138 : vector<2x32xf32>
    %140 = vector.extract_strided_slice %133 {offsets = [0, 32], sizes = [2, 32], strides = [1, 1]} : vector<2x128xf32> to vector<2x32xf32>
    %141 = arith.negf %140 : vector<2x32xf32>
    %142 = math.exp %141 : vector<2x32xf32>
    %cst_62 = arith.constant 1.000000e+00 : f32
    %143 = vector.broadcast %cst_62 : f32 to vector<2x32xf32>
    %144 = arith.addf %143, %142 : vector<2x32xf32>
    %145 = arith.divf %143, %144 : vector<2x32xf32>
    %146 = vector.extract_strided_slice %133 {offsets = [0, 64], sizes = [2, 32], strides = [1, 1]} : vector<2x128xf32> to vector<2x32xf32>
    %147 = math.tanh %146 : vector<2x32xf32>
    %148 = vector.extract_strided_slice %133 {offsets = [0, 96], sizes = [2, 32], strides = [1, 1]} : vector<2x128xf32> to vector<2x32xf32>
    %149 = arith.negf %148 : vector<2x32xf32>
    %150 = math.exp %149 : vector<2x32xf32>
    %cst_63 = arith.constant 1.000000e+00 : f32
    %151 = vector.broadcast %cst_63 : f32 to vector<2x32xf32>
    %152 = arith.addf %151, %150 : vector<2x32xf32>
    %153 = arith.divf %151, %152 : vector<2x32xf32>
    %c0_64 = arith.constant 0 : index
    %c0_65 = arith.constant 0 : index
    %154 = vector.load %arg6[%c0_64, %c0_65] : memref<2x32xf32, #tpu.memory_space<vmem>>, vector<2x32xf32>
    %155 = arith.mulf %145, %154 : vector<2x32xf32>
    %156 = arith.mulf %139, %147 : vector<2x32xf32>
    %157 = arith.addf %155, %156 : vector<2x32xf32>
    %158 = math.tanh %157 : vector<2x32xf32>
    %159 = arith.mulf %153, %158 : vector<2x32xf32>
    %c0_66 = arith.constant 0 : index
    %c0_67 = arith.constant 0 : index
    %160 = vector.load %arg6[%c0_66, %c0_67] : memref<2x32xf32, #tpu.memory_space<vmem>>, vector<2x32xf32>
    tpu.vector_store %arg6[%c0_66, %c0_67], %157 {strides = array<i32>} : memref<2x32xf32, #tpu.memory_space<vmem>>, vector<2x32xf32>,
    %c0_68 = arith.constant 0 : index
    %c0_69 = arith.constant 0 : index
    %161 = vector.load %arg5[%c0_68, %c0_69] : memref<2x32xf32, #tpu.memory_space<vmem>>, vector<2x32xf32>
    tpu.vector_store %arg5[%c0_68, %c0_69], %159 {strides = array<i32>} : memref<2x32xf32, #tpu.memory_space<vmem>>, vector<2x32xf32>,
    %162 = arith.truncf %159 : vector<2x32xf32> to vector<2x32xbf16>
    %163 = arith.index_cast %c3_i32 : i32 to index
    %c0_70 = arith.constant 0 : index
    %c0_71 = arith.constant 0 : index
    %164 = vector.load %arg4[%163, %c0_70, %c0_71] : memref<8x2x32xbf16, #tpu.memory_space<vmem>>, vector<1x2x32xbf16>
    %165 = vector.shape_cast %164 : vector<1x2x32xbf16> to vector<2x32xbf16>
    %166 = vector.shape_cast %162 : vector<2x32xbf16> to vector<1x2x32xbf16>
    tpu.vector_store %arg4[%163, %c0_70, %c0_71], %166 {strides = array<i32>} : memref<8x2x32xbf16, #tpu.memory_space<vmem>>, vector<1x2x32xbf16>,
    %c4_i32 = arith.constant 4 : i32
    %167 = arith.index_cast %c4_i32 : i32 to index
    %c0_72 = arith.constant 0 : index
    %c0_73 = arith.constant 0 : index
    %168 = vector.load %arg2[%167, %c0_72, %c0_73] : memref<8x2x128xf32, #tpu.memory_space<vmem>>, vector<1x2x128xf32>
    %169 = vector.shape_cast %168 : vector<1x2x128xf32> to vector<2x128xf32>
    %c0_74 = arith.constant 0 : index
    %c0_75 = arith.constant 0 : index
    %170 = vector.load %arg5[%c0_74, %c0_75] : memref<2x32xf32, #tpu.memory_space<vmem>>, vector<2x32xf32>
    %171 = arith.truncf %170 : vector<2x32xf32> to vector<2x32xbf16>
    %c0_76 = arith.constant 0 : index
    %c0_77 = arith.constant 0 : index
    %172 = vector.load %arg3[%c0_76, %c0_77] : memref<32x128xbf16, #tpu.memory_space<vmem>>, vector<32x128xbf16>
    %cst_78 = arith.constant dense<0.000000e+00> : vector<2x128xf32>
    %173 = tpu.matmul %171, %172, %cst_78 {dimension_numbers = #tpu.dot_dimension_numbers<[1], [0], [0], [1], [0, 0, 1, 1], [], []>} : vector<2x32xbf16>, vector<32x128xbf16>, vector<2x128xf32> -> vector<2x128xf32>
    %174 = arith.addf %169, %173 : vector<2x128xf32>
    %175 = vector.extract_strided_slice %174 {offsets = [0, 0], sizes = [2, 32], strides = [1, 1]} : vector<2x128xf32> to vector<2x32xf32>
    %176 = arith.negf %175 : vector<2x32xf32>
    %177 = math.exp %176 : vector<2x32xf32>
    %cst_79 = arith.constant 1.000000e+00 : f32
    %178 = vector.broadcast %cst_79 : f32 to vector<2x32xf32>
    %179 = arith.addf %178, %177 : vector<2x32xf32>
    %180 = arith.divf %178, %179 : vector<2x32xf32>
    %181 = vector.extract_strided_slice %174 {offsets = [0, 32], sizes = [2, 32], strides = [1, 1]} : vector<2x128xf32> to vector<2x32xf32>
    %182 = arith.negf %181 : vector<2x32xf32>
    %183 = math.exp %182 : vector<2x32xf32>
    %cst_80 = arith.constant 1.000000e+00 : f32
    %184 = vector.broadcast %cst_80 : f32 to vector<2x32xf32>
    %185 = arith.addf %184, %183 : vector<2x32xf32>
    %186 = arith.divf %184, %185 : vector<2x32xf32>
    %187 = vector.extract_strided_slice %174 {offsets = [0, 64], sizes = [2, 32], strides = [1, 1]} : vector<2x128xf32> to vector<2x32xf32>
    %188 = math.tanh %187 : vector<2x32xf32>
    %189 = vector.extract_strided_slice %174 {offsets = [0, 96], sizes = [2, 32], strides = [1, 1]} : vector<2x128xf32> to vector<2x32xf32>
    %190 = arith.negf %189 : vector<2x32xf32>
    %191 = math.exp %190 : vector<2x32xf32>
    %cst_81 = arith.constant 1.000000e+00 : f32
    %192 = vector.broadcast %cst_81 : f32 to vector<2x32xf32>
    %193 = arith.addf %192, %191 : vector<2x32xf32>
    %194 = arith.divf %192, %193 : vector<2x32xf32>
    %c0_82 = arith.constant 0 : index
    %c0_83 = arith.constant 0 : index
    %195 = vector.load %arg6[%c0_82, %c0_83] : memref<2x32xf32, #tpu.memory_space<vmem>>, vector<2x32xf32>
    %196 = arith.mulf %186, %195 : vector<2x32xf32>
    %197 = arith.mulf %180, %188 : vector<2x32xf32>
    %198 = arith.addf %196, %197 : vector<2x32xf32>
    %199 = math.tanh %198 : vector<2x32xf32>
    %200 = arith.mulf %194, %199 : vector<2x32xf32>
    %c0_84 = arith.constant 0 : index
    %c0_85 = arith.constant 0 : index
    %201 = vector.load %arg6[%c0_84, %c0_85] : memref<2x32xf32, #tpu.memory_space<vmem>>, vector<2x32xf32>
    tpu.vector_store %arg6[%c0_84, %c0_85], %198 {strides = array<i32>} : memref<2x32xf32, #tpu.memory_space<vmem>>, vector<2x32xf32>,
    %c0_86 = arith.constant 0 : index
    %c0_87 = arith.constant 0 : index
    %202 = vector.load %arg5[%c0_86, %c0_87] : memref<2x32xf32, #tpu.memory_space<vmem>>, vector<2x32xf32>
    tpu.vector_store %arg5[%c0_86, %c0_87], %200 {strides = array<i32>} : memref<2x32xf32, #tpu.memory_space<vmem>>, vector<2x32xf32>,
    %203 = arith.truncf %200 : vector<2x32xf32> to vector<2x32xbf16>
    %204 = arith.index_cast %c4_i32 : i32 to index
    %c0_88 = arith.constant 0 : index
    %c0_89 = arith.constant 0 : index
    %205 = vector.load %arg4[%204, %c0_88, %c0_89] : memref<8x2x32xbf16, #tpu.memory_space<vmem>>, vector<1x2x32xbf16>
    %206 = vector.shape_cast %205 : vector<1x2x32xbf16> to vector<2x32xbf16>
    %207 = vector.shape_cast %203 : vector<2x32xbf16> to vector<1x2x32xbf16>
    tpu.vector_store %arg4[%204, %c0_88, %c0_89], %207 {strides = array<i32>} : memref<8x2x32xbf16, #tpu.memory_space<vmem>>, vector<1x2x32xbf16>,
    %c5_i32 = arith.constant 5 : i32
    %208 = arith.index_cast %c5_i32 : i32 to index
    %c0_90 = arith.constant 0 : index
    %c0_91 = arith.constant 0 : index
    %209 = vector.load %arg2[%208, %c0_90, %c0_91] : memref<8x2x128xf32, #tpu.memory_space<vmem>>, vector<1x2x128xf32>
    %210 = vector.shape_cast %209 : vector<1x2x128xf32> to vector<2x128xf32>
    %c0_92 = arith.constant 0 : index
    %c0_93 = arith.constant 0 : index
    %211 = vector.load %arg5[%c0_92, %c0_93] : memref<2x32xf32, #tpu.memory_space<vmem>>, vector<2x32xf32>
    %212 = arith.truncf %211 : vector<2x32xf32> to vector<2x32xbf16>
    %c0_94 = arith.constant 0 : index
    %c0_95 = arith.constant 0 : index
    %213 = vector.load %arg3[%c0_94, %c0_95] : memref<32x128xbf16, #tpu.memory_space<vmem>>, vector<32x128xbf16>
    %cst_96 = arith.constant dense<0.000000e+00> : vector<2x128xf32>
    %214 = tpu.matmul %212, %213, %cst_96 {dimension_numbers = #tpu.dot_dimension_numbers<[1], [0], [0], [1], [0, 0, 1, 1], [], []>} : vector<2x32xbf16>, vector<32x128xbf16>, vector<2x128xf32> -> vector<2x128xf32>
    %215 = arith.addf %210, %214 : vector<2x128xf32>
    %216 = vector.extract_strided_slice %215 {offsets = [0, 0], sizes = [2, 32], strides = [1, 1]} : vector<2x128xf32> to vector<2x32xf32>
    %217 = arith.negf %216 : vector<2x32xf32>
    %218 = math.exp %217 : vector<2x32xf32>
    %cst_97 = arith.constant 1.000000e+00 : f32
    %219 = vector.broadcast %cst_97 : f32 to vector<2x32xf32>
    %220 = arith.addf %219, %218 : vector<2x32xf32>
    %221 = arith.divf %219, %220 : vector<2x32xf32>
    %222 = vector.extract_strided_slice %215 {offsets = [0, 32], sizes = [2, 32], strides = [1, 1]} : vector<2x128xf32> to vector<2x32xf32>
    %223 = arith.negf %222 : vector<2x32xf32>
    %224 = math.exp %223 : vector<2x32xf32>
    %cst_98 = arith.constant 1.000000e+00 : f32
    %225 = vector.broadcast %cst_98 : f32 to vector<2x32xf32>
    %226 = arith.addf %225, %224 : vector<2x32xf32>
    %227 = arith.divf %225, %226 : vector<2x32xf32>
    %228 = vector.extract_strided_slice %215 {offsets = [0, 64], sizes = [2, 32], strides = [1, 1]} : vector<2x128xf32> to vector<2x32xf32>
    %229 = math.tanh %228 : vector<2x32xf32>
    %230 = vector.extract_strided_slice %215 {offsets = [0, 96], sizes = [2, 32], strides = [1, 1]} : vector<2x128xf32> to vector<2x32xf32>
    %231 = arith.negf %230 : vector<2x32xf32>
    %232 = math.exp %231 : vector<2x32xf32>
    %cst_99 = arith.constant 1.000000e+00 : f32
    %233 = vector.broadcast %cst_99 : f32 to vector<2x32xf32>
    %234 = arith.addf %233, %232 : vector<2x32xf32>
    %235 = arith.divf %233, %234 : vector<2x32xf32>
    %c0_100 = arith.constant 0 : index
    %c0_101 = arith.constant 0 : index
    %236 = vector.load %arg6[%c0_100, %c0_101] : memref<2x32xf32, #tpu.memory_space<vmem>>, vector<2x32xf32>
    %237 = arith.mulf %227, %236 : vector<2x32xf32>
    %238 = arith.mulf %221, %229 : vector<2x32xf32>
    %239 = arith.addf %237, %238 : vector<2x32xf32>
    %240 = math.tanh %239 : vector<2x32xf32>
    %241 = arith.mulf %235, %240 : vector<2x32xf32>
    %c0_102 = arith.constant 0 : index
    %c0_103 = arith.constant 0 : index
    %242 = vector.load %arg6[%c0_102, %c0_103] : memref<2x32xf32, #tpu.memory_space<vmem>>, vector<2x32xf32>
    tpu.vector_store %arg6[%c0_102, %c0_103], %239 {strides = array<i32>} : memref<2x32xf32, #tpu.memory_space<vmem>>, vector<2x32xf32>,
    %c0_104 = arith.constant 0 : index
    %c0_105 = arith.constant 0 : index
    %243 = vector.load %arg5[%c0_104, %c0_105] : memref<2x32xf32, #tpu.memory_space<vmem>>, vector<2x32xf32>
    tpu.vector_store %arg5[%c0_104, %c0_105], %241 {strides = array<i32>} : memref<2x32xf32, #tpu.memory_space<vmem>>, vector<2x32xf32>,
    %244 = arith.truncf %241 : vector<2x32xf32> to vector<2x32xbf16>
    %245 = arith.index_cast %c5_i32 : i32 to index
    %c0_106 = arith.constant 0 : index
    %c0_107 = arith.constant 0 : index
    %246 = vector.load %arg4[%245, %c0_106, %c0_107] : memref<8x2x32xbf16, #tpu.memory_space<vmem>>, vector<1x2x32xbf16>
    %247 = vector.shape_cast %246 : vector<1x2x32xbf16> to vector<2x32xbf16>
    %248 = vector.shape_cast %244 : vector<2x32xbf16> to vector<1x2x32xbf16>
    tpu.vector_store %arg4[%245, %c0_106, %c0_107], %248 {strides = array<i32>} : memref<8x2x32xbf16, #tpu.memory_space<vmem>>, vector<1x2x32xbf16>,
    %c6_i32 = arith.constant 6 : i32
    %249 = arith.index_cast %c6_i32 : i32 to index
    %c0_108 = arith.constant 0 : index
    %c0_109 = arith.constant 0 : index
    %250 = vector.load %arg2[%249, %c0_108, %c0_109] : memref<8x2x128xf32, #tpu.memory_space<vmem>>, vector<1x2x128xf32>
    %251 = vector.shape_cast %250 : vector<1x2x128xf32> to vector<2x128xf32>
    %c0_110 = arith.constant 0 : index
    %c0_111 = arith.constant 0 : index
    %252 = vector.load %arg5[%c0_110, %c0_111] : memref<2x32xf32, #tpu.memory_space<vmem>>, vector<2x32xf32>
    %253 = arith.truncf %252 : vector<2x32xf32> to vector<2x32xbf16>
    %c0_112 = arith.constant 0 : index
    %c0_113 = arith.constant 0 : index
    %254 = vector.load %arg3[%c0_112, %c0_113] : memref<32x128xbf16, #tpu.memory_space<vmem>>, vector<32x128xbf16>
    %cst_114 = arith.constant dense<0.000000e+00> : vector<2x128xf32>
    %255 = tpu.matmul %253, %254, %cst_114 {dimension_numbers = #tpu.dot_dimension_numbers<[1], [0], [0], [1], [0, 0, 1, 1], [], []>} : vector<2x32xbf16>, vector<32x128xbf16>, vector<2x128xf32> -> vector<2x128xf32>
    %256 = arith.addf %251, %255 : vector<2x128xf32>
    %257 = vector.extract_strided_slice %256 {offsets = [0, 0], sizes = [2, 32], strides = [1, 1]} : vector<2x128xf32> to vector<2x32xf32>
    %258 = arith.negf %257 : vector<2x32xf32>
    %259 = math.exp %258 : vector<2x32xf32>
    %cst_115 = arith.constant 1.000000e+00 : f32
    %260 = vector.broadcast %cst_115 : f32 to vector<2x32xf32>
    %261 = arith.addf %260, %259 : vector<2x32xf32>
    %262 = arith.divf %260, %261 : vector<2x32xf32>
    %263 = vector.extract_strided_slice %256 {offsets = [0, 32], sizes = [2, 32], strides = [1, 1]} : vector<2x128xf32> to vector<2x32xf32>
    %264 = arith.negf %263 : vector<2x32xf32>
    %265 = math.exp %264 : vector<2x32xf32>
    %cst_116 = arith.constant 1.000000e+00 : f32
    %266 = vector.broadcast %cst_116 : f32 to vector<2x32xf32>
    %267 = arith.addf %266, %265 : vector<2x32xf32>
    %268 = arith.divf %266, %267 : vector<2x32xf32>
    %269 = vector.extract_strided_slice %256 {offsets = [0, 64], sizes = [2, 32], strides = [1, 1]} : vector<2x128xf32> to vector<2x32xf32>
    %270 = math.tanh %269 : vector<2x32xf32>
    %271 = vector.extract_strided_slice %256 {offsets = [0, 96], sizes = [2, 32], strides = [1, 1]} : vector<2x128xf32> to vector<2x32xf32>
    %272 = arith.negf %271 : vector<2x32xf32>
    %273 = math.exp %272 : vector<2x32xf32>
    %cst_117 = arith.constant 1.000000e+00 : f32
    %274 = vector.broadcast %cst_117 : f32 to vector<2x32xf32>
    %275 = arith.addf %274, %273 : vector<2x32xf32>
    %276 = arith.divf %274, %275 : vector<2x32xf32>
    %c0_118 = arith.constant 0 : index
    %c0_119 = arith.constant 0 : index
    %277 = vector.load %arg6[%c0_118, %c0_119] : memref<2x32xf32, #tpu.memory_space<vmem>>, vector<2x32xf32>
    %278 = arith.mulf %268, %277 : vector<2x32xf32>
    %279 = arith.mulf %262, %270 : vector<2x32xf32>
    %280 = arith.addf %278, %279 : vector<2x32xf32>
    %281 = math.tanh %280 : vector<2x32xf32>
    %282 = arith.mulf %276, %281 : vector<2x32xf32>
    %c0_120 = arith.constant 0 : index
    %c0_121 = arith.constant 0 : index
    %283 = vector.load %arg6[%c0_120, %c0_121] : memref<2x32xf32, #tpu.memory_space<vmem>>, vector<2x32xf32>
    tpu.vector_store %arg6[%c0_120, %c0_121], %280 {strides = array<i32>} : memref<2x32xf32, #tpu.memory_space<vmem>>, vector<2x32xf32>,
    %c0_122 = arith.constant 0 : index
    %c0_123 = arith.constant 0 : index
    %284 = vector.load %arg5[%c0_122, %c0_123] : memref<2x32xf32, #tpu.memory_space<vmem>>, vector<2x32xf32>
    tpu.vector_store %arg5[%c0_122, %c0_123], %282 {strides = array<i32>} : memref<2x32xf32, #tpu.memory_space<vmem>>, vector<2x32xf32>,
    %285 = arith.truncf %282 : vector<2x32xf32> to vector<2x32xbf16>
    %286 = arith.index_cast %c6_i32 : i32 to index
    %c0_124 = arith.constant 0 : index
    %c0_125 = arith.constant 0 : index
    %287 = vector.load %arg4[%286, %c0_124, %c0_125] : memref<8x2x32xbf16, #tpu.memory_space<vmem>>, vector<1x2x32xbf16>
    %288 = vector.shape_cast %287 : vector<1x2x32xbf16> to vector<2x32xbf16>
    %289 = vector.shape_cast %285 : vector<2x32xbf16> to vector<1x2x32xbf16>
    tpu.vector_store %arg4[%286, %c0_124, %c0_125], %289 {strides = array<i32>} : memref<8x2x32xbf16, #tpu.memory_space<vmem>>, vector<1x2x32xbf16>,
    %c7_i32 = arith.constant 7 : i32
    %290 = arith.index_cast %c7_i32 : i32 to index
    %c0_126 = arith.constant 0 : index
    %c0_127 = arith.constant 0 : index
    %291 = vector.load %arg2[%290, %c0_126, %c0_127] : memref<8x2x128xf32, #tpu.memory_space<vmem>>, vector<1x2x128xf32>
    %292 = vector.shape_cast %291 : vector<1x2x128xf32> to vector<2x128xf32>
    %c0_128 = arith.constant 0 : index
    %c0_129 = arith.constant 0 : index
    %293 = vector.load %arg5[%c0_128, %c0_129] : memref<2x32xf32, #tpu.memory_space<vmem>>, vector<2x32xf32>
    %294 = arith.truncf %293 : vector<2x32xf32> to vector<2x32xbf16>
    %c0_130 = arith.constant 0 : index
    %c0_131 = arith.constant 0 : index
    %295 = vector.load %arg3[%c0_130, %c0_131] : memref<32x128xbf16, #tpu.memory_space<vmem>>, vector<32x128xbf16>
    %cst_132 = arith.constant dense<0.000000e+00> : vector<2x128xf32>
    %296 = tpu.matmul %294, %295, %cst_132 {dimension_numbers = #tpu.dot_dimension_numbers<[1], [0], [0], [1], [0, 0, 1, 1], [], []>} : vector<2x32xbf16>, vector<32x128xbf16>, vector<2x128xf32> -> vector<2x128xf32>
    %297 = arith.addf %292, %296 : vector<2x128xf32>
    %298 = vector.extract_strided_slice %297 {offsets = [0, 0], sizes = [2, 32], strides = [1, 1]} : vector<2x128xf32> to vector<2x32xf32>
    %299 = arith.negf %298 : vector<2x32xf32>
    %300 = math.exp %299 : vector<2x32xf32>
    %cst_133 = arith.constant 1.000000e+00 : f32
    %301 = vector.broadcast %cst_133 : f32 to vector<2x32xf32>
    %302 = arith.addf %301, %300 : vector<2x32xf32>
    %303 = arith.divf %301, %302 : vector<2x32xf32>
    %304 = vector.extract_strided_slice %297 {offsets = [0, 32], sizes = [2, 32], strides = [1, 1]} : vector<2x128xf32> to vector<2x32xf32>
    %305 = arith.negf %304 : vector<2x32xf32>
    %306 = math.exp %305 : vector<2x32xf32>
    %cst_134 = arith.constant 1.000000e+00 : f32
    %307 = vector.broadcast %cst_134 : f32 to vector<2x32xf32>
    %308 = arith.addf %307, %306 : vector<2x32xf32>
    %309 = arith.divf %307, %308 : vector<2x32xf32>
    %310 = vector.extract_strided_slice %297 {offsets = [0, 64], sizes = [2, 32], strides = [1, 1]} : vector<2x128xf32> to vector<2x32xf32>
    %311 = math.tanh %310 : vector<2x32xf32>
    %312 = vector.extract_strided_slice %297 {offsets = [0, 96], sizes = [2, 32], strides = [1, 1]} : vector<2x128xf32> to vector<2x32xf32>
    %313 = arith.negf %312 : vector<2x32xf32>
    %314 = math.exp %313 : vector<2x32xf32>
    %cst_135 = arith.constant 1.000000e+00 : f32
    %315 = vector.broadcast %cst_135 : f32 to vector<2x32xf32>
    %316 = arith.addf %315, %314 : vector<2x32xf32>
    %317 = arith.divf %315, %316 : vector<2x32xf32>
    %c0_136 = arith.constant 0 : index
    %c0_137 = arith.constant 0 : index
    %318 = vector.load %arg6[%c0_136, %c0_137] : memref<2x32xf32, #tpu.memory_space<vmem>>, vector<2x32xf32>
    %319 = arith.mulf %309, %318 : vector<2x32xf32>
    %320 = arith.mulf %303, %311 : vector<2x32xf32>
    %321 = arith.addf %319, %320 : vector<2x32xf32>
    %322 = math.tanh %321 : vector<2x32xf32>
    %323 = arith.mulf %317, %322 : vector<2x32xf32>
    %c0_138 = arith.constant 0 : index
    %c0_139 = arith.constant 0 : index
    %324 = vector.load %arg6[%c0_138, %c0_139] : memref<2x32xf32, #tpu.memory_space<vmem>>, vector<2x32xf32>
    tpu.vector_store %arg6[%c0_138, %c0_139], %321 {strides = array<i32>} : memref<2x32xf32, #tpu.memory_space<vmem>>, vector<2x32xf32>,
    %c0_140 = arith.constant 0 : index
    %c0_141 = arith.constant 0 : index
    %325 = vector.load %arg5[%c0_140, %c0_141] : memref<2x32xf32, #tpu.memory_space<vmem>>, vector<2x32xf32>
    tpu.vector_store %arg5[%c0_140, %c0_141], %323 {strides = array<i32>} : memref<2x32xf32, #tpu.memory_space<vmem>>, vector<2x32xf32>,
    %326 = arith.truncf %323 : vector<2x32xf32> to vector<2x32xbf16>
    %327 = arith.index_cast %c7_i32 : i32 to index
    %c0_142 = arith.constant 0 : index
    %c0_143 = arith.constant 0 : index
    %328 = vector.load %arg4[%327, %c0_142, %c0_143] : memref<8x2x32xbf16, #tpu.memory_space<vmem>>, vector<1x2x32xbf16>
    %329 = vector.shape_cast %328 : vector<1x2x32xbf16> to vector<2x32xbf16>
    %330 = vector.shape_cast %326 : vector<2x32xbf16> to vector<1x2x32xbf16>
    tpu.vector_store %arg4[%327, %c0_142, %c0_143], %330 {strides = array<i32>} : memref<8x2x32xbf16, #tpu.memory_space<vmem>>, vector<1x2x32xbf16>,
    %c8_i32 = arith.constant 8 : i32
    return
  }
  func.func @transform_0(%arg0: i32, %arg1: i32) -> (i32, i32, i32) {
    %c0_i32 = arith.constant 0 : i32
    %c0_i32_0 = arith.constant 0 : i32
    return %arg1, %arg0, %c0_i32 : i32, i32, i32
  }
  func.func @transform_1(%arg0: i32, %arg1: i32) -> (i32, i32) {
    %c0_i32 = arith.constant 0 : i32
    %c0_i32_0 = arith.constant 0 : i32
    %c0_i32_1 = arith.constant 0 : i32
    return %c0_i32, %c0_i32_0 : i32, i32
  }
  func.func @transform_2(%arg0: i32, %arg1: i32) -> (i32, i32, i32) {
    %c0_i32 = arith.constant 0 : i32
    %c0_i32_0 = arith.constant 0 : i32
    return %arg1, %arg0, %c0_i32 : i32, i32, i32
  }
}

module attributes {stable_mosaic.version = 11 : i64} {
  func.func @_joint_combine_kernel(%arg0: i32, %arg1: i32, %arg2: i32, %arg3: memref<1x8x32xf32, #tpu.memory_space<vmem>>, %arg4: memref<1x7x32xf32, #tpu.memory_space<vmem>>, %arg5: memref<32x16xbf16, #tpu.memory_space<vmem>>, %arg6: memref<1x16xf32, #tpu.memory_space<vmem>>, %arg7: memref<1x8x7x16xf32, #tpu.memory_space<vmem>>) attributes {dimension_semantics = [#tpu.dimension_semantics<parallel>, #tpu.dimension_semantics<parallel>, #tpu.dimension_semantics<parallel>], iteration_bounds = array<i64: 2, 1, 1>, scalar_prefetch = 0 : i64, scratch_operands = 0 : i64, tpu.core_type = #tpu.core_type<tc>, window_params = [{transform_indices = @transform_0, window_bounds = array<i64: 1, 8, 32>}, {transform_indices = @transform_1, window_bounds = array<i64: 1, 7, 32>}, {pipeline_mode = #tpu.pipeline_mode<synchronous>, transform_indices = @transform_2, window_bounds = array<i64: 32, 16>}, {pipeline_mode = #tpu.pipeline_mode<synchronous>, transform_indices = @transform_3, window_bounds = array<i64: 1, 16>}, {transform_indices = @transform_4, window_bounds = array<i64: 1, 8, 7, 16>}]} {
    %c0 = arith.constant 0 : index
    %c0_0 = arith.constant 0 : index
    %c0_1 = arith.constant 0 : index
    %0 = vector.load %arg3[%c0, %c0_0, %c0_1] : memref<1x8x32xf32, #tpu.memory_space<vmem>>, vector<1x8x32xf32>
    %1 = vector.shape_cast %0 : vector<1x8x32xf32> to vector<8x32xf32>
    %c0_2 = arith.constant 0 : index
    %c0_3 = arith.constant 0 : index
    %c0_4 = arith.constant 0 : index
    %2 = vector.load %arg4[%c0_2, %c0_3, %c0_4] : memref<1x7x32xf32, #tpu.memory_space<vmem>>, vector<1x7x32xf32>
    %3 = vector.shape_cast %2 : vector<1x7x32xf32> to vector<7x32xf32>
    %4 = vector.shape_cast %1 : vector<8x32xf32> to vector<8x1x32xf32>
    %5 = vector.shape_cast %3 : vector<7x32xf32> to vector<1x7x32xf32>
    %6 = vector.broadcast %4 : vector<8x1x32xf32> to vector<8x7x32xf32>
    %7 = vector.broadcast %5 : vector<1x7x32xf32> to vector<8x7x32xf32>
    %8 = arith.addf %6, %7 : vector<8x7x32xf32>
    %9 = math.tanh %8 : vector<8x7x32xf32>
    %10 = vector.shape_cast %9 : vector<8x7x32xf32> to vector<56x32xf32>
    %11 = arith.truncf %10 : vector<56x32xf32> to vector<56x32xbf16>
    %c0_5 = arith.constant 0 : index
    %c0_6 = arith.constant 0 : index
    %12 = vector.load %arg5[%c0_5, %c0_6] : memref<32x16xbf16, #tpu.memory_space<vmem>>, vector<32x16xbf16>
    %cst = arith.constant dense<0.000000e+00> : vector<56x16xf32>
    %13 = tpu.matmul %11, %12, %cst {dimension_numbers = #tpu.dot_dimension_numbers<[1], [0], [0], [1], [0, 0, 1, 1], [], []>} : vector<56x32xbf16>, vector<32x16xbf16>, vector<56x16xf32> -> vector<56x16xf32>
    %c0_7 = arith.constant 0 : index
    %c0_8 = arith.constant 0 : index
    %14 = vector.load %arg6[%c0_7, %c0_8] : memref<1x16xf32, #tpu.memory_space<vmem>>, vector<1x16xf32>
    %15 = vector.broadcast %14 : vector<1x16xf32> to vector<56x16xf32>
    %16 = arith.addf %13, %15 : vector<56x16xf32>
    %17 = vector.shape_cast %16 : vector<56x16xf32> to vector<8x7x16xf32>
    %c0_9 = arith.constant 0 : index
    %c0_10 = arith.constant 0 : index
    %c0_11 = arith.constant 0 : index
    %c0_12 = arith.constant 0 : index
    %18 = vector.load %arg7[%c0_9, %c0_10, %c0_11, %c0_12] : memref<1x8x7x16xf32, #tpu.memory_space<vmem>>, vector<1x8x7x16xf32>
    %19 = vector.shape_cast %18 : vector<1x8x7x16xf32> to vector<8x7x16xf32>
    %20 = vector.shape_cast %17 : vector<8x7x16xf32> to vector<1x8x7x16xf32>
    tpu.vector_store %arg7[%c0_9, %c0_10, %c0_11, %c0_12], %20 {strides = array<i32>} : memref<1x8x7x16xf32, #tpu.memory_space<vmem>>, vector<1x8x7x16xf32>,
    return
  }
  func.func @transform_0(%arg0: i32, %arg1: i32, %arg2: i32) -> (i32, i32, i32) {
    %c0_i32 = arith.constant 0 : i32
    %c0_i32_0 = arith.constant 0 : i32
    return %arg0, %arg1, %c0_i32 : i32, i32, i32
  }
  func.func @transform_1(%arg0: i32, %arg1: i32, %arg2: i32) -> (i32, i32, i32) {
    %c0_i32 = arith.constant 0 : i32
    %c0_i32_0 = arith.constant 0 : i32
    return %arg0, %arg2, %c0_i32 : i32, i32, i32
  }
  func.func @transform_2(%arg0: i32, %arg1: i32, %arg2: i32) -> (i32, i32) {
    %c0_i32 = arith.constant 0 : i32
    %c0_i32_0 = arith.constant 0 : i32
    %c0_i32_1 = arith.constant 0 : i32
    return %c0_i32, %c0_i32_0 : i32, i32
  }
  func.func @transform_3(%arg0: i32, %arg1: i32, %arg2: i32) -> (i32, i32) {
    %c0_i32 = arith.constant 0 : i32
    %c0_i32_0 = arith.constant 0 : i32
    %c0_i32_1 = arith.constant 0 : i32
    return %c0_i32, %c0_i32_0 : i32, i32
  }
  func.func @transform_4(%arg0: i32, %arg1: i32, %arg2: i32) -> (i32, i32, i32, i32) {
    %c0_i32 = arith.constant 0 : i32
    %c0_i32_0 = arith.constant 0 : i32
    return %arg0, %arg1, %arg2, %c0_i32 : i32, i32, i32, i32
  }
}

</mosaic_0001>

<llo_original>
// kernel: rnnt_forward.16
$region0: #{rnnt_forward.16}
  #allocation0 [shape = 'u32[]', space=smem, size = 0x4, offset = 0x4, fixed_abs, tag = 'smem constant byte address 0x4 - core index']
  #allocation1 [shape = 'u32[144,128]{1,0:T(1,128)}', space=vmem, size = 0x12000, scoped, tag = 'internal scratch']
  %s0 = inlined_call_operand.vmem [shape: bf16[14,32], index: 0, kind: input, shape index: {}]
  %s1 = inlined_call_operand.vmem [shape: bf16[32,32], index: 1, kind: input, shape index: {}]
  %s2 = inlined_call_operand.vmem [shape: f32[1,32], index: 2, kind: input, shape index: {}]
  %s3 = inlined_call_operand.vmem [shape: f32[14,32], index: 3, kind: output, shape index: {}]
  %s4 = sld [smem:[#allocation0]]
  $region22: #{rnnt_forward.16} parent=0
    _
  %s6 = ssub.s32 1, %s4
  %s7 = scalar_select 0, %s6, %s4
  // Predicated region
  $region2: #{rnnt_forward.16} parent=0 // pred_check
    _
  $region3: #{rnnt_forward.16} parent=0 // pred_check_branch
    %9 = sbr.rel (0) target = $region5
  $region4: #{rnnt_forward.16} parent=0 // pred_region
    _
  $region5: #{rnnt_forward.16} parent=0 // pred_fallthru
    _
  // Predicated region
  $region6: #{rnnt_forward.16} parent=0 // pred_check
    _
  $region7: #{rnnt_forward.16} parent=0 // pred_check_branch
    %11 = sbr.rel (0) target = $region9
  $region8: #{rnnt_forward.16} parent=0 // pred_region
    _
  $region9: #{rnnt_forward.16} parent=0 // pred_fallthru
    _
  // Predicated region
  $region10: #{rnnt_forward.16} parent=0 // pred_check
    _
  $region11: #{rnnt_forward.16} parent=0 // pred_check_branch
    %13 = sbr.rel (0) target = $region13
  $region12: #{rnnt_forward.16} parent=0 // pred_region
    _
  $region13: #{rnnt_forward.16} parent=0 // pred_fallthru
    _
  %v15 = vld [vmem:[%s0] sm:$0xf]
  %v16 = vld [vmem:[%s0 + $0x4] sm:$0x7]
  %v17 = vld [vmem:[%s1] sm:$0xf]
  %v18 = vld [vmem:[%s1 + $0x4] sm:$0xf]
  %v19 = vld [vmem:[%s1 + $0x8] sm:$0xf]
  %v20 = vld [vmem:[%s1 + $0xc] sm:$0xf]
  %v21 = vld [vmem:[%s2] sm:$0x1]
  %v23 = vlaneseq
  %v24 = vshrl.u32 %v23, 7
  %v25 = vsub.s32 0, %v24
  %v26 = vrot.slane %v21, %v25
  %v30 = vunpack.c.l.b16 %v15
  %v31 = vunpack.c.l.b16 %v16
  %v32 = vpack.c.b16 %v31, %v30
  %v37 = vunpack.c.l.b16 %v17
  %v38 = vunpack.c.l.b16 %v18
  %v39 = vunpack.c.l.b16 %v19
  %v40 = vunpack.c.l.b16 %v20
  %v41 = vpack.c.b16 %v38, %v37
  %v42 = vpack.c.b16 %v40, %v39
  %vm45 = vcmask 261120
  %v47 = vsel %vm45, %v32, 0
  %49 = vmatprep.subr.bf16.mxu0 0
  %50 = vmatpush1.bf16.msra.mxu0 %v41
  %51 = vmatprep.subr.bf16.mxu0 0
  %52 = vmatpush1.bf16.msra.mxu0 %v42
  %53 = vmatprep.subr.bf16.mxu0 0
  %54 = vmatpush1.bf16.msra.mxu0 0
  %55 = vmatprep.subr.bf16.mxu0 0
  %56 = vmatpush1.bf16.msra.mxu0 0
  %57 = vmatprep.subr.bf16.mxu0 0
  %58 = vmatpush1.bf16.msra.mxu0 0
  %59 = vmatprep.subr.bf16.mxu0 0
  %60 = vmatpush1.bf16.msra.mxu0 0
  %61 = vmatprep.subr.bf16.mxu0 0
  %62 = vmatpush1.bf16.msra.mxu0 0
  %63 = vmatprep.subr.bf16.mxu0 0
  %64 = vmatpush1.bf16.msra.mxu0 0
  %65 = vmatprep.subr.bf16.mxu0 0
  %66 = vmatpush1.bf16.msra.mxu0 0
  %67 = vmatprep.subr.bf16.mxu0 0
  %68 = vmatpush1.bf16.msra.mxu0 0
  %69 = vmatprep.subr.bf16.mxu0 0
  %70 = vmatpush1.bf16.msra.mxu0 0
  %71 = vmatprep.subr.bf16.mxu0 0
  %72 = vmatpush1.bf16.msra.mxu0 0
  %73 = vmatprep.subr.bf16.mxu0 0
  %74 = vmatpush1.bf16.msra.mxu0 0
  %75 = vmatprep.subr.bf16.mxu0 0
  %76 = vmatpush1.bf16.msra.mxu0 0
  %77 = vmatprep.subr.bf16.mxu0 0
  %78 = vmatpush1.bf16.msra.mxu0 0
  %79 = vmatprep.subr.bf16.mxu0 0
  %80 = vmatpush1.bf16.msra.mxu0 0
  %81 = vmatprep.mubr.bf16.mxu0 0
  %82 = vmatmul.mubr.bf16.gmra.mrb[0].mxu0 %v47
  %v83 = vpop.f32.mrb[0].mxu0
  %v84 = vadd.f32 %v26, %v83
  %v85 = vpop.f32.mrb[0].mxu0
  %v86 = vpop.f32.mrb[0].mxu0
  %v87 = vadd.f32 %v26, %v86
  %v88 = vpop.f32.mrb[0].mxu0
  %89 = vdwg.mxu0
  %90 = vst.msk [vmem:[%s3] sm:$0xff] %vm45, %v84
  %vm91 = vcmask 259072
  %92 = vst.msk [vmem:[%s3 + $0x8] sm:$0x3f] %vm91, %v87
  // Predicated region
  $region14: #{rnnt_forward.16} parent=0 // pred_check
    _
  $region15: #{rnnt_forward.16} parent=0 // pred_check_branch
    %94 = sbr.rel (0) target = $region17
  $region16: #{rnnt_forward.16} parent=0 // pred_region
    _
  $region17: #{rnnt_forward.16} parent=0 // pred_fallthru
    _
  // Predicated region
  $region18: #{rnnt_forward.16} parent=0 // pred_check
    _
  $region19: #{rnnt_forward.16} parent=0 // pred_check_branch
    %96 = sbr.rel (0) target = $region21
  $region20: #{rnnt_forward.16} parent=0 // pred_region
    _
  $region21: #{rnnt_forward.16} parent=0 // pred_fallthru
    _

// kernel: rnnt_forward.13
$region0: #{rnnt_forward.13}
  #allocation0 [shape = 'u32[]', space=smem, size = 0x4, offset = 0x4, fixed_abs, tag = 'smem constant byte address 0x4 - core index']
  #allocation1 [shape = 'u32[144,128]{1,0:T(1,128)}', space=vmem, size = 0x12000, scoped, tag = 'internal scratch']
  %s0 = inlined_call_operand.vmem [shape: f32[14,16], index: 0, kind: input, shape index: {}]
  %s1 = inlined_call_operand.vmem [shape: bf16[16,128], index: 1, kind: input, shape index: {}]
  %s2 = inlined_call_operand.vmem [shape: f32[1,128], index: 2, kind: input, shape index: {}]
  %s3 = inlined_call_operand.vmem [shape: f32[14,128], index: 3, kind: output, shape index: {}]
  %s4 = sld [smem:[#allocation0]]
  $region22: #{rnnt_forward.13} parent=0
    _
  %s6 = ssub.s32 1, %s4
  %s7 = scalar_select 0, %s6, %s4
  // Predicated region
  $region2: #{rnnt_forward.13} parent=0 // pred_check
    _
  $region3: #{rnnt_forward.13} parent=0 // pred_check_branch
    %9 = sbr.rel (0) target = $region5
  $region4: #{rnnt_forward.13} parent=0 // pred_region
    _
  $region5: #{rnnt_forward.13} parent=0 // pred_fallthru
    _
  // Predicated region
  $region6: #{rnnt_forward.13} parent=0 // pred_check
    _
  $region7: #{rnnt_forward.13} parent=0 // pred_check_branch
    %11 = sbr.rel (0) target = $region9
  $region8: #{rnnt_forward.13} parent=0 // pred_region
    _
  $region9: #{rnnt_forward.13} parent=0 // pred_fallthru
    _
  // Predicated region
  $region10: #{rnnt_forward.13} parent=0 // pred_check
    _
  $region11: #{rnnt_forward.13} parent=0 // pred_check_branch
    %13 = sbr.rel (0) target = $region13
  $region12: #{rnnt_forward.13} parent=0 // pred_region
    _
  $region13: #{rnnt_forward.13} parent=0 // pred_fallthru
    _
  %v15 = vld [vmem:[%s0] sm:$0xff]
  %v16 = vld [vmem:[%s0 + $0x8] sm:$0x3f]
  %v17 = vpack.c.bf16 %v16, %v15
  %v18 = vld [vmem:[%s1] sm:$0xf]
  %v19 = vld [vmem:[%s1 + $0x4] sm:$0xf]
  %v20 = vld [vmem:[%s2] sm:$0x1]
  %v22 = vlaneseq
  %v23 = vshrl.u32 %v22, 7
  %v24 = vsub.s32 0, %v23
  %v25 = vrot.slane %v20, %v24
  %v29 = vunpack.c.l.b16 %v18
  %v30 = vunpack.c.l.b16 %v19
  %v31 = vpack.c.b16 %v30, %v29
  %vm33 = vcmask 130048
  %v35 = vsel %vm33, %v17, 0
  %37 = vmatprep.subr.bf16.mxu0 0
  %38 = vmatpush1.bf16.msra.mxu0 %v31
  %39 = vmatprep.subr.bf16.mxu0 0
  %40 = vmatpush1.bf16.msra.mxu0 0
  %41 = vmatprep.subr.bf16.mxu0 0
  %42 = vmatpush1.bf16.msra.mxu0 0
  %43 = vmatprep.subr.bf16.mxu0 0
  %44 = vmatpush1.bf16.msra.mxu0 0
  %45 = vmatprep.subr.bf16.mxu0 0
  %46 = vmatpush1.bf16.msra.mxu0 0
  %47 = vmatprep.subr.bf16.mxu0 0
  %48 = vmatpush1.bf16.msra.mxu0 0
  %49 = vmatprep.subr.bf16.mxu0 0
  %50 = vmatpush1.bf16.msra.mxu0 0
  %51 = vmatprep.subr.bf16.mxu0 0
  %52 = vmatpush1.bf16.msra.mxu0 0
  %53 = vmatprep.subr.bf16.mxu0 0
  %54 = vmatpush1.bf16.msra.mxu0 0
  %55 = vmatprep.subr.bf16.mxu0 0
  %56 = vmatpush1.bf16.msra.mxu0 0
  %57 = vmatprep.subr.bf16.mxu0 0
  %58 = vmatpush1.bf16.msra.mxu0 0
  %59 = vmatprep.subr.bf16.mxu0 0
  %60 = vmatpush1.bf16.msra.mxu0 0
  %61 = vmatprep.subr.bf16.mxu0 0
  %62 = vmatpush1.bf16.msra.mxu0 0
  %63 = vmatprep.subr.bf16.mxu0 0
  %64 = vmatpush1.bf16.msra.mxu0 0
  %65 = vmatprep.subr.bf16.mxu0 0
  %66 = vmatpush1.bf16.msra.mxu0 0
  %67 = vmatprep.subr.bf16.mxu0 0
  %68 = vmatpush1.bf16.msra.mxu0 0
  %69 = vmatprep.mubr.bf16.mxu0 0
  %70 = vmatmul.mubr.bf16.gmra.mrb[0].mxu0 %v35
  %v71 = vpop.f32.mrb[0].mxu0
  %v72 = vadd.f32 %v25, %v71
  %v73 = vpop.f32.mrb[0].mxu0
  %v74 = vpop.f32.mrb[0].mxu0
  %v75 = vadd.f32 %v25, %v74
  %v76 = vpop.f32.mrb[0].mxu0
  %77 = vdwg.mxu0
  %78 = vst [vmem:[%s3] sm:$0xff] %v72
  %79 = vst [vmem:[%s3 + $0x8] sm:$0x3f] %v75
  // Predicated region
  $region14: #{rnnt_forward.13} parent=0 // pred_check
    _
  $region15: #{rnnt_forward.13} parent=0 // pred_check_branch
    %81 = sbr.rel (0) target = $region17
  $region16: #{rnnt_forward.13} parent=0 // pred_region
    _
  $region17: #{rnnt_forward.13} parent=0 // pred_fallthru
    _
  // Predicated region
  $region18: #{rnnt_forward.13} parent=0 // pred_check
    _
  $region19: #{rnnt_forward.13} parent=0 // pred_check_branch
    %83 = sbr.rel (0) target = $region21
  $region20: #{rnnt_forward.13} parent=0 // pred_region
    _
  $region21: #{rnnt_forward.13} parent=0 // pred_fallthru
    _

// kernel: rnnt_forward.9
$region0: #{rnnt_forward.9}
  #allocation0 [shape = 'u32[]', space=smem, size = 0x4, offset = 0x4, fixed_abs, tag = 'smem constant byte address 0x4 - core index']
  #allocation1 [shape = 'u32[144,128]{1,0:T(1,128)}', space=vmem, size = 0x12000, scoped, tag = 'internal scratch']
  %s0 = inlined_call_operand.vmem [shape: f32[16,16], index: 0, kind: input, shape index: {}]
  %s1 = inlined_call_operand.vmem [shape: bf16[16,128], index: 1, kind: input, shape index: {}]
  %s2 = inlined_call_operand.vmem [shape: f32[1,128], index: 2, kind: input, shape index: {}]
  %s3 = inlined_call_operand.vmem [shape: f32[16,128], index: 3, kind: output, shape index: {}]
  %s4 = sld [smem:[#allocation0]]
  $region22: #{rnnt_forward.9} parent=0
    _
  %s6 = ssub.s32 1, %s4
  %s7 = scalar_select 0, %s6, %s4
  // Predicated region
  $region2: #{rnnt_forward.9} parent=0 // pred_check
    _
  $region3: #{rnnt_forward.9} parent=0 // pred_check_branch
    %9 = sbr.rel (0) target = $region5
  $region4: #{rnnt_forward.9} parent=0 // pred_region
    _
  $region5: #{rnnt_forward.9} parent=0 // pred_fallthru
    _
  // Predicated region
  $region6: #{rnnt_forward.9} parent=0 // pred_check
    _
  $region7: #{rnnt_forward.9} parent=0 // pred_check_branch
    %11 = sbr.rel (0) target = $region9
  $region8: #{rnnt_forward.9} parent=0 // pred_region
    _
  $region9: #{rnnt_forward.9} parent=0 // pred_fallthru
    _
  // Predicated region
  $region10: #{rnnt_forward.9} parent=0 // pred_check
    _
  $region11: #{rnnt_forward.9} parent=0 // pred_check_branch
    %13 = sbr.rel (0) target = $region13
  $region12: #{rnnt_forward.9} parent=0 // pred_region
    _
  $region13: #{rnnt_forward.9} parent=0 // pred_fallthru
    _
  %v15 = vld [vmem:[%s0] sm:$0xff]
  %v16 = vld [vmem:[%s0 + $0x8] sm:$0xff]
  %v17 = vpack.c.bf16 %v16, %v15
  %v18 = vld [vmem:[%s1] sm:$0xf]
  %v19 = vld [vmem:[%s1 + $0x4] sm:$0xf]
  %v20 = vld [vmem:[%s2] sm:$0x1]
  %v22 = vlaneseq
  %v23 = vshrl.u32 %v22, 7
  %v24 = vsub.s32 0, %v23
  %v25 = vrot.slane %v20, %v24
  %v29 = vunpack.c.l.b16 %v18
  %v30 = vunpack.c.l.b16 %v19
  %v31 = vpack.c.b16 %v30, %v29
  %vm33 = vcmask 130048
  %v35 = vsel %vm33, %v17, 0
  %37 = vmatprep.subr.bf16.mxu0 0
  %38 = vmatpush1.bf16.msra.mxu0 %v31
  %39 = vmatprep.subr.bf16.mxu0 0
  %40 = vmatpush1.bf16.msra.mxu0 0
  %41 = vmatprep.subr.bf16.mxu0 0
  %42 = vmatpush1.bf16.msra.mxu0 0
  %43 = vmatprep.subr.bf16.mxu0 0
  %44 = vmatpush1.bf16.msra.mxu0 0
  %45 = vmatprep.subr.bf16.mxu0 0
  %46 = vmatpush1.bf16.msra.mxu0 0
  %47 = vmatprep.subr.bf16.mxu0 0
  %48 = vmatpush1.bf16.msra.mxu0 0
  %49 = vmatprep.subr.bf16.mxu0 0
  %50 = vmatpush1.bf16.msra.mxu0 0
  %51 = vmatprep.subr.bf16.mxu0 0
  %52 = vmatpush1.bf16.msra.mxu0 0
  %53 = vmatprep.subr.bf16.mxu0 0
  %54 = vmatpush1.bf16.msra.mxu0 0
  %55 = vmatprep.subr.bf16.mxu0 0
  %56 = vmatpush1.bf16.msra.mxu0 0
  %57 = vmatprep.subr.bf16.mxu0 0
  %58 = vmatpush1.bf16.msra.mxu0 0
  %59 = vmatprep.subr.bf16.mxu0 0
  %60 = vmatpush1.bf16.msra.mxu0 0
  %61 = vmatprep.subr.bf16.mxu0 0
  %62 = vmatpush1.bf16.msra.mxu0 0
  %63 = vmatprep.subr.bf16.mxu0 0
  %64 = vmatpush1.bf16.msra.mxu0 0
  %65 = vmatprep.subr.bf16.mxu0 0
  %66 = vmatpush1.bf16.msra.mxu0 0
  %67 = vmatprep.subr.bf16.mxu0 0
  %68 = vmatpush1.bf16.msra.mxu0 0
  %69 = vmatprep.mubr.bf16.mxu0 0
  %70 = vmatmul.mubr.bf16.gmra.mrb[0].mxu0 %v35
  %v71 = vpop.f32.mrb[0].mxu0
  %v72 = vadd.f32 %v25, %v71
  %v73 = vpop.f32.mrb[0].mxu0
  %v74 = vpop.f32.mrb[0].mxu0
  %v75 = vadd.f32 %v25, %v74
  %v76 = vpop.f32.mrb[0].mxu0
  %77 = vdwg.mxu0
  %78 = vst [vmem:[%s3] sm:$0xff] %v72
  %79 = vst [vmem:[%s3 + $0x8] sm:$0xff] %v75
  // Predicated region
  $region14: #{rnnt_forward.9} parent=0 // pred_check
    _
  $region15: #{rnnt_forward.9} parent=0 // pred_check_branch
    %81 = sbr.rel (0) target = $region17
  $region16: #{rnnt_forward.9} parent=0 // pred_region
    _
  $region17: #{rnnt_forward.9} parent=0 // pred_fallthru
    _
  // Predicated region
  $region18: #{rnnt_forward.9} parent=0 // pred_check
    _
  $region19: #{rnnt_forward.9} parent=0 // pred_check_branch
    %83 = sbr.rel (0) target = $region21
  $region20: #{rnnt_forward.9} parent=0 // pred_region
    _
  $region21: #{rnnt_forward.9} parent=0 // pred_fallthru
    _

// kernel: rnnt_forward.14
$region0: #{rnnt_forward.14}
  #allocation0 [shape = 'u32[]', space=smem, size = 0x4, offset = 0x4, fixed_abs, tag = 'smem constant byte address 0x4 - core index']
  #allocation1 [shape = 'u32[144,128]{1,0:T(1,128)}', space=vmem, size = 0x12000, scoped, tag = 'internal scratch']
  #allocation2 [shape = 'f32[2,32]{1,0:T(2,128)}', space=vmem, size = 0x400, scoped, tag = 'scratch operand']
  #allocation3 [shape = 'f32[2,32]{1,0:T(2,128)}', space=vmem, size = 0x400, scoped, tag = 'scratch operand']
  %s0 = inlined_call_operand.vmem [shape: f32[7,2,128], index: 0, kind: input, shape index: {}]
  %s1 = inlined_call_operand.vmem [shape: bf16[32,128], index: 1, kind: input, shape index: {}]
  %s2 = inlined_call_operand.vmem [shape: bf16[7,2,32], index: 2, kind: output, shape index: {}]
  %s3 = sld [smem:[#allocation0]]
  $region22: #{rnnt_forward.14} parent=0
    _
  %s5 = ssub.s32 1, %s3
  %s6 = scalar_select 0, %s5, %s3
  // Predicated region
  $region2: #{rnnt_forward.14} parent=0 // pred_check
    _
  $region3: #{rnnt_forward.14} parent=0 // pred_check_branch
    %8 = sbr.rel (0) target = $region5
  $region4: #{rnnt_forward.14} parent=0 // pred_region
    _
  $region5: #{rnnt_forward.14} parent=0 // pred_fallthru
    _
  // Predicated region
  $region6: #{rnnt_forward.14} parent=0 // pred_check
    _
  $region7: #{rnnt_forward.14} parent=0 // pred_check_branch
    %10 = sbr.rel (0) target = $region9
  $region8: #{rnnt_forward.14} parent=0 // pred_region
    _
  $region9: #{rnnt_forward.14} parent=0 // pred_fallthru
    _
  %p12 = scmp.eq.s32.totalorder 0, 0
  // Predicated region
  $region10: #{rnnt_forward.14} parent=0 // pred_check
    %p13 = pneg %p12
  $region11: #{rnnt_forward.14} parent=0 // pred_check_branch
    %15 = sbr.rel (%p13) target = $region13
  $region12: #{rnnt_forward.14} parent=0 // pred_region
    %vm16 = vcmask 254976
    %17 = vst.msk [vmem:[#allocation2] sm:$0x3] %vm16, 0.0
    %18 = vst.msk [vmem:[#allocation3] sm:$0x3] %vm16, 0.0
  $region13: #{rnnt_forward.14} parent=0 // pred_fallthru
    _
  %v19 = vld [vmem:[%s0] sm:$0x3]
  %v20 = vld [vmem:[#allocation2] sm:$0x3]
  %v21 = vpack.c.bf16 %v20, %v20
  %v22 = vld [vmem:[%s1] sm:$0xf]
  %v23 = vld [vmem:[%s1 + $0x4] sm:$0xf]
  %v24 = vld [vmem:[%s1 + $0x8] sm:$0xf]
  %v25 = vld [vmem:[%s1 + $0xc] sm:$0xf]
  %v30 = vunpack.c.l.b16 %v22
  %v31 = vunpack.c.l.b16 %v23
  %v32 = vunpack.c.l.b16 %v24
  %v33 = vunpack.c.l.b16 %v25
  %v34 = vpack.c.b16 %v31, %v30
  %v35 = vpack.c.b16 %v33, %v32
  %vm38 = vcmask 261120
  %v40 = vsel %vm38, %v21, 0
  %42 = vmatprep.subr.bf16.mxu0 0
  %43 = vmatpush1.bf16.msra.mxu0 %v34
  %44 = vmatprep.subr.bf16.mxu0 0
  %45 = vmatpush1.bf16.msra.mxu0 %v35
  %46 = vmatprep.subr.bf16.mxu0 0
  %47 = vmatpush1.bf16.msra.mxu0 0
  %48 = vmatprep.subr.bf16.mxu0 0
  %49 = vmatpush1.bf16.msra.mxu0 0
  %50 = vmatprep.subr.bf16.mxu0 0
  %51 = vmatpush1.bf16.msra.mxu0 0
  %52 = vmatprep.subr.bf16.mxu0 0
  %53 = vmatpush1.bf16.msra.mxu0 0
  %54 = vmatprep.subr.bf16.mxu0 0
  %55 = vmatpush1.bf16.msra.mxu0 0
  %56 = vmatprep.subr.bf16.mxu0 0
  %57 = vmatpush1.bf16.msra.mxu0 0
  %58 = vmatprep.subr.bf16.mxu0 0
  %59 = vmatpush1.bf16.msra.mxu0 0
  %60 = vmatprep.subr.bf16.mxu0 0
  %61 = vmatpush1.bf16.msra.mxu0 0
  %62 = vmatprep.subr.bf16.mxu0 0
  %63 = vmatpush1.bf16.msra.mxu0 0
  %64 = vmatprep.subr.bf16.mxu0 0
  %65 = vmatpush1.bf16.msra.mxu0 0
  %66 = vmatprep.subr.bf16.mxu0 0
  %67 = vmatpush1.bf16.msra.mxu0 0
  %68 = vmatprep.subr.bf16.mxu0 0
  %69 = vmatpush1.bf16.msra.mxu0 0
  %70 = vmatprep.subr.bf16.mxu0 0
  %71 = vmatpush1.bf16.msra.mxu0 0
  %72 = vmatprep.subr.bf16.mxu0 0
  %73 = vmatpush1.bf16.msra.mxu0 0
  %74 = vmatprep.mubr.bf16.mxu0 0
  %75 = vmatmul.mubr.bf16.gmra.mrb[0].mxu0 %v40
  %v76 = vpop.f32.mrb[0].mxu0
  %v77 = vadd.f32 0.0, %v76
  %v78 = vpop.f32.mrb[0].mxu0
  %v79 = vpop.f32.mrb[0].mxu0
  %v80 = vpop.f32.mrb[0].mxu0
  %81 = vdwg.mxu0
  %v82 = vadd.f32 %v19, %v77
  %v83 = vxor.u32 %v82, 2147483648
  %v84 = vmul.f32 %v83, 1.442695
  %v85 = vpow.pop %v84
  %v86 = vadd.f32 %v85, 1.0
  %v87 = vrcp.pop %v86
  %v88 = vmul.f32 1.0, %v87
  %v89 = vtanh.pop %v82
  %v90 = vld [vmem:[#allocation3] sm:$0x3]
  %92 = vrot.lane.b32.xlu0 %v90, 32
  %v93 = vpop.permute.xlu0 %92
  %v95 = vmul.f32 %v88, %v93
  %97 = vrot.lane.b32.xlu0 %v89, 64
  %v98 = vpop.permute.xlu0 %97
  %v100 = vmul.f32 %v88, %v98
  %102 = vrot.lane.b32.xlu0 %v100, 32
  %v103 = vpop.permute.xlu0 %102
  %v105 = vadd.f32 %v95, %v103
  %v106 = vtanh.pop %v105
  %108 = vrot.lane.b32.xlu0 %v106, 64
  %v109 = vpop.permute.xlu0 %108
  %v111 = vmul.f32 %v88, %v109
  %113 = vrot.lane.b32.xlu0 %v105, 96
  %v114 = vpop.permute.xlu0 %113
  %vm116 = vcmask 254976
  %117 = vst.msk [vmem:[#allocation3] sm:$0x3] %vm116, %v114
  %119 = vrot.lane.b32.xlu0 %v111, 32
  %v120 = vpop.permute.xlu0 %119
  %122 = vst.msk [vmem:[#allocation2] sm:$0x3] %vm116, %v120
  %v123 = vpack.c.bf16 %v111, %v111
  %v126 = vunpack.c.l.s4 1966171168
  %v127 = vunpack.c.0.s8 %v126
  %v128 = vlaneseq
  %v129 = vshrl.u32 %v128, 7
  %v130 = vsub.s32 %v127, %v129
  %v131 = vrot.slane %v123, %v130
  %v133 = vunpack.c.l.s4 1966171168
  %v134 = vunpack.c.0.s8 %v133
  %v135 = vlaneseq
  %v136 = vshrl.u32 %v135, 7
  %v137 = vsub.s32 %v134, %v136
  %v138 = vrot.slane %v131, %v137
  %139 = vrot.lane.b32.xlu0 %v138, 32
  %v140 = vpop.permute.xlu0 %139
  %vm142 = vcmask 253952
  %143 = vst.msk [vmem:[%s2] sm:$0x1] %vm142, %v140
  %s144 = scalar_lea.vmem %s0, 2
  %v145 = vld [vmem:[%s144] sm:$0x3]
  %v146 = vld [vmem:[#allocation2] sm:$0x3]
  %v147 = vpack.c.bf16 %v146, %v146
  %v148 = vld [vmem:[%s1] sm:$0xf]
  %v149 = vld [vmem:[%s1 + $0x4] sm:$0xf]
  %v150 = vld [vmem:[%s1 + $0x8] sm:$0xf]
  %v151 = vld [vmem:[%s1 + $0xc] sm:$0xf]
  %v156 = vunpack.c.l.b16 %v148
  %v157 = vunpack.c.l.b16 %v149
  %v158 = vunpack.c.l.b16 %v150
  %v159 = vunpack.c.l.b16 %v151
  %v160 = vpack.c.b16 %v157, %v156
  %v161 = vpack.c.b16 %v159, %v158
  %v165 = vsel %vm38, %v147, 0
  %167 = vmatprep.subr.bf16.mxu0 0
  %168 = vmatpush1.bf16.msra.mxu0 %v160
  %169 = vmatprep.subr.bf16.mxu0 0
  %170 = vmatpush1.bf16.msra.mxu0 %v161
  %171 = vmatprep.subr.bf16.mxu0 0
  %172 = vmatpush1.bf16.msra.mxu0 0
  %173 = vmatprep.subr.bf16.mxu0 0
  %174 = vmatpush1.bf16.msra.mxu0 0
  %175 = vmatprep.subr.bf16.mxu0 0
  %176 = vmatpush1.bf16.msra.mxu0 0
  %177 = vmatprep.subr.bf16.mxu0 0
  %178 = vmatpush1.bf16.msra.mxu0 0
  %179 = vmatprep.subr.bf16.mxu0 0
  %180 = vmatpush1.bf16.msra.mxu0 0
  %181 = vmatprep.subr.bf16.mxu0 0
  %182 = vmatpush1.bf16.msra.mxu0 0
  %183 = vmatprep.subr.bf16.mxu0 0
  %184 = vmatpush1.bf16.msra.mxu0 0
  %185 = vmatprep.subr.bf16.mxu0 0
  %186 = vmatpush1.bf16.msra.mxu0 0
  %187 = vmatprep.subr.bf16.mxu0 0
  %188 = vmatpush1.bf16.msra.mxu0 0
  %189 = vmatprep.subr.bf16.mxu0 0
  %190 = vmatpush1.bf16.msra.mxu0 0
  %191 = vmatprep.subr.bf16.mxu0 0
  %192 = vmatpush1.bf16.msra.mxu0 0
  %193 = vmatprep.subr.bf16.mxu0 0
  %194 = vmatpush1.bf16.msra.mxu0 0
  %195 = vmatprep.subr.bf16.mxu0 0
  %196 = vmatpush1.bf16.msra.mxu0 0
  %197 = vmatprep.subr.bf16.mxu0 0
  %198 = vmatpush1.bf16.msra.mxu0 0
  %199 = vmatprep.mubr.bf16.mxu0 0
  %200 = vmatmul.mubr.bf16.gmra.mrb[0].mxu0 %v165
  %v201 = vpop.f32.mrb[0].mxu0
  %v202 = vadd.f32 0.0, %v201
  %v203 = vpop.f32.mrb[0].mxu0
  %v204 = vpop.f32.mrb[0].mxu0
  %v205 = vpop.f32.mrb[0].mxu0
  %206 = vdwg.mxu0
  %v207 = vadd.f32 %v145, %v202
  %v208 = vxor.u32 %v207, 2147483648
  %v209 = vmul.f32 %v208, 1.442695
  %v210 = vpow.pop %v209
  %v211 = vadd.f32 %v210, 1.0
  %v212 = vrcp.pop %v211
  %v213 = vmul.f32 1.0, %v212
  %v214 = vtanh.pop %v207
  %v215 = vld [vmem:[#allocation3] sm:$0x3]
  %217 = vrot.lane.b32.xlu0 %v215, 32
  %v218 = vpop.permute.xlu0 %217
  %v220 = vmul.f32 %v213, %v218
  %222 = vrot.lane.b32.xlu0 %v214, 64
  %v223 = vpop.permute.xlu0 %222
  %v225 = vmul.f32 %v213, %v223
  %227 = vrot.lane.b32.xlu0 %v225, 32
  %v228 = vpop.permute.xlu0 %227
  %v230 = vadd.f32 %v220, %v228
  %v231 = vtanh.pop %v230
  %233 = vrot.lane.b32.xlu0 %v231, 64
  %v234 = vpop.permute.xlu0 %233
  %v236 = vmul.f32 %v213, %v234
  %238 = vrot.lane.b32.xlu0 %v230, 96
  %v239 = vpop.permute.xlu0 %238
  %241 = vst.msk [vmem:[#allocation3] sm:$0x3] %vm116, %v239
  %243 = vrot.lane.b32.xlu0 %v236, 32
  %v244 = vpop.permute.xlu0 %243
  %246 = vst.msk [vmem:[#allocation2] sm:$0x3] %vm116, %v244
  %v247 = vpack.c.bf16 %v236, %v236
  %v250 = vunpack.c.l.s4 1966171168
  %v251 = vunpack.c.0.s8 %v250
  %v252 = vlaneseq
  %v253 = vshrl.u32 %v252, 7
  %v254 = vsub.s32 %v251, %v253
  %v255 = vrot.slane %v247, %v254
  %v257 = vunpack.c.l.s4 1966171168
  %v258 = vunpack.c.0.s8 %v257
  %v259 = vlaneseq
  %v260 = vshrl.u32 %v259, 7
  %v261 = vsub.s32 %v258, %v260
  %v262 = vrot.slane %v255, %v261
  %263 = vrot.lane.b32.xlu0 %v262, 32
  %v264 = vpop.permute.xlu0 %263
  %s266 = scalar_lea.vmem %s2, 1
  %267 = vst.msk [vmem:[%s266] sm:$0x1] %vm142, %v264
  %s268 = scalar_lea.vmem %s0, 4
  %v269 = vld [vmem:[%s268] sm:$0x3]
  %v270 = vld [vmem:[#allocation2] sm:$0x3]
  %v271 = vpack.c.bf16 %v270, %v270
  %v272 = vld [vmem:[%s1] sm:$0xf]
  %v273 = vld [vmem:[%s1 + $0x4] sm:$0xf]
  %v274 = vld [vmem:[%s1 + $0x8] sm:$0xf]
  %v275 = vld [vmem:[%s1 + $0xc] sm:$0xf]
  %v280 = vunpack.c.l.b16 %v272
  %v281 = vunpack.c.l.b16 %v273
  %v282 = vunpack.c.l.b16 %v274
  %v283 = vunpack.c.l.b16 %v275
  %v284 = vpack.c.b16 %v281, %v280
  %v285 = vpack.c.b16 %v283, %v282
  %v289 = vsel %vm38, %v271, 0
  %291 = vmatprep.subr.bf16.mxu0 0
  %292 = vmatpush1.bf16.msra.mxu0 %v284
  %293 = vmatprep.subr.bf16.mxu0 0
  %294 = vmatpush1.bf16.msra.mxu0 %v285
  %295 = vmatprep.subr.bf16.mxu0 0
  %296 = vmatpush1.bf16.msra.mxu0 0
  %297 = vmatprep.subr.bf16.mxu0 0
  %298 = vmatpush1.bf16.msra.mxu0 0
  %299 = vmatprep.subr.bf16.mxu0 0
  %300 = vmatpush1.bf16.msra.mxu0 0
  %301 = vmatprep.subr.bf16.mxu0 0
  %302 = vmatpush1.bf16.msra.mxu0 0
  %303 = vmatprep.subr.bf16.mxu0 0
  %304 = vmatpush1.bf16.msra.mxu0 0
  %305 = vmatprep.subr.bf16.mxu0 0
  %306 = vmatpush1.bf16.msra.mxu0 0
  %307 = vmatprep.subr.bf16.mxu0 0
  %308 = vmatpush1.bf16.msra.mxu0 0
  %309 = vmatprep.subr.bf16.mxu0 0
  %310 = vmatpush1.bf16.msra.mxu0 0
  %311 = vmatprep.subr.bf16.mxu0 0
  %312 = vmatpush1.bf16.msra.mxu0 0
  %313 = vmatprep.subr.bf16.mxu0 0
  %314 = vmatpush1.bf16.msra.mxu0 0
  %315 = vmatprep.subr.bf16.mxu0 0
  %316 = vmatpush1.bf16.msra.mxu0 0
  %317 = vmatprep.subr.bf16.mxu0 0
  %318 = vmatpush1.bf16.msra.mxu0 0
  %319 = vmatprep.subr.bf16.mxu0 0
  %320 = vmatpush1.bf16.msra.mxu0 0
  %321 = vmatprep.subr.bf16.mxu0 0
  %322 = vmatpush1.bf16.msra.mxu0 0
  %323 = vmatprep.mubr.bf16.mxu0 0
  %324 = vmatmul.mubr.bf16.gmra.mrb[0].mxu0 %v289
  %v325 = vpop.f32.mrb[0].mxu0
  %v326 = vadd.f32 0.0, %v325
  %v327 = vpop.f32.mrb[0].mxu0
  %v328 = vpop.f32.mrb[0].mxu0
  %v329 = vpop.f32.mrb[0].mxu0
  %330 = vdwg.mxu0
  %v331 = vadd.f32 %v269, %v326
  %v332 = vxor.u32 %v331, 2147483648
  %v333 = vmul.f32 %v332, 1.442695
  %v334 = vpow.pop %v333
  %v335 = vadd.f32 %v334, 1.0
  %v336 = vrcp.pop %v335
  %v337 = vmul.f32 1.0, %v336
  %v338 = vtanh.pop %v331
  %v339 = vld [vmem:[#allocation3] sm:$0x3]
  %341 = vrot.lane.b32.xlu0 %v339, 32
  %v342 = vpop.permute.xlu0 %341
  %v344 = vmul.f32 %v337, %v342
  %346 = vrot.lane.b32.xlu0 %v338, 64
  %v347 = vpop.permute.xlu0 %346
  %v349 = vmul.f32 %v337, %v347
  %351 = vrot.lane.b32.xlu0 %v349, 32
  %v352 = vpop.permute.xlu0 %351
  %v354 = vadd.f32 %v344, %v352
  %v355 = vtanh.pop %v354
  %357 = vrot.lane.b32.xlu0 %v355, 64
  %v358 = vpop.permute.xlu0 %357
  %v360 = vmul.f32 %v337, %v358
  %362 = vrot.lane.b32.xlu0 %v354, 96
  %v363 = vpop.permute.xlu0 %362
  %365 = vst.msk [vmem:[#allocation3] sm:$0x3] %vm116, %v363
  %367 = vrot.lane.b32.xlu0 %v360, 32
  %v368 = vpop.permute.xlu0 %367
  %370 = vst.msk [vmem:[#allocation2] sm:$0x3] %vm116, %v368
  %v371 = vpack.c.bf16 %v360, %v360
  %v374 = vunpack.c.l.s4 1966171168
  %v375 = vunpack.c.0.s8 %v374
  %v376 = vlaneseq
  %v377 = vshrl.u32 %v376, 7
  %v378 = vsub.s32 %v375, %v377
  %v379 = vrot.slane %v371, %v378
  %v381 = vunpack.c.l.s4 1966171168
  %v382 = vunpack.c.0.s8 %v381
  %v383 = vlaneseq
  %v384 = vshrl.u32 %v383, 7
  %v385 = vsub.s32 %v382, %v384
  %v386 = vrot.slane %v379, %v385
  %387 = vrot.lane.b32.xlu0 %v386, 32
  %v388 = vpop.permute.xlu0 %387
  %s390 = scalar_lea.vmem %s2, 2
  %391 = vst.msk [vmem:[%s390] sm:$0x1] %vm142, %v388
  %s392 = scalar_lea.vmem %s0, 6
  %v393 = vld [vmem:[%s392] sm:$0x3]
  %v394 = vld [vmem:[#allocation2] sm:$0x3]
  %v395 = vpack.c.bf16 %v394, %v394
  %v396 = vld [vmem:[%s1] sm:$0xf]
  %v397 = vld [vmem:[%s1 + $0x4] sm:$0xf]
  %v398 = vld [vmem:[%s1 + $0x8] sm:$0xf]
  %v399 = vld [vmem:[%s1 + $0xc] sm:$0xf]
  %v404 = vunpack.c.l.b16 %v396
  %v405 = vunpack.c.l.b16 %v397
  %v406 = vunpack.c.l.b16 %v398
  %v407 = vunpack.c.l.b16 %v399
  %v408 = vpack.c.b16 %v405, %v404
  %v409 = vpack.c.b16 %v407, %v406
  %v413 = vsel %vm38, %v395, 0
  %415 = vmatprep.subr.bf16.mxu0 0
  %416 = vmatpush1.bf16.msra.mxu0 %v408
  %417 = vmatprep.subr.bf16.mxu0 0
  %418 = vmatpush1.bf16.msra.mxu0 %v409
  %419 = vmatprep.subr.bf16.mxu0 0
  %420 = vmatpush1.bf16.msra.mxu0 0
  %421 = vmatprep.subr.bf16.mxu0 0
  %422 = vmatpush1.bf16.msra.mxu0 0
  %423 = vmatprep.subr.bf16.mxu0 0
  %424 = vmatpush1.bf16.msra.mxu0 0
  %425 = vmatprep.subr.bf16.mxu0 0
  %426 = vmatpush1.bf16.msra.mxu0 0
  %427 = vmatprep.subr.bf16.mxu0 0
  %428 = vmatpush1.bf16.msra.mxu0 0
  %429 = vmatprep.subr.bf16.mxu0 0
  %430 = vmatpush1.bf16.msra.mxu0 0
  %431 = vmatprep.subr.bf16.mxu0 0
  %432 = vmatpush1.bf16.msra.mxu0 0
  %433 = vmatprep.subr.bf16.mxu0 0
  %434 = vmatpush1.bf16.msra.mxu0 0
  %435 = vmatprep.subr.bf16.mxu0 0
  %436 = vmatpush1.bf16.msra.mxu0 0
  %437 = vmatprep.subr.bf16.mxu0 0
  %438 = vmatpush1.bf16.msra.mxu0 0
  %439 = vmatprep.subr.bf16.mxu0 0
  %440 = vmatpush1.bf16.msra.mxu0 0
  %441 = vmatprep.subr.bf16.mxu0 0
  %442 = vmatpush1.bf16.msra.mxu0 0
  %443 = vmatprep.subr.bf16.mxu0 0
  %444 = vmatpush1.bf16.msra.mxu0 0
  %445 = vmatprep.subr.bf16.mxu0 0
  %446 = vmatpush1.bf16.msra.mxu0 0
  %447 = vmatprep.mubr.bf16.mxu0 0
  %448 = vmatmul.mubr.bf16.gmra.mrb[0].mxu0 %v413
  %v449 = vpop.f32.mrb[0].mxu0
  %v450 = vadd.f32 0.0, %v449
  %v451 = vpop.f32.mrb[0].mxu0
  %v452 = vpop.f32.mrb[0].mxu0
  %v453 = vpop.f32.mrb[0].mxu0
  %454 = vdwg.mxu0
  %v455 = vadd.f32 %v393, %v450
  %v456 = vxor.u32 %v455, 2147483648
  %v457 = vmul.f32 %v456, 1.442695
  %v458 = vpow.pop %v457
  %v459 = vadd.f32 %v458, 1.0
  %v460 = vrcp.pop %v459
  %v461 = vmul.f32 1.0, %v460
  %v462 = vtanh.pop %v455
  %v463 = vld [vmem:[#allocation3] sm:$0x3]
  %465 = vrot.lane.b32.xlu0 %v463, 32
  %v466 = vpop.permute.xlu0 %465
  %v468 = vmul.f32 %v461, %v466
  %470 = vrot.lane.b32.xlu0 %v462, 64
  %v471 = vpop.permute.xlu0 %470
  %v473 = vmul.f32 %v461, %v471
  %475 = vrot.lane.b32.xlu0 %v473, 32
  %v476 = vpop.permute.xlu0 %475
  %v478 = vadd.f32 %v468, %v476
  %v479 = vtanh.pop %v478
  %481 = vrot.lane.b32.xlu0 %v479, 64
  %v482 = vpop.permute.xlu0 %481
  %v484 = vmul.f32 %v461, %v482
  %486 = vrot.lane.b32.xlu0 %v478, 96
  %v487 = vpop.permute.xlu0 %486
  %489 = vst.msk [vmem:[#allocation3] sm:$0x3] %vm116, %v487
  %491 = vrot.lane.b32.xlu0 %v484, 32
  %v492 = vpop.permute.xlu0 %491
  %494 = vst.msk [vmem:[#allocation2] sm:$0x3] %vm116, %v492
  %v495 = vpack.c.bf16 %v484, %v484
  %v498 = vunpack.c.l.s4 1966171168
  %v499 = vunpack.c.0.s8 %v498
  %v500 = vlaneseq
  %v501 = vshrl.u32 %v500, 7
  %v502 = vsub.s32 %v499, %v501
  %v503 = vrot.slane %v495, %v502
  %v505 = vunpack.c.l.s4 1966171168
  %v506 = vunpack.c.0.s8 %v505
  %v507 = vlaneseq
  %v508 = vshrl.u32 %v507, 7
  %v509 = vsub.s32 %v506, %v508
  %v510 = vrot.slane %v503, %v509
  %511 = vrot.lane.b32.xlu0 %v510, 32
  %v512 = vpop.permute.xlu0 %511
  %s514 = scalar_lea.vmem %s2, 3
  %515 = vst.msk [vmem:[%s514] sm:$0x1] %vm142, %v512
  %s516 = scalar_lea.vmem %s0, 8
  %v517 = vld [vmem:[%s516] sm:$0x3]
  %v518 = vld [vmem:[#allocation2] sm:$0x3]
  %v519 = vpack.c.bf16 %v518, %v518
  %v520 = vld [vmem:[%s1] sm:$0xf]
  %v521 = vld [vmem:[%s1 + $0x4] sm:$0xf]
  %v522 = vld [vmem:[%s1 + $0x8] sm:$0xf]
  %v523 = vld [vmem:[%s1 + $0xc] sm:$0xf]
  %v528 = vunpack.c.l.b16 %v520
  %v529 = vunpack.c.l.b16 %v521
  %v530 = vunpack.c.l.b16 %v522
  %v531 = vunpack.c.l.b16 %v523
  %v532 = vpack.c.b16 %v529, %v528
  %v533 = vpack.c.b16 %v531, %v530
  %v537 = vsel %vm38, %v519, 0
  %539 = vmatprep.subr.bf16.mxu0 0
  %540 = vmatpush1.bf16.msra.mxu0 %v532
  %541 = vmatprep.subr.bf16.mxu0 0
  %542 = vmatpush1.bf16.msra.mxu0 %v533
  %543 = vmatprep.subr.bf16.mxu0 0
  %544 = vmatpush1.bf16.msra.mxu0 0
  %545 = vmatprep.subr.bf16.mxu0 0
  %546 = vmatpush1.bf16.msra.mxu0 0
  %547 = vmatprep.subr.bf16.mxu0 0
  %548 = vmatpush1.bf16.msra.mxu0 0
  %549 = vmatprep.subr.bf16.mxu0 0
  %550 = vmatpush1.bf16.msra.mxu0 0
  %551 = vmatprep.subr.bf16.mxu0 0
  %552 = vmatpush1.bf16.msra.mxu0 0
  %553 = vmatprep.subr.bf16.mxu0 0
  %554 = vmatpush1.bf16.msra.mxu0 0
  %555 = vmatprep.subr.bf16.mxu0 0
  %556 = vmatpush1.bf16.msra.mxu0 0
  %557 = vmatprep.subr.bf16.mxu0 0
  %558 = vmatpush1.bf16.msra.mxu0 0
  %559 = vmatprep.subr.bf16.mxu0 0
  %560 = vmatpush1.bf16.msra.mxu0 0
  %561 = vmatprep.subr.bf16.mxu0 0
  %562 = vmatpush1.bf16.msra.mxu0 0
  %563 = vmatprep.subr.bf16.mxu0 0
  %564 = vmatpush1.bf16.msra.mxu0 0
  %565 = vmatprep.subr.bf16.mxu0 0
  %566 = vmatpush1.bf16.msra.mxu0 0
  %567 = vmatprep.subr.bf16.mxu0 0
  %568 = vmatpush1.bf16.msra.mxu0 0
  %569 = vmatprep.subr.bf16.mxu0 0
  %570 = vmatpush1.bf16.msra.mxu0 0
  %571 = vmatprep.mubr.bf16.mxu0 0
  %572 = vmatmul.mubr.bf16.gmra.mrb[0].mxu0 %v537
  %v573 = vpop.f32.mrb[0].mxu0
  %v574 = vadd.f32 0.0, %v573
  %v575 = vpop.f32.mrb[0].mxu0
  %v576 = vpop.f32.mrb[0].mxu0
  %v577 = vpop.f32.mrb[0].mxu0
  %578 = vdwg.mxu0
  %v579 = vadd.f32 %v517, %v574
  %v580 = vxor.u32 %v579, 2147483648
  %v581 = vmul.f32 %v580, 1.442695
  %v582 = vpow.pop %v581
  %v583 = vadd.f32 %v582, 1.0
  %v584 = vrcp.pop %v583
  %v585 = vmul.f32 1.0, %v584
  %v586 = vtanh.pop %v579
  %v587 = vld [vmem:[#allocation3] sm:$0x3]
  %589 = vrot.lane.b32.xlu0 %v587, 32
  %v590 = vpop.permute.xlu0 %589
  %v592 = vmul.f32 %v585, %v590
  %594 = vrot.lane.b32.xlu0 %v586, 64
  %v595 = vpop.permute.xlu0 %594
  %v597 = vmul.f32 %v585, %v595
  %599 = vrot.lane.b32.xlu0 %v597, 32
  %v600 = vpop.permute.xlu0 %599
  %v602 = vadd.f32 %v592, %v600
  %v603 = vtanh.pop %v602
  %605 = vrot.lane.b32.xlu0 %v603, 64
  %v606 = vpop.permute.xlu0 %605
  %v608 = vmul.f32 %v585, %v606
  %610 = vrot.lane.b32.xlu0 %v602, 96
  %v611 = vpop.permute.xlu0 %610
  %613 = vst.msk [vmem:[#allocation3] sm:$0x3] %vm116, %v611
  %615 = vrot.lane.b32.xlu0 %v608, 32
  %v616 = vpop.permute.xlu0 %615
  %618 = vst.msk [vmem:[#allocation2] sm:$0x3] %vm116, %v616
  %v619 = vpack.c.bf16 %v608, %v608
  %v622 = vunpack.c.l.s4 1966171168
  %v623 = vunpack.c.0.s8 %v622
  %v624 = vlaneseq
  %v625 = vshrl.u32 %v624, 7
  %v626 = vsub.s32 %v623, %v625
  %v627 = vrot.slane %v619, %v626
  %v629 = vunpack.c.l.s4 1966171168
  %v630 = vunpack.c.0.s8 %v629
  %v631 = vlaneseq
  %v632 = vshrl.u32 %v631, 7
  %v633 = vsub.s32 %v630, %v632
  %v634 = vrot.slane %v627, %v633
  %635 = vrot.lane.b32.xlu0 %v634, 32
  %v636 = vpop.permute.xlu0 %635
  %s638 = scalar_lea.vmem %s2, 4
  %639 = vst.msk [vmem:[%s638] sm:$0x1] %vm142, %v636
  %s640 = scalar_lea.vmem %s0, 10
  %v641 = vld [vmem:[%s640] sm:$0x3]
  %v642 = vld [vmem:[#allocation2] sm:$0x3]
  %v643 = vpack.c.bf16 %v642, %v642
  %v644 = vld [vmem:[%s1] sm:$0xf]
  %v645 = vld [vmem:[%s1 + $0x4] sm:$0xf]
  %v646 = vld [vmem:[%s1 + $0x8] sm:$0xf]
  %v647 = vld [vmem:[%s1 + $0xc] sm:$0xf]
  %v652 = vunpack.c.l.b16 %v644
  %v653 = vunpack.c.l.b16 %v645
  %v654 = vunpack.c.l.b16 %v646
  %v655 = vunpack.c.l.b16 %v647
  %v656 = vpack.c.b16 %v653, %v652
  %v657 = vpack.c.b16 %v655, %v654
  %v661 = vsel %vm38, %v643, 0
  %663 = vmatprep.subr.bf16.mxu0 0
  %664 = vmatpush1.bf16.msra.mxu0 %v656
  %665 = vmatprep.subr.bf16.mxu0 0
  %666 = vmatpush1.bf16.msra.mxu0 %v657
  %667 = vmatprep.subr.bf16.mxu0 0
  %668 = vmatpush1.bf16.msra.mxu0 0
  %669 = vmatprep.subr.bf16.mxu0 0
  %670 = vmatpush1.bf16.msra.mxu0 0
  %671 = vmatprep.subr.bf16.mxu0 0
  %672 = vmatpush1.bf16.msra.mxu0 0
  %673 = vmatprep.subr.bf16.mxu0 0
  %674 = vmatpush1.bf16.msra.mxu0 0
  %675 = vmatprep.subr.bf16.mxu0 0
  %676 = vmatpush1.bf16.msra.mxu0 0
  %677 = vmatprep.subr.bf16.mxu0 0
  %678 = vmatpush1.bf16.msra.mxu0 0
  %679 = vmatprep.subr.bf16.mxu0 0
  %680 = vmatpush1.bf16.msra.mxu0 0
  %681 = vmatprep.subr.bf16.mxu0 0
  %682 = vmatpush1.bf16.msra.mxu0 0
  %683 = vmatprep.subr.bf16.mxu0 0
  %684 = vmatpush1.bf16.msra.mxu0 0
  %685 = vmatprep.subr.bf16.mxu0 0
  %686 = vmatpush1.bf16.msra.mxu0 0
  %687 = vmatprep.subr.bf16.mxu0 0
  %688 = vmatpush1.bf16.msra.mxu0 0
  %689 = vmatprep.subr.bf16.mxu0 0
  %690 = vmatpush1.bf16.msra.mxu0 0
  %691 = vmatprep.subr.bf16.mxu0 0
  %692 = vmatpush1.bf16.msra.mxu0 0
  %693 = vmatprep.subr.bf16.mxu0 0
  %694 = vmatpush1.bf16.msra.mxu0 0
  %695 = vmatprep.mubr.bf16.mxu0 0
  %696 = vmatmul.mubr.bf16.gmra.mrb[0].mxu0 %v661
  %v697 = vpop.f32.mrb[0].mxu0
  %v698 = vadd.f32 0.0, %v697
  %v699 = vpop.f32.mrb[0].mxu0
  %v700 = vpop.f32.mrb[0].mxu0
  %v701 = vpop.f32.mrb[0].mxu0
  %702 = vdwg.mxu0
  %v703 = vadd.f32 %v641, %v698
  %v704 = vxor.u32 %v703, 2147483648
  %v705 = vmul.f32 %v704, 1.442695
  %v706 = vpow.pop %v705
  %v707 = vadd.f32 %v706, 1.0
  %v708 = vrcp.pop %v707
  %v709 = vmul.f32 1.0, %v708
  %v710 = vtanh.pop %v703
  %v711 = vld [vmem:[#allocation3] sm:$0x3]
  %713 = vrot.lane.b32.xlu0 %v711, 32
  %v714 = vpop.permute.xlu0 %713
  %v716 = vmul.f32 %v709, %v714
  %718 = vrot.lane.b32.xlu0 %v710, 64
  %v719 = vpop.permute.xlu0 %718
  %v721 = vmul.f32 %v709, %v719
  %723 = vrot.lane.b32.xlu0 %v721, 32
  %v724 = vpop.permute.xlu0 %723
  %v726 = vadd.f32 %v716, %v724
  %v727 = vtanh.pop %v726
  %729 = vrot.lane.b32.xlu0 %v727, 64
  %v730 = vpop.permute.xlu0 %729
  %v732 = vmul.f32 %v709, %v730
  %734 = vrot.lane.b32.xlu0 %v726, 96
  %v735 = vpop.permute.xlu0 %734
  %737 = vst.msk [vmem:[#allocation3] sm:$0x3] %vm116, %v735
  %739 = vrot.lane.b32.xlu0 %v732, 32
  %v740 = vpop.permute.xlu0 %739
  %742 = vst.msk [vmem:[#allocation2] sm:$0x3] %vm116, %v740
  %v743 = vpack.c.bf16 %v732, %v732
  %v746 = vunpack.c.l.s4 1966171168
  %v747 = vunpack.c.0.s8 %v746
  %v748 = vlaneseq
  %v749 = vshrl.u32 %v748, 7
  %v750 = vsub.s32 %v747, %v749
  %v751 = vrot.slane %v743, %v750
  %v753 = vunpack.c.l.s4 1966171168
  %v754 = vunpack.c.0.s8 %v753
  %v755 = vlaneseq
  %v756 = vshrl.u32 %v755, 7
  %v757 = vsub.s32 %v754, %v756
  %v758 = vrot.slane %v751, %v757
  %759 = vrot.lane.b32.xlu0 %v758, 32
  %v760 = vpop.permute.xlu0 %759
  %s762 = scalar_lea.vmem %s2, 5
  %763 = vst.msk [vmem:[%s762] sm:$0x1] %vm142, %v760
  %s764 = scalar_lea.vmem %s0, 12
  %v765 = vld [vmem:[%s764] sm:$0x3]
  %v766 = vld [vmem:[#allocation2] sm:$0x3]
  %v767 = vpack.c.bf16 %v766, %v766
  %v768 = vld [vmem:[%s1] sm:$0xf]
  %v769 = vld [vmem:[%s1 + $0x4] sm:$0xf]
  %v770 = vld [vmem:[%s1 + $0x8] sm:$0xf]
  %v771 = vld [vmem:[%s1 + $0xc] sm:$0xf]
  %v776 = vunpack.c.l.b16 %v768
  %v777 = vunpack.c.l.b16 %v769
  %v778 = vunpack.c.l.b16 %v770
  %v779 = vunpack.c.l.b16 %v771
  %v780 = vpack.c.b16 %v777, %v776
  %v781 = vpack.c.b16 %v779, %v778
  %v785 = vsel %vm38, %v767, 0
  %787 = vmatprep.subr.bf16.mxu0 0
  %788 = vmatpush1.bf16.msra.mxu0 %v780
  %789 = vmatprep.subr.bf16.mxu0 0
  %790 = vmatpush1.bf16.msra.mxu0 %v781
  %791 = vmatprep.subr.bf16.mxu0 0
  %792 = vmatpush1.bf16.msra.mxu0 0
  %793 = vmatprep.subr.bf16.mxu0 0
  %794 = vmatpush1.bf16.msra.mxu0 0
  %795 = vmatprep.subr.bf16.mxu0 0
  %796 = vmatpush1.bf16.msra.mxu0 0
  %797 = vmatprep.subr.bf16.mxu0 0
  %798 = vmatpush1.bf16.msra.mxu0 0
  %799 = vmatprep.subr.bf16.mxu0 0
  %800 = vmatpush1.bf16.msra.mxu0 0
  %801 = vmatprep.subr.bf16.mxu0 0
  %802 = vmatpush1.bf16.msra.mxu0 0
  %803 = vmatprep.subr.bf16.mxu0 0
  %804 = vmatpush1.bf16.msra.mxu0 0
  %805 = vmatprep.subr.bf16.mxu0 0
  %806 = vmatpush1.bf16.msra.mxu0 0
  %807 = vmatprep.subr.bf16.mxu0 0
  %808 = vmatpush1.bf16.msra.mxu0 0
  %809 = vmatprep.subr.bf16.mxu0 0
  %810 = vmatpush1.bf16.msra.mxu0 0
  %811 = vmatprep.subr.bf16.mxu0 0
  %812 = vmatpush1.bf16.msra.mxu0 0
  %813 = vmatprep.subr.bf16.mxu0 0
  %814 = vmatpush1.bf16.msra.mxu0 0
  %815 = vmatprep.subr.bf16.mxu0 0
  %816 = vmatpush1.bf16.msra.mxu0 0
  %817 = vmatprep.subr.bf16.mxu0 0
  %818 = vmatpush1.bf16.msra.mxu0 0
  %819 = vmatprep.mubr.bf16.mxu0 0
  %820 = vmatmul.mubr.bf16.gmra.mrb[0].mxu0 %v785
  %v821 = vpop.f32.mrb[0].mxu0
  %v822 = vadd.f32 0.0, %v821
  %v823 = vpop.f32.mrb[0].mxu0
  %v824 = vpop.f32.mrb[0].mxu0
  %v825 = vpop.f32.mrb[0].mxu0
  %826 = vdwg.mxu0
  %v827 = vadd.f32 %v765, %v822
  %v828 = vxor.u32 %v827, 2147483648
  %v829 = vmul.f32 %v828, 1.442695
  %v830 = vpow.pop %v829
  %v831 = vadd.f32 %v830, 1.0
  %v832 = vrcp.pop %v831
  %v833 = vmul.f32 1.0, %v832
  %v834 = vtanh.pop %v827
  %v835 = vld [vmem:[#allocation3] sm:$0x3]
  %837 = vrot.lane.b32.xlu0 %v835, 32
  %v838 = vpop.permute.xlu0 %837
  %v840 = vmul.f32 %v833, %v838
  %842 = vrot.lane.b32.xlu0 %v834, 64
  %v843 = vpop.permute.xlu0 %842
  %v845 = vmul.f32 %v833, %v843
  %847 = vrot.lane.b32.xlu0 %v845, 32
  %v848 = vpop.permute.xlu0 %847
  %v850 = vadd.f32 %v840, %v848
  %v851 = vtanh.pop %v850
  %853 = vrot.lane.b32.xlu0 %v851, 64
  %v854 = vpop.permute.xlu0 %853
  %v856 = vmul.f32 %v833, %v854
  %858 = vrot.lane.b32.xlu0 %v850, 96
  %v859 = vpop.permute.xlu0 %858
  %861 = vst.msk [vmem:[#allocation3] sm:$0x3] %vm116, %v859
  %863 = vrot.lane.b32.xlu0 %v856, 32
  %v864 = vpop.permute.xlu0 %863
  %866 = vst.msk [vmem:[#allocation2] sm:$0x3] %vm116, %v864
  %v867 = vpack.c.bf16 %v856, %v856
  %v870 = vunpack.c.l.s4 1966171168
  %v871 = vunpack.c.0.s8 %v870
  %v872 = vlaneseq
  %v873 = vshrl.u32 %v872, 7
  %v874 = vsub.s32 %v871, %v873
  %v875 = vrot.slane %v867, %v874
  %v877 = vunpack.c.l.s4 1966171168
  %v878 = vunpack.c.0.s8 %v877
  %v879 = vlaneseq
  %v880 = vshrl.u32 %v879, 7
  %v881 = vsub.s32 %v878, %v880
  %v882 = vrot.slane %v875, %v881
  %883 = vrot.lane.b32.xlu0 %v882, 32
  %v884 = vpop.permute.xlu0 %883
  %s886 = scalar_lea.vmem %s2, 6
  %887 = vst.msk [vmem:[%s886] sm:$0x1] %vm142, %v884
  // Predicated region
  $region14: #{rnnt_forward.14} parent=0 // pred_check
    _
  $region15: #{rnnt_forward.14} parent=0 // pred_check_branch
    %889 = sbr.rel (0) target = $region17
  $region16: #{rnnt_forward.14} parent=0 // pred_region
    _
  $region17: #{rnnt_forward.14} parent=0 // pred_fallthru
    _
  // Predicated region
  $region18: #{rnnt_forward.14} parent=0 // pred_check
    _
  $region19: #{rnnt_forward.14} parent=0 // pred_check_branch
    %891 = sbr.rel (0) target = $region21
  $region20: #{rnnt_forward.14} parent=0 // pred_region
    _
  $region21: #{rnnt_forward.14} parent=0 // pred_fallthru
    _

// kernel: rnnt_forward.11
$region0: #{rnnt_forward.11}
  #allocation0 [shape = 'u32[]', space=smem, size = 0x4, offset = 0x4, fixed_abs, tag = 'smem constant byte address 0x4 - core index']
  #allocation1 [shape = 'u32[144,128]{1,0:T(1,128)}', space=vmem, size = 0x12000, scoped, tag = 'internal scratch']
  %s0 = inlined_call_operand.vmem [shape: bf16[16,32], index: 0, kind: input, shape index: {}]
  %s1 = inlined_call_operand.vmem [shape: bf16[32,128], index: 1, kind: input, shape index: {}]
  %s2 = inlined_call_operand.vmem [shape: f32[1,128], index: 2, kind: input, shape index: {}]
  %s3 = inlined_call_operand.vmem [shape: f32[16,128], index: 3, kind: output, shape index: {}]
  %s4 = sld [smem:[#allocation0]]
  $region22: #{rnnt_forward.11} parent=0
    _
  %s6 = ssub.s32 1, %s4
  %s7 = scalar_select 0, %s6, %s4
  // Predicated region
  $region2: #{rnnt_forward.11} parent=0 // pred_check
    _
  $region3: #{rnnt_forward.11} parent=0 // pred_check_branch
    %9 = sbr.rel (0) target = $region5
  $region4: #{rnnt_forward.11} parent=0 // pred_region
    _
  $region5: #{rnnt_forward.11} parent=0 // pred_fallthru
    _
  // Predicated region
  $region6: #{rnnt_forward.11} parent=0 // pred_check
    _
  $region7: #{rnnt_forward.11} parent=0 // pred_check_branch
    %11 = sbr.rel (0) target = $region9
  $region8: #{rnnt_forward.11} parent=0 // pred_region
    _
  $region9: #{rnnt_forward.11} parent=0 // pred_fallthru
    _
  // Predicated region
  $region10: #{rnnt_forward.11} parent=0 // pred_check
    _
  $region11: #{rnnt_forward.11} parent=0 // pred_check_branch
    %13 = sbr.rel (0) target = $region13
  $region12: #{rnnt_forward.11} parent=0 // pred_region
    _
  $region13: #{rnnt_forward.11} parent=0 // pred_fallthru
    _
  %v15 = vld [vmem:[%s0] sm:$0xf]
  %v16 = vld [vmem:[%s0 + $0x4] sm:$0xf]
  %v17 = vld [vmem:[%s1] sm:$0xf]
  %v18 = vld [vmem:[%s1 + $0x4] sm:$0xf]
  %v19 = vld [vmem:[%s1 + $0x8] sm:$0xf]
  %v20 = vld [vmem:[%s1 + $0xc] sm:$0xf]
  %v21 = vld [vmem:[%s2] sm:$0x1]
  %v23 = vlaneseq
  %v24 = vshrl.u32 %v23, 7
  %v25 = vsub.s32 0, %v24
  %v26 = vrot.slane %v21, %v25
  %v30 = vunpack.c.l.b16 %v15
  %v31 = vunpack.c.l.b16 %v16
  %v32 = vpack.c.b16 %v31, %v30
  %v37 = vunpack.c.l.b16 %v17
  %v38 = vunpack.c.l.b16 %v18
  %v39 = vunpack.c.l.b16 %v19
  %v40 = vunpack.c.l.b16 %v20
  %v41 = vpack.c.b16 %v38, %v37
  %v42 = vpack.c.b16 %v40, %v39
  %vm45 = vcmask 261120
  %v47 = vsel %vm45, %v32, 0
  %49 = vmatprep.subr.bf16.mxu0 0
  %50 = vmatpush1.bf16.msra.mxu0 %v41
  %51 = vmatprep.subr.bf16.mxu0 0
  %52 = vmatpush1.bf16.msra.mxu0 %v42
  %53 = vmatprep.subr.bf16.mxu0 0
  %54 = vmatpush1.bf16.msra.mxu0 0
  %55 = vmatprep.subr.bf16.mxu0 0
  %56 = vmatpush1.bf16.msra.mxu0 0
  %57 = vmatprep.subr.bf16.mxu0 0
  %58 = vmatpush1.bf16.msra.mxu0 0
  %59 = vmatprep.subr.bf16.mxu0 0
  %60 = vmatpush1.bf16.msra.mxu0 0
  %61 = vmatprep.subr.bf16.mxu0 0
  %62 = vmatpush1.bf16.msra.mxu0 0
  %63 = vmatprep.subr.bf16.mxu0 0
  %64 = vmatpush1.bf16.msra.mxu0 0
  %65 = vmatprep.subr.bf16.mxu0 0
  %66 = vmatpush1.bf16.msra.mxu0 0
  %67 = vmatprep.subr.bf16.mxu0 0
  %68 = vmatpush1.bf16.msra.mxu0 0
  %69 = vmatprep.subr.bf16.mxu0 0
  %70 = vmatpush1.bf16.msra.mxu0 0
  %71 = vmatprep.subr.bf16.mxu0 0
  %72 = vmatpush1.bf16.msra.mxu0 0
  %73 = vmatprep.subr.bf16.mxu0 0
  %74 = vmatpush1.bf16.msra.mxu0 0
  %75 = vmatprep.subr.bf16.mxu0 0
  %76 = vmatpush1.bf16.msra.mxu0 0
  %77 = vmatprep.subr.bf16.mxu0 0
  %78 = vmatpush1.bf16.msra.mxu0 0
  %79 = vmatprep.subr.bf16.mxu0 0
  %80 = vmatpush1.bf16.msra.mxu0 0
  %81 = vmatprep.mubr.bf16.mxu0 0
  %82 = vmatmul.mubr.bf16.gmra.mrb[0].mxu0 %v47
  %v83 = vpop.f32.mrb[0].mxu0
  %v84 = vadd.f32 %v26, %v83
  %v85 = vpop.f32.mrb[0].mxu0
  %v86 = vpop.f32.mrb[0].mxu0
  %v87 = vadd.f32 %v26, %v86
  %v88 = vpop.f32.mrb[0].mxu0
  %89 = vdwg.mxu0
  %90 = vst [vmem:[%s3] sm:$0xff] %v84
  %91 = vst [vmem:[%s3 + $0x8] sm:$0xff] %v87
  // Predicated region
  $region14: #{rnnt_forward.11} parent=0 // pred_check
    _
  $region15: #{rnnt_forward.11} parent=0 // pred_check_branch
    %93 = sbr.rel (0) target = $region17
  $region16: #{rnnt_forward.11} parent=0 // pred_region
    _
  $region17: #{rnnt_forward.11} parent=0 // pred_fallthru
    _
  // Predicated region
  $region18: #{rnnt_forward.11} parent=0 // pred_check
    _
  $region19: #{rnnt_forward.11} parent=0 // pred_check_branch
    %95 = sbr.rel (0) target = $region21
  $region20: #{rnnt_forward.11} parent=0 // pred_region
    _
  $region21: #{rnnt_forward.11} parent=0 // pred_fallthru
    _

// kernel: rnnt_forward.15
$region0: #{rnnt_forward.15}
  #allocation0 [shape = 'u32[]', space=smem, size = 0x4, offset = 0x4, fixed_abs, tag = 'smem constant byte address 0x4 - core index']
  #allocation1 [shape = 'u32[144,128]{1,0:T(1,128)}', space=vmem, size = 0x12000, scoped, tag = 'internal scratch']
  %s0 = inlined_call_operand.vmem [shape: bf16[16,32], index: 0, kind: input, shape index: {}]
  %s1 = inlined_call_operand.vmem [shape: bf16[32,32], index: 1, kind: input, shape index: {}]
  %s2 = inlined_call_operand.vmem [shape: f32[1,32], index: 2, kind: input, shape index: {}]
  %s3 = inlined_call_operand.vmem [shape: f32[16,32], index: 3, kind: output, shape index: {}]
  %s4 = sld [smem:[#allocation0]]
  $region22: #{rnnt_forward.15} parent=0
    _
  %s6 = ssub.s32 1, %s4
  %s7 = scalar_select 0, %s6, %s4
  // Predicated region
  $region2: #{rnnt_forward.15} parent=0 // pred_check
    _
  $region3: #{rnnt_forward.15} parent=0 // pred_check_branch
    %9 = sbr.rel (0) target = $region5
  $region4: #{rnnt_forward.15} parent=0 // pred_region
    _
  $region5: #{rnnt_forward.15} parent=0 // pred_fallthru
    _
  // Predicated region
  $region6: #{rnnt_forward.15} parent=0 // pred_check
    _
  $region7: #{rnnt_forward.15} parent=0 // pred_check_branch
    %11 = sbr.rel (0) target = $region9
  $region8: #{rnnt_forward.15} parent=0 // pred_region
    _
  $region9: #{rnnt_forward.15} parent=0 // pred_fallthru
    _
  // Predicated region
  $region10: #{rnnt_forward.15} parent=0 // pred_check
    _
  $region11: #{rnnt_forward.15} parent=0 // pred_check_branch
    %13 = sbr.rel (0) target = $region13
  $region12: #{rnnt_forward.15} parent=0 // pred_region
    _
  $region13: #{rnnt_forward.15} parent=0 // pred_fallthru
    _
  %v15 = vld [vmem:[%s0] sm:$0xf]
  %v16 = vld [vmem:[%s0 + $0x4] sm:$0xf]
  %v17 = vld [vmem:[%s1] sm:$0xf]
  %v18 = vld [vmem:[%s1 + $0x4] sm:$0xf]
  %v19 = vld [vmem:[%s1 + $0x8] sm:$0xf]
  %v20 = vld [vmem:[%s1 + $0xc] sm:$0xf]
  %v21 = vld [vmem:[%s2] sm:$0x1]
  %v23 = vlaneseq
  %v24 = vshrl.u32 %v23, 7
  %v25 = vsub.s32 0, %v24
  %v26 = vrot.slane %v21, %v25
  %v30 = vunpack.c.l.b16 %v15
  %v31 = vunpack.c.l.b16 %v16
  %v32 = vpack.c.b16 %v31, %v30
  %v37 = vunpack.c.l.b16 %v17
  %v38 = vunpack.c.l.b16 %v18
  %v39 = vunpack.c.l.b16 %v19
  %v40 = vunpack.c.l.b16 %v20
  %v41 = vpack.c.b16 %v38, %v37
  %v42 = vpack.c.b16 %v40, %v39
  %vm45 = vcmask 261120
  %v47 = vsel %vm45, %v32, 0
  %49 = vmatprep.subr.bf16.mxu0 0
  %50 = vmatpush1.bf16.msra.mxu0 %v41
  %51 = vmatprep.subr.bf16.mxu0 0
  %52 = vmatpush1.bf16.msra.mxu0 %v42
  %53 = vmatprep.subr.bf16.mxu0 0
  %54 = vmatpush1.bf16.msra.mxu0 0
  %55 = vmatprep.subr.bf16.mxu0 0
  %56 = vmatpush1.bf16.msra.mxu0 0
  %57 = vmatprep.subr.bf16.mxu0 0
  %58 = vmatpush1.bf16.msra.mxu0 0
  %59 = vmatprep.subr.bf16.mxu0 0
  %60 = vmatpush1.bf16.msra.mxu0 0
  %61 = vmatprep.subr.bf16.mxu0 0
  %62 = vmatpush1.bf16.msra.mxu0 0
  %63 = vmatprep.subr.bf16.mxu0 0
  %64 = vmatpush1.bf16.msra.mxu0 0
  %65 = vmatprep.subr.bf16.mxu0 0
  %66 = vmatpush1.bf16.msra.mxu0 0
  %67 = vmatprep.subr.bf16.mxu0 0
  %68 = vmatpush1.bf16.msra.mxu0 0
  %69 = vmatprep.subr.bf16.mxu0 0
  %70 = vmatpush1.bf16.msra.mxu0 0
  %71 = vmatprep.subr.bf16.mxu0 0
  %72 = vmatpush1.bf16.msra.mxu0 0
  %73 = vmatprep.subr.bf16.mxu0 0
  %74 = vmatpush1.bf16.msra.mxu0 0
  %75 = vmatprep.subr.bf16.mxu0 0
  %76 = vmatpush1.bf16.msra.mxu0 0
  %77 = vmatprep.subr.bf16.mxu0 0
  %78 = vmatpush1.bf16.msra.mxu0 0
  %79 = vmatprep.subr.bf16.mxu0 0
  %80 = vmatpush1.bf16.msra.mxu0 0
  %81 = vmatprep.mubr.bf16.mxu0 0
  %82 = vmatmul.mubr.bf16.gmra.mrb[0].mxu0 %v47
  %v83 = vpop.f32.mrb[0].mxu0
  %v84 = vadd.f32 %v26, %v83
  %v85 = vpop.f32.mrb[0].mxu0
  %v86 = vpop.f32.mrb[0].mxu0
  %v87 = vadd.f32 %v26, %v86
  %v88 = vpop.f32.mrb[0].mxu0
  %89 = vdwg.mxu0
  %90 = vst.msk [vmem:[%s3] sm:$0xff] %vm45, %v84
  %91 = vst.msk [vmem:[%s3 + $0x8] sm:$0xff] %vm45, %v87
  // Predicated region
  $region14: #{rnnt_forward.15} parent=0 // pred_check
    _
  $region15: #{rnnt_forward.15} parent=0 // pred_check_branch
    %93 = sbr.rel (0) target = $region17
  $region16: #{rnnt_forward.15} parent=0 // pred_region
    _
  $region17: #{rnnt_forward.15} parent=0 // pred_fallthru
    _
  // Predicated region
  $region18: #{rnnt_forward.15} parent=0 // pred_check
    _
  $region19: #{rnnt_forward.15} parent=0 // pred_check_branch
    %95 = sbr.rel (0) target = $region21
  $region20: #{rnnt_forward.15} parent=0 // pred_region
    _
  $region21: #{rnnt_forward.15} parent=0 // pred_fallthru
    _

// kernel: rnnt_forward.17
$region0: #{rnnt_forward.17}
  #allocation0 [shape = 'u32[]', space=smem, size = 0x4, offset = 0x4, fixed_abs, tag = 'smem constant byte address 0x4 - core index']
  #allocation1 [shape = 'u32[144,128]{1,0:T(1,128)}', space=vmem, size = 0x12000, scoped, tag = 'internal scratch']
  %s0 = inlined_call_operand.vmem [shape: f32[2,8,32], index: 0, kind: input, shape index: {}]
  %s1 = inlined_call_operand.vmem [shape: f32[2,7,32], index: 1, kind: input, shape index: {}]
  %s2 = inlined_call_operand.vmem [shape: bf16[32,16], index: 2, kind: input, shape index: {}]
  %s3 = inlined_call_operand.vmem [shape: f32[1,16], index: 3, kind: input, shape index: {}]
  %s4 = inlined_call_operand.vmem [shape: f32[2,8,7,16], index: 4, kind: output, shape index: {}]
  %s5 = sld [smem:[#allocation0]]
  $region49: #{rnnt_forward.17} parent=0
    _
  %s7 = ssub.s32 1, %s5
  %s8 = scalar_select 0, %s7, %s5
  loop: start=0, step=1, limit=4
  $region2: #{rnnt_forward.17} parent=0 // loop_pre_header
    _
  $region3: #{rnnt_forward.17} parent=0 // loop_header
    %s10 = sphi 0, %s14
    %p11 = scmp.ge.s32.totalorder %s10, 4
    %s17 = sphi 0, %s36
    %s18 = sphi 0, %s32
    %s19 = sphi 0, %s28
    %s20 = sphi 0, %s17
    %s21 = sphi 0, %s18
    %s22 = sphi 0, %s19
    %s23 = sphi 0, %s20
    %s24 = sphi 0, %s21
    %s25 = sphi 0, %s22
    %s41 = sphi 0, %s43
    %s44 = sphi 0, %s41
    %s45 = sphi 0, %s44
    %s61 = sphi 0, %s45
    %s69 = sphi 0, %s71
    %s72 = sphi 0, %s69
    %s73 = sphi 0, %s72
    %s89 = sphi 0, %s73
    %s93 = sphi 0, %s93
    %s95 = sphi 0, %s93
    %s96 = sphi 0, %s95
    %s110 = sphi 0, %s96
    %s114 = sphi 0, %s114
    %s116 = sphi 0, %s114
    %s117 = sphi 0, %s116
    %s131 = sphi 0, %s117
    %s141 = sphi 0, %s143
    %s144 = sphi 0, %s141
    %s145 = sphi 0, %s144
    %s161 = sphi 0, %s145
  $region4: #{rnnt_forward.17} parent=0 // loop_header_branch
    %13 = sbr.rel (%p11) target = $region8
  $region5: #{rnnt_forward.17} parent=0 // loop_body
    %s15 = ssub.s32 %s10, 1
    %s16 = ssub.s32 %s10, 2
    %s26 = sadd.s32 1, %s19
    %p27 = scmp.ge.s32.totalorder %s26, 1
    %s28 = scalar_select %p27, 0, %s26
    %s29 = sadd.s32 1, %s18
    %s30 = scalar_select %p27, %s29, %s18
    %p31 = scmp.ge.s32.totalorder %s30, 1
    %s32 = scalar_select %p31, 0, %s30
    %s33 = sadd.s32 1, %s17
    %s34 = scalar_select %p31, %s33, %s17
    %p35 = scmp.ge.s32.totalorder %s34, 2
    %s36 = scalar_select %p35, 0, %s34
    %s37 = ssub.s32 %s17, %s36
    %s38 = ssub.s32 %s18, %s32
    %s39 = sor.u32 %s37, %s38
    %p40 = scmp.eq.s32.totalorder %s39, 0
    %s42 = sadd.s32 %s41, 1
    %s43 = scalar_select %p40, %s41, %s42
    %p46 = pneg %p40
    %p47 = scmp.eq.s32.totalorder %s10, 1
    %p48 = por %p46, %p47
    %p49 = scmp.ne.s32.totalorder %s41, %s44
    %p50 = scmp.eq.s32.totalorder %s10, 0
    %p51 = por %p49, %p50
    %p52 = scmp.ne.s32.totalorder %s41, %s44
    %p53 = scmp.eq.s32.totalorder %s15, 1
    %p54 = por %p52, %p53
    %p55 = scmp.ne.s32.totalorder %s44, %s45
    %p56 = scmp.eq.s32.totalorder %s15, 0
    %p57 = por %p55, %p56
    %p58 = scmp.ne.s32.totalorder %s44, %s45
    %p59 = scmp.eq.s32.totalorder %s16, 1
    %p60 = por %p58, %p59
    %p62 = scmp.ne.s32.totalorder %s45, %s61
    %p63 = scmp.eq.s32.totalorder %s16, 0
    %p64 = por %p62, %p63
    %s65 = ssub.s32 %s17, %s36
    %s66 = ssub.s32 %s19, %s28
    %s67 = sor.u32 %s65, %s66
    %p68 = scmp.eq.s32.totalorder %s67, 0
    %s70 = sadd.s32 %s69, 1
    %s71 = scalar_select %p68, %s69, %s70
    %p74 = pneg %p68
    %p75 = scmp.eq.s32.totalorder %s10, 1
    %p76 = por %p74, %p75
    %p77 = scmp.ne.s32.totalorder %s69, %s72
    %p78 = scmp.eq.s32.totalorder %s10, 0
    %p79 = por %p77, %p78
    %p80 = scmp.ne.s32.totalorder %s69, %s72
    %p81 = scmp.eq.s32.totalorder %s15, 1
    %p82 = por %p80, %p81
    %p83 = scmp.ne.s32.totalorder %s72, %s73
    %p84 = scmp.eq.s32.totalorder %s15, 0
    %p85 = por %p83, %p84
    %p86 = scmp.ne.s32.totalorder %s72, %s73
    %p87 = scmp.eq.s32.totalorder %s16, 1
    %p88 = por %p86, %p87
    %p90 = scmp.ne.s32.totalorder %s73, %s89
    %p91 = scmp.eq.s32.totalorder %s16, 0
    %p92 = por %p90, %p91
    %s94 = sadd.s32 %s93, 1
    %p97 = scmp.eq.s32.totalorder %s10, 1
    %p98 = scmp.ne.s32.totalorder %s93, %s95
    %p99 = scmp.eq.s32.totalorder %s10, 0
    %p100 = por %p98, %p99
    %p101 = scmp.ne.s32.totalorder %s93, %s95
    %p102 = scmp.eq.s32.totalorder %s15, 1
    %p103 = por %p101, %p102
    %p104 = scmp.ne.s32.totalorder %s95, %s96
    %p105 = scmp.eq.s32.totalorder %s15, 0
    %p106 = por %p104, %p105
    %p107 = scmp.ne.s32.totalorder %s95, %s96
    %p108 = scmp.eq.s32.totalorder %s16, 1
    %p109 = por %p107, %p108
    %p111 = scmp.ne.s32.totalorder %s96, %s110
    %p112 = scmp.eq.s32.totalorder %s16, 0
    %p113 = por %p111, %p112
    %s115 = sadd.s32 %s114, 1
    %p118 = scmp.eq.s32.totalorder %s10, 1
    %p119 = scmp.ne.s32.totalorder %s114, %s116
    %p120 = scmp.eq.s32.totalorder %s10, 0
    %p121 = por %p119, %p120
    %p122 = scmp.ne.s32.totalorder %s114, %s116
    %p123 = scmp.eq.s32.totalorder %s15, 1
    %p124 = por %p122, %p123
    %p125 = scmp.ne.s32.totalorder %s116, %s117
    %p126 = scmp.eq.s32.totalorder %s15, 0
    %p127 = por %p125, %p126
    %p128 = scmp.ne.s32.totalorder %s116, %s117
    %p129 = scmp.eq.s32.totalorder %s16, 1
    %p130 = por %p128, %p129
    %p132 = scmp.ne.s32.totalorder %s117, %s131
    %p133 = scmp.eq.s32.totalorder %s16, 0
    %p134 = por %p132, %p133
    %s135 = ssub.s32 %s17, %s36
    %s136 = ssub.s32 %s18, %s32
    %s137 = sor.u32 %s135, %s136
    %s138 = ssub.s32 %s19, %s28
    %s139 = sor.u32 %s137, %s138
    %p140 = scmp.eq.s32.totalorder %s139, 0
    %s142 = sadd.s32 %s141, 1
    %s143 = scalar_select %p140, %s141, %s142
    %p146 = pneg %p140
    %p147 = scmp.eq.s32.totalorder %s10, 1
    %p148 = por %p146, %p147
    %p149 = scmp.ne.s32.totalorder %s141, %s144
    %p150 = scmp.eq.s32.totalorder %s10, 0
    %p151 = por %p149, %p150
    %p152 = scmp.ne.s32.totalorder %s141, %s144
    %p153 = scmp.eq.s32.totalorder %s15, 1
    %p154 = por %p152, %p153
    %p155 = scmp.ne.s32.totalorder %s144, %s145
    %p156 = scmp.eq.s32.totalorder %s15, 0
    %p157 = por %p155, %p156
    %p158 = scmp.ne.s32.totalorder %s144, %s145
    %p159 = scmp.eq.s32.totalorder %s16, 1
    %p160 = por %p158, %p159
    %p162 = scmp.ne.s32.totalorder %s145, %s161
    %p163 = scmp.eq.s32.totalorder %s16, 0
    %p164 = por %p162, %p163
    %p165 = scmp.le.s32.totalorder 1, %s10
    %p166 = scmp.lt.s32.totalorder %s10, 3
    %p167 = pnand %p165, %p166
    %p168 = pneg %p167
    // Predicated region
    $region9: #{rnnt_forward.17} parent=5 // pred_check
      _
    $region10: #{rnnt_forward.17} parent=5 // pred_check_branch
      %170 = sbr.rel (%p167) target = $region12
    $region11: #{rnnt_forward.17} parent=5 // pred_region
      %s171 = ssub.s32 %s10, 1
      // Predicated region
      $region13: #{rnnt_forward.17} parent=11 // pred_check
        %p172 = pneg %p106
      $region14: #{rnnt_forward.17} parent=11 // pred_check_branch
        %174 = sbr.rel (%p172) target = $region16
      $region15: #{rnnt_forward.17} parent=11 // pred_region
        _
      $region16: #{rnnt_forward.17} parent=11 // pred_fallthru
        _
      // Predicated region
      $region17: #{rnnt_forward.17} parent=11 // pred_check
        %p175 = pneg %p127
      $region18: #{rnnt_forward.17} parent=11 // pred_check_branch
        %177 = sbr.rel (%p175) target = $region20
      $region19: #{rnnt_forward.17} parent=11 // pred_region
        _
      $region20: #{rnnt_forward.17} parent=11 // pred_fallthru
        _
    $region12: #{rnnt_forward.17} parent=5 // pred_fallthru
      _
    %p178 = scmp.lt.s32.totalorder %s10, 2
    // Predicated region
    $region21: #{rnnt_forward.17} parent=5 // pred_check
      %p179 = pneg %p178
    $region22: #{rnnt_forward.17} parent=5 // pred_check_branch
      %181 = sbr.rel (%p179) target = $region24
    $region23: #{rnnt_forward.17} parent=5 // pred_region
      // Predicated region
      $region25: #{rnnt_forward.17} parent=23 // pred_check
        %p182 = pneg %p51
      $region26: #{rnnt_forward.17} parent=23 // pred_check_branch
        %184 = sbr.rel (%p182) target = $region28
      $region27: #{rnnt_forward.17} parent=23 // pred_region
        %p185 = scmp.lt.s32.totalorder %s17, 1
        %s186 = scalar_select %p185, %s17, 1
        %p187 = scmp.lt.s32.totalorder %s18, 0
        %s188 = scalar_select %p187, %s18, 0
        %s189 = sadd.s32 %s188, %s186
        %s190 = smul.addr %s189, 8
        %s191 = scalar_lea.vmem %s0, %s190
      $region28: #{rnnt_forward.17} parent=23 // pred_fallthru
        _
      // Predicated region
      $region29: #{rnnt_forward.17} parent=23 // pred_check
        %p192 = pneg %p79
      $region30: #{rnnt_forward.17} parent=23 // pred_check_branch
        %194 = sbr.rel (%p192) target = $region32
      $region31: #{rnnt_forward.17} parent=23 // pred_region
        %p195 = scmp.lt.s32.totalorder %s17, 1
        %s196 = scalar_select %p195, %s17, 1
        %p197 = scmp.lt.s32.totalorder %s19, 0
        %s198 = scalar_select %p197, %s19, 0
        %s199 = sadd.s32 %s198, %s196
        %s200 = smul.addr %s199, 8
        %s201 = scalar_lea.vmem %s1, %s200
      $region32: #{rnnt_forward.17} parent=23 // pred_fallthru
        _
    $region24: #{rnnt_forward.17} parent=5 // pred_fallthru
      _
    %p202 = scmp.le.s32.totalorder 1, %s10
    %p203 = scmp.lt.s32.totalorder %s10, 3
    %p204 = pnand %p202, %p203
    %p205 = pneg %p204
    // Predicated region
    $region33: #{rnnt_forward.17} parent=5 // pred_check
      _
    $region34: #{rnnt_forward.17} parent=5 // pred_check_branch
      %207 = sbr.rel (%p204) target = $region36
    $region35: #{rnnt_forward.17} parent=5 // pred_region
      %s208 = ssub.s32 %s10, 1
      %p209 = scmp.lt.s32.totalorder %s20, 1
      %s210 = scalar_select %p209, %s20, 1
      %p211 = scmp.lt.s32.totalorder %s21, 0
      %s212 = scalar_select %p211, %s21, 0
      %s213 = sadd.s32 %s212, %s210
      %s214 = smul.addr %s213, 8
      %s215 = scalar_lea.vmem %s0, %s214
      %p216 = pneg %p57
      %p217 = pneg %p54
      %p218 = scmp.lt.s32.totalorder %s20, 1
      %s219 = scalar_select %p218, %s20, 1
      %p220 = scmp.lt.s32.totalorder %s22, 0
      %s221 = scalar_select %p220, %s22, 0
      %s222 = sadd.s32 %s221, %s219
      %s223 = smul.addr %s222, 8
      %s224 = scalar_lea.vmem %s1, %s223
      %p225 = pneg %p85
      %p226 = pneg %p82
      %p227 = pneg %p106
      %p228 = pneg %p103
      %p229 = pneg %p127
      %p230 = pneg %p124
      %p231 = pneg %p157
      %p232 = pneg %p154
      %s233 = smul.u32 8, %s21
      %p234 = scmp.lt.s32.totalorder %s20, 1
      %s235 = scalar_select %p234, %s20, 1
      %p236 = scmp.lt.s32.totalorder %s233, 7
      %s237 = scalar_select %p236, %s233, 7
      %p238 = scmp.lt.s32.totalorder %s22, 0
      %s239 = scalar_select %p238, %s22, 0
      %s240 = sadd.s32 %s239, %s237
      %s241 = smul.addr %s235, 8
      %s242 = sadd.s32 %s240, %s241
      %s243 = smul.addr %s242, 8
      %s244 = scalar_lea.vmem %s4, %s243
      %p245 = scmp.lt.s32.totalorder %s20, 1
      %s246 = scalar_select %p245, %s20, 1
      %p247 = scmp.lt.s32.totalorder %s21, 0
      %s248 = scalar_select %p247, %s21, 0
      %s249 = sadd.s32 %s248, %s246
      %s250 = smul.addr %s249, 8
      %s251 = scalar_lea.vmem %s0, %s250
      %p252 = scmp.lt.s32.totalorder %s20, 1
      %s253 = scalar_select %p252, %s20, 1
      %p254 = scmp.lt.s32.totalorder %s22, 0
      %s255 = scalar_select %p254, %s22, 0
      %s256 = sadd.s32 %s255, %s253
      %s257 = smul.addr %s256, 8
      %s258 = scalar_lea.vmem %s1, %s257
      %s259 = smul.u32 8, %s21
      %p260 = scmp.lt.s32.totalorder %s20, 1
      %s261 = scalar_select %p260, %s20, 1
      %p262 = scmp.lt.s32.totalorder %s259, 7
      %s263 = scalar_select %p262, %s259, 7
      %p264 = scmp.lt.s32.totalorder %s22, 0
      %s265 = scalar_select %p264, %s22, 0
      %s266 = sadd.s32 %s265, %s263
      %s267 = smul.addr %s261, 8
      %s268 = sadd.s32 %s266, %s267
      %s269 = smul.addr %s268, 8
      %s270 = scalar_lea.vmem %s4, %s269
      %s271 = smul.u32 8, %s21
      %v273 = vld [vmem:[%s251] sm:$0xff]
      %v274 = vld [vmem:[%s258] sm:$0x7f]
      %v276 = vcombine.high %v273, %v273
      %v278 = vunpack.c.l.s4 1966171168
      %v279 = vunpack.c.0.s8 %v278
      %v280 = vlaneseq
      %v281 = vshrl.u32 %v280, 7
      %v282 = vsub.s32 %v279, %v281
      %v283 = vrot.slane %v273, %v282
      %v285 = vunpack.c.l.s4 1966171168
      %v286 = vunpack.c.0.s8 %v285
      %v287 = vlaneseq
      %v288 = vshrl.u32 %v287, 7
      %v289 = vsub.s32 %v286, %v288
      %v290 = vrot.slane %v276, %v289
      %v291 = vcombine.high %v283, %v283
      %v292 = vcombine.high %v290, %v290
      %v294 = vunpack.c.l.s4 1966171168
      %v295 = vunpack.c.0.s8 %v294
      %v296 = vlaneseq
      %v297 = vshrl.u32 %v296, 7
      %v298 = vsub.s32 %v295, %v297
      %v299 = vrot.slane %v283, %v298
      %v301 = vunpack.c.l.s4 1966171168
      %v302 = vunpack.c.0.s8 %v301
      %v303 = vlaneseq
      %v304 = vshrl.u32 %v303, 7
      %v305 = vsub.s32 %v302, %v304
      %v306 = vrot.slane %v290, %v305
      %v308 = vunpack.c.l.s4 1966171168
      %v309 = vunpack.c.0.s8 %v308
      %v310 = vlaneseq
      %v311 = vshrl.u32 %v310, 7
      %v312 = vsub.s32 %v309, %v311
      %v313 = vrot.slane %v291, %v312
      %v315 = vunpack.c.l.s4 1966171168
      %v316 = vunpack.c.0.s8 %v315
      %v317 = vlaneseq
      %v318 = vshrl.u32 %v317, 7
      %v319 = vsub.s32 %v316, %v318
      %v320 = vrot.slane %v292, %v319
      %v321 = vcombine.high %v299, %v299
      %v322 = vcombine.high %v306, %v306
      %v323 = vcombine.high %v313, %v313
      %v324 = vcombine.high %v320, %v320
      %v325 = vlaneseq
      %v326 = vshrl.u32 %v325, 7
      %v327 = vsub.s32 0, %v326
      %v328 = vrot.slane %v299, %v327
      %v329 = vlaneseq
      %v330 = vshrl.u32 %v329, 7
      %v331 = vsub.s32 0, %v330
      %v332 = vrot.slane %v313, %v331
      %v333 = vlaneseq
      %v334 = vshrl.u32 %v333, 7
      %v335 = vsub.s32 0, %v334
      %v336 = vrot.slane %v321, %v335
      %v337 = vlaneseq
      %v338 = vshrl.u32 %v337, 7
      %v339 = vsub.s32 0, %v338
      %v340 = vrot.slane %v323, %v339
      %v341 = vlaneseq
      %v342 = vshrl.u32 %v341, 7
      %v343 = vsub.s32 0, %v342
      %v344 = vrot.slane %v306, %v343
      %v345 = vlaneseq
      %v346 = vshrl.u32 %v345, 7
      %v347 = vsub.s32 0, %v346
      %v348 = vrot.slane %v320, %v347
      %v349 = vlaneseq
      %v350 = vshrl.u32 %v349, 7
      %v351 = vsub.s32 0, %v350
      %v352 = vrot.slane %v322, %v351
      %v353 = vlaneseq
      %v354 = vshrl.u32 %v353, 7
      %v355 = vsub.s32 0, %v354
      %v356 = vrot.slane %v324, %v355
      %v365 = vadd.f32 %v328, %v274
      %v366 = vadd.f32 %v332, %v274
      %v367 = vadd.f32 %v336, %v274
      %v368 = vadd.f32 %v340, %v274
      %v369 = vadd.f32 %v344, %v274
      %v370 = vadd.f32 %v348, %v274
      %v371 = vadd.f32 %v352, %v274
      %v372 = vadd.f32 %v356, %v274
      %v373 = vtanh.pop %v365
      %v374 = vtanh.pop %v366
      %v375 = vtanh.pop %v367
      %v376 = vtanh.pop %v368
      %v377 = vtanh.pop %v369
      %v378 = vtanh.pop %v370
      %v379 = vtanh.pop %v371
      %v380 = vtanh.pop %v372
      %v389 = vcombine.high %v373, %v373
      %v391 = vunpack.c.l.s4 1966171168
      %v392 = vunpack.c.0.s8 %v391
      %v393 = vlaneseq
      %v394 = vshrl.u32 %v393, 7
      %v395 = vsub.s32 %v392, %v394
      %v396 = vrot.slane %v373, %v395
      %v398 = vunpack.c.l.s4 1966171168
      %v399 = vunpack.c.0.s8 %v398
      %v400 = vlaneseq
      %v401 = vshrl.u32 %v400, 7
      %v402 = vsub.s32 %v399, %v401
      %v403 = vrot.slane %v389, %v402
      %v404 = vcombine.high %v396, %v396
      %v405 = vcombine.high %v403, %v403
      %v407 = vunpack.c.l.s4 1966171168
      %v408 = vunpack.c.0.s8 %v407
      %v409 = vlaneseq
      %v410 = vshrl.u32 %v409, 7
      %v411 = vsub.s32 %v408, %v410
      %v412 = vrot.slane %v396, %v411
      %v414 = vunpack.c.l.s4 1966171168
      %v415 = vunpack.c.0.s8 %v414
      %v416 = vlaneseq
      %v417 = vshrl.u32 %v416, 7
      %v418 = vsub.s32 %v415, %v417
      %v419 = vrot.slane %v403, %v418
      %v421 = vunpack.c.l.s4 1966171168
      %v422 = vunpack.c.0.s8 %v421
      %v423 = vlaneseq
      %v424 = vshrl.u32 %v423, 7
      %v425 = vsub.s32 %v422, %v424
      %v426 = vrot.slane %v404, %v425
      %v428 = vunpack.c.l.s4 1966171168
      %v429 = vunpack.c.0.s8 %v428
      %v430 = vlaneseq
      %v431 = vshrl.u32 %v430, 7
      %v432 = vsub.s32 %v429, %v431
      %v433 = vrot.slane %v405, %v432
      %v434 = vcombine.high %v412, %v412
      %v435 = vcombine.high %v419, %v419
      %v436 = vcombine.high %v426, %v426
      %v437 = vcombine.high %v374, %v374
      %v439 = vunpack.c.l.s4 1966171168
      %v440 = vunpack.c.0.s8 %v439
      %v441 = vlaneseq
      %v442 = vshrl.u32 %v441, 7
      %v443 = vsub.s32 %v440, %v442
      %v444 = vrot.slane %v374, %v443
      %v446 = vunpack.c.l.s4 1966171168
      %v447 = vunpack.c.0.s8 %v446
      %v448 = vlaneseq
      %v449 = vshrl.u32 %v448, 7
      %v450 = vsub.s32 %v447, %v449
      %v451 = vrot.slane %v437, %v450
      %v452 = vcombine.high %v444, %v444
      %v453 = vcombine.high %v451, %v451
      %v455 = vunpack.c.l.s4 1966171168
      %v456 = vunpack.c.0.s8 %v455
      %v457 = vlaneseq
      %v458 = vshrl.u32 %v457, 7
      %v459 = vsub.s32 %v456, %v458
      %v460 = vrot.slane %v444, %v459
      %v462 = vunpack.c.l.s4 1966171168
      %v463 = vunpack.c.0.s8 %v462
      %v464 = vlaneseq
      %v465 = vshrl.u32 %v464, 7
      %v466 = vsub.s32 %v463, %v465
      %v467 = vrot.slane %v451, %v466
      %v469 = vunpack.c.l.s4 1966171168
      %v470 = vunpack.c.0.s8 %v469
      %v471 = vlaneseq
      %v472 = vshrl.u32 %v471, 7
      %v473 = vsub.s32 %v470, %v472
      %v474 = vrot.slane %v452, %v473
      %v476 = vunpack.c.l.s4 1966171168
      %v477 = vunpack.c.0.s8 %v476
      %v478 = vlaneseq
      %v479 = vshrl.u32 %v478, 7
      %v480 = vsub.s32 %v477, %v479
      %v481 = vrot.slane %v453, %v480
      %v482 = vcombine.high %v460, %v460
      %v483 = vcombine.high %v467, %v467
      %v484 = vcombine.high %v474, %v474
      %v485 = vcombine.high %v375, %v375
      %v487 = vunpack.c.l.s4 1966171168
      %v488 = vunpack.c.0.s8 %v487
      %v489 = vlaneseq
      %v490 = vshrl.u32 %v489, 7
      %v491 = vsub.s32 %v488, %v490
      %v492 = vrot.slane %v375, %v491
      %v494 = vunpack.c.l.s4 1966171168
      %v495 = vunpack.c.0.s8 %v494
      %v496 = vlaneseq
      %v497 = vshrl.u32 %v496, 7
      %v498 = vsub.s32 %v495, %v497
      %v499 = vrot.slane %v485, %v498
      %v500 = vcombine.high %v492, %v492
      %v501 = vcombine.high %v499, %v499
      %v503 = vunpack.c.l.s4 1966171168
      %v504 = vunpack.c.0.s8 %v503
      %v505 = vlaneseq
      %v506 = vshrl.u32 %v505, 7
      %v507 = vsub.s32 %v504, %v506
      %v508 = vrot.slane %v492, %v507
      %v510 = vunpack.c.l.s4 1966171168
      %v511 = vunpack.c.0.s8 %v510
      %v512 = vlaneseq
      %v513 = vshrl.u32 %v512, 7
      %v514 = vsub.s32 %v511, %v513
      %v515 = vrot.slane %v499, %v514
      %v517 = vunpack.c.l.s4 1966171168
      %v518 = vunpack.c.0.s8 %v517
      %v519 = vlaneseq
      %v520 = vshrl.u32 %v519, 7
      %v521 = vsub.s32 %v518, %v520
      %v522 = vrot.slane %v500, %v521
      %v524 = vunpack.c.l.s4 1966171168
      %v525 = vunpack.c.0.s8 %v524
      %v526 = vlaneseq
      %v527 = vshrl.u32 %v526, 7
      %v528 = vsub.s32 %v525, %v527
      %v529 = vrot.slane %v501, %v528
      %v530 = vcombine.high %v508, %v508
      %v531 = vcombine.high %v515, %v515
      %v532 = vcombine.high %v522, %v522
      %v533 = vcombine.high %v376, %v376
      %v535 = vunpack.c.l.s4 1966171168
      %v536 = vunpack.c.0.s8 %v535
      %v537 = vlaneseq
      %v538 = vshrl.u32 %v537, 7
      %v539 = vsub.s32 %v536, %v538
      %v540 = vrot.slane %v376, %v539
      %v542 = vunpack.c.l.s4 1966171168
      %v543 = vunpack.c.0.s8 %v542
      %v544 = vlaneseq
      %v545 = vshrl.u32 %v544, 7
      %v546 = vsub.s32 %v543, %v545
      %v547 = vrot.slane %v533, %v546
      %v548 = vcombine.high %v540, %v540
      %v549 = vcombine.high %v547, %v547
      %v551 = vunpack.c.l.s4 1966171168
      %v552 = vunpack.c.0.s8 %v551
      %v553 = vlaneseq
      %v554 = vshrl.u32 %v553, 7
      %v555 = vsub.s32 %v552, %v554
      %v556 = vrot.slane %v540, %v555
      %v558 = vunpack.c.l.s4 1966171168
      %v559 = vunpack.c.0.s8 %v558
      %v560 = vlaneseq
      %v561 = vshrl.u32 %v560, 7
      %v562 = vsub.s32 %v559, %v561
      %v563 = vrot.slane %v547, %v562
      %v565 = vunpack.c.l.s4 1966171168
      %v566 = vunpack.c.0.s8 %v565
      %v567 = vlaneseq
      %v568 = vshrl.u32 %v567, 7
      %v569 = vsub.s32 %v566, %v568
      %v570 = vrot.slane %v548, %v569
      %v572 = vunpack.c.l.s4 1966171168
      %v573 = vunpack.c.0.s8 %v572
      %v574 = vlaneseq
      %v575 = vshrl.u32 %v574, 7
      %v576 = vsub.s32 %v573, %v575
      %v577 = vrot.slane %v549, %v576
      %v578 = vcombine.high %v556, %v556
      %v579 = vcombine.high %v563, %v563
      %v580 = vcombine.high %v570, %v570
      %v581 = vcombine.high %v377, %v377
      %v583 = vunpack.c.l.s4 1966171168
      %v584 = vunpack.c.0.s8 %v583
      %v585 = vlaneseq
      %v586 = vshrl.u32 %v585, 7
      %v587 = vsub.s32 %v584, %v586
      %v588 = vrot.slane %v377, %v587
      %v590 = vunpack.c.l.s4 1966171168
      %v591 = vunpack.c.0.s8 %v590
      %v592 = vlaneseq
      %v593 = vshrl.u32 %v592, 7
      %v594 = vsub.s32 %v591, %v593
      %v595 = vrot.slane %v581, %v594
      %v596 = vcombine.high %v588, %v588
      %v597 = vcombine.high %v595, %v595
      %v599 = vunpack.c.l.s4 1966171168
      %v600 = vunpack.c.0.s8 %v599
      %v601 = vlaneseq
      %v602 = vshrl.u32 %v601, 7
      %v603 = vsub.s32 %v600, %v602
      %v604 = vrot.slane %v588, %v603
      %v606 = vunpack.c.l.s4 1966171168
      %v607 = vunpack.c.0.s8 %v606
      %v608 = vlaneseq
      %v609 = vshrl.u32 %v608, 7
      %v610 = vsub.s32 %v607, %v609
      %v611 = vrot.slane %v595, %v610
      %v613 = vunpack.c.l.s4 1966171168
      %v614 = vunpack.c.0.s8 %v613
      %v615 = vlaneseq
      %v616 = vshrl.u32 %v615, 7
      %v617 = vsub.s32 %v614, %v616
      %v618 = vrot.slane %v596, %v617
      %v620 = vunpack.c.l.s4 1966171168
      %v621 = vunpack.c.0.s8 %v620
      %v622 = vlaneseq
      %v623 = vshrl.u32 %v622, 7
      %v624 = vsub.s32 %v621, %v623
      %v625 = vrot.slane %v597, %v624
      %v626 = vcombine.high %v604, %v604
      %v627 = vcombine.high %v611, %v611
      %v628 = vcombine.high %v618, %v618
      %v629 = vcombine.high %v378, %v378
      %v631 = vunpack.c.l.s4 1966171168
      %v632 = vunpack.c.0.s8 %v631
      %v633 = vlaneseq
      %v634 = vshrl.u32 %v633, 7
      %v635 = vsub.s32 %v632, %v634
      %v636 = vrot.slane %v378, %v635
      %v638 = vunpack.c.l.s4 1966171168
      %v639 = vunpack.c.0.s8 %v638
      %v640 = vlaneseq
      %v641 = vshrl.u32 %v640, 7
      %v642 = vsub.s32 %v639, %v641
      %v643 = vrot.slane %v629, %v642
      %v644 = vcombine.high %v636, %v636
      %v645 = vcombine.high %v643, %v643
      %v647 = vunpack.c.l.s4 1966171168
      %v648 = vunpack.c.0.s8 %v647
      %v649 = vlaneseq
      %v650 = vshrl.u32 %v649, 7
      %v651 = vsub.s32 %v648, %v650
      %v652 = vrot.slane %v636, %v651
      %v654 = vunpack.c.l.s4 1966171168
      %v655 = vunpack.c.0.s8 %v654
      %v656 = vlaneseq
      %v657 = vshrl.u32 %v656, 7
      %v658 = vsub.s32 %v655, %v657
      %v659 = vrot.slane %v643, %v658
      %v661 = vunpack.c.l.s4 1966171168
      %v662 = vunpack.c.0.s8 %v661
      %v663 = vlaneseq
      %v664 = vshrl.u32 %v663, 7
      %v665 = vsub.s32 %v662, %v664
      %v666 = vrot.slane %v644, %v665
      %v668 = vunpack.c.l.s4 1966171168
      %v669 = vunpack.c.0.s8 %v668
      %v670 = vlaneseq
      %v671 = vshrl.u32 %v670, 7
      %v672 = vsub.s32 %v669, %v671
      %v673 = vrot.slane %v645, %v672
      %v674 = vcombine.high %v652, %v652
      %v675 = vcombine.high %v659, %v659
      %v676 = vcombine.high %v666, %v666
      %v677 = vcombine.high %v379, %v379
      %v679 = vunpack.c.l.s4 1966171168
      %v680 = vunpack.c.0.s8 %v679
      %v681 = vlaneseq
      %v682 = vshrl.u32 %v681, 7
      %v683 = vsub.s32 %v680, %v682
      %v684 = vrot.slane %v379, %v683
      %v686 = vunpack.c.l.s4 1966171168
      %v687 = vunpack.c.0.s8 %v686
      %v688 = vlaneseq
      %v689 = vshrl.u32 %v688, 7
      %v690 = vsub.s32 %v687, %v689
      %v691 = vrot.slane %v677, %v690
      %v692 = vcombine.high %v684, %v684
      %v693 = vcombine.high %v691, %v691
      %v695 = vunpack.c.l.s4 1966171168
      %v696 = vunpack.c.0.s8 %v695
      %v697 = vlaneseq
      %v698 = vshrl.u32 %v697, 7
      %v699 = vsub.s32 %v696, %v698
      %v700 = vrot.slane %v684, %v699
      %v702 = vunpack.c.l.s4 1966171168
      %v703 = vunpack.c.0.s8 %v702
      %v704 = vlaneseq
      %v705 = vshrl.u32 %v704, 7
      %v706 = vsub.s32 %v703, %v705
      %v707 = vrot.slane %v691, %v706
      %v709 = vunpack.c.l.s4 1966171168
      %v710 = vunpack.c.0.s8 %v709
      %v711 = vlaneseq
      %v712 = vshrl.u32 %v711, 7
      %v713 = vsub.s32 %v710, %v712
      %v714 = vrot.slane %v692, %v713
      %v716 = vunpack.c.l.s4 1966171168
      %v717 = vunpack.c.0.s8 %v716
      %v718 = vlaneseq
      %v719 = vshrl.u32 %v718, 7
      %v720 = vsub.s32 %v717, %v719
      %v721 = vrot.slane %v693, %v720
      %v722 = vcombine.high %v700, %v700
      %v723 = vcombine.high %v707, %v707
      %v724 = vcombine.high %v714, %v714
      %v725 = vcombine.high %v380, %v380
      %v727 = vunpack.c.l.s4 1966171168
      %v728 = vunpack.c.0.s8 %v727
      %v729 = vlaneseq
      %v730 = vshrl.u32 %v729, 7
      %v731 = vsub.s32 %v728, %v730
      %v732 = vrot.slane %v380, %v731
      %v734 = vunpack.c.l.s4 1966171168
      %v735 = vunpack.c.0.s8 %v734
      %v736 = vlaneseq
      %v737 = vshrl.u32 %v736, 7
      %v738 = vsub.s32 %v735, %v737
      %v739 = vrot.slane %v725, %v738
      %v740 = vcombine.high %v732, %v732
      %v741 = vcombine.high %v739, %v739
      %v743 = vunpack.c.l.s4 1966171168
      %v744 = vunpack.c.0.s8 %v743
      %v745 = vlaneseq
      %v746 = vshrl.u32 %v745, 7
      %v747 = vsub.s32 %v744, %v746
      %v748 = vrot.slane %v732, %v747
      %v750 = vunpack.c.l.s4 1966171168
      %v751 = vunpack.c.0.s8 %v750
      %v752 = vlaneseq
      %v753 = vshrl.u32 %v752, 7
      %v754 = vsub.s32 %v751, %v753
      %v755 = vrot.slane %v739, %v754
      %v757 = vunpack.c.l.s4 1966171168
      %v758 = vunpack.c.0.s8 %v757
      %v759 = vlaneseq
      %v760 = vshrl.u32 %v759, 7
      %v761 = vsub.s32 %v758, %v760
      %v762 = vrot.slane %v740, %v761
      %v764 = vunpack.c.l.s4 1966171168
      %v765 = vunpack.c.0.s8 %v764
      %v766 = vlaneseq
      %v767 = vshrl.u32 %v766, 7
      %v768 = vsub.s32 %v765, %v767
      %v769 = vrot.slane %v741, %v768
      %v770 = vcombine.high %v748, %v748
      %v771 = vcombine.high %v755, %v755
      %v772 = vcombine.high %v762, %v762
      %v773 = vcombine.low %v412, %v426
      %v774 = vcombine.low %v434, %v436
      %v775 = vcombine.low %v419, %v433
      %v776 = vcombine.low %v435, %v460
      %v778 = vunpack.c.l.s4 1966171168
      %v779 = vunpack.c.0.s8 %v778
      %v780 = vlaneseq
      %v781 = vshrl.u32 %v780, 7
      %v782 = vsub.s32 %v779, %v781
      %v783 = vrot.slane %v773, %v782
      %v785 = vunpack.c.l.s4 1966171168
      %v786 = vunpack.c.0.s8 %v785
      %v787 = vlaneseq
      %v788 = vshrl.u32 %v787, 7
      %v789 = vsub.s32 %v786, %v788
      %v790 = vrot.slane %v774, %v789
      %v792 = vunpack.c.l.s4 1966171168
      %v793 = vunpack.c.0.s8 %v792
      %v794 = vlaneseq
      %v795 = vshrl.u32 %v794, 7
      %v796 = vsub.s32 %v793, %v795
      %v797 = vrot.slane %v775, %v796
      %v799 = vunpack.c.l.s4 1966171168
      %v800 = vunpack.c.0.s8 %v799
      %v801 = vlaneseq
      %v802 = vshrl.u32 %v801, 7
      %v803 = vsub.s32 %v800, %v802
      %v804 = vrot.slane %v776, %v803
      %v805 = vcombine.low %v783, %v790
      %v806 = vcombine.low %v797, %v804
      %v808 = vunpack.c.l.s4 1966171168
      %v809 = vunpack.c.0.s8 %v808
      %v810 = vlaneseq
      %v811 = vshrl.u32 %v810, 7
      %v812 = vsub.s32 %v809, %v811
      %v813 = vrot.slane %v805, %v812
      %v815 = vunpack.c.l.s4 1966171168
      %v816 = vunpack.c.0.s8 %v815
      %v817 = vlaneseq
      %v818 = vshrl.u32 %v817, 7
      %v819 = vsub.s32 %v816, %v818
      %v820 = vrot.slane %v806, %v819
      %v821 = vcombine.low %v813, %v820
      %v822 = vcombine.low %v474, %v482
      %v823 = vcombine.low %v484, %v467
      %v824 = vcombine.low %v481, %v483
      %v825 = vcombine.low %v508, %v522
      %v827 = vunpack.c.l.s4 1966171168
      %v828 = vunpack.c.0.s8 %v827
      %v829 = vlaneseq
      %v830 = vshrl.u32 %v829, 7
      %v831 = vsub.s32 %v828, %v830
      %v832 = vrot.slane %v822, %v831
      %v834 = vunpack.c.l.s4 1966171168
      %v835 = vunpack.c.0.s8 %v834
      %v836 = vlaneseq
      %v837 = vshrl.u32 %v836, 7
      %v838 = vsub.s32 %v835, %v837
      %v839 = vrot.slane %v823, %v838
      %v841 = vunpack.c.l.s4 1966171168
      %v842 = vunpack.c.0.s8 %v841
      %v843 = vlaneseq
      %v844 = vshrl.u32 %v843, 7
      %v845 = vsub.s32 %v842, %v844
      %v846 = vrot.slane %v824, %v845
      %v848 = vunpack.c.l.s4 1966171168
      %v849 = vunpack.c.0.s8 %v848
      %v850 = vlaneseq
      %v851 = vshrl.u32 %v850, 7
      %v852 = vsub.s32 %v849, %v851
      %v853 = vrot.slane %v825, %v852
      %v854 = vcombine.low %v832, %v839
      %v855 = vcombine.low %v846, %v853
      %v857 = vunpack.c.l.s4 1966171168
      %v858 = vunpack.c.0.s8 %v857
      %v859 = vlaneseq
      %v860 = vshrl.u32 %v859, 7
      %v861 = vsub.s32 %v858, %v860
      %v862 = vrot.slane %v854, %v861
      %v864 = vunpack.c.l.s4 1966171168
      %v865 = vunpack.c.0.s8 %v864
      %v866 = vlaneseq
      %v867 = vshrl.u32 %v866, 7
      %v868 = vsub.s32 %v865, %v867
      %v869 = vrot.slane %v855, %v868
      %v870 = vcombine.low %v862, %v869
      %v871 = vcombine.low %v530, %v532
      %v872 = vcombine.low %v515, %v529
      %v873 = vcombine.low %v531, %v556
      %v874 = vcombine.low %v570, %v578
      %v876 = vunpack.c.l.s4 1966171168
      %v877 = vunpack.c.0.s8 %v876
      %v878 = vlaneseq
      %v879 = vshrl.u32 %v878, 7
      %v880 = vsub.s32 %v877, %v879
      %v881 = vrot.slane %v871, %v880
      %v883 = vunpack.c.l.s4 1966171168
      %v884 = vunpack.c.0.s8 %v883
      %v885 = vlaneseq
      %v886 = vshrl.u32 %v885, 7
      %v887 = vsub.s32 %v884, %v886
      %v888 = vrot.slane %v872, %v887
      %v890 = vunpack.c.l.s4 1966171168
      %v891 = vunpack.c.0.s8 %v890
      %v892 = vlaneseq
      %v893 = vshrl.u32 %v892, 7
      %v894 = vsub.s32 %v891, %v893
      %v895 = vrot.slane %v873, %v894
      %v897 = vunpack.c.l.s4 1966171168
      %v898 = vunpack.c.0.s8 %v897
      %v899 = vlaneseq
      %v900 = vshrl.u32 %v899, 7
      %v901 = vsub.s32 %v898, %v900
      %v902 = vrot.slane %v874, %v901
      %v903 = vcombine.low %v881, %v888
      %v904 = vcombine.low %v895, %v902
      %v906 = vunpack.c.l.s4 1966171168
      %v907 = vunpack.c.0.s8 %v906
      %v908 = vlaneseq
      %v909 = vshrl.u32 %v908, 7
      %v910 = vsub.s32 %v907, %v909
      %v911 = vrot.slane %v903, %v910
      %v913 = vunpack.c.l.s4 1966171168
      %v914 = vunpack.c.0.s8 %v913
      %v915 = vlaneseq
      %v916 = vshrl.u32 %v915, 7
      %v917 = vsub.s32 %v914, %v916
      %v918 = vrot.slane %v904, %v917
      %v919 = vcombine.low %v911, %v918
      %v920 = vcombine.low %v580, %v563
      %v921 = vcombine.low %v577, %v579
      %v922 = vcombine.low %v604, %v618
      %v923 = vcombine.low %v626, %v628
      %v925 = vunpack.c.l.s4 1966171168
      %v926 = vunpack.c.0.s8 %v925
      %v927 = vlaneseq
      %v928 = vshrl.u32 %v927, 7
      %v929 = vsub.s32 %v926, %v928
      %v930 = vrot.slane %v920, %v929
      %v932 = vunpack.c.l.s4 1966171168
      %v933 = vunpack.c.0.s8 %v932
      %v934 = vlaneseq
      %v935 = vshrl.u32 %v934, 7
      %v936 = vsub.s32 %v933, %v935
      %v937 = vrot.slane %v921, %v936
      %v939 = vunpack.c.l.s4 1966171168
      %v940 = vunpack.c.0.s8 %v939
      %v941 = vlaneseq
      %v942 = vshrl.u32 %v941, 7
      %v943 = vsub.s32 %v940, %v942
      %v944 = vrot.slane %v922, %v943
      %v946 = vunpack.c.l.s4 1966171168
      %v947 = vunpack.c.0.s8 %v946
      %v948 = vlaneseq
      %v949 = vshrl.u32 %v948, 7
      %v950 = vsub.s32 %v947, %v949
      %v951 = vrot.slane %v923, %v950
      %v952 = vcombine.low %v930, %v937
      %v953 = vcombine.low %v944, %v951
      %v955 = vunpack.c.l.s4 1966171168
      %v956 = vunpack.c.0.s8 %v955
      %v957 = vlaneseq
      %v958 = vshrl.u32 %v957, 7
      %v959 = vsub.s32 %v956, %v958
      %v960 = vrot.slane %v952, %v959
      %v962 = vunpack.c.l.s4 1966171168
      %v963 = vunpack.c.0.s8 %v962
      %v964 = vlaneseq
      %v965 = vshrl.u32 %v964, 7
      %v966 = vsub.s32 %v963, %v965
      %v967 = vrot.slane %v953, %v966
      %v968 = vcombine.low %v960, %v967
      %v969 = vcombine.low %v611, %v625
      %v970 = vcombine.low %v627, %v652
      %v971 = vcombine.low %v666, %v674
      %v972 = vcombine.low %v676, %v659
      %v974 = vunpack.c.l.s4 1966171168
      %v975 = vunpack.c.0.s8 %v974
      %v976 = vlaneseq
      %v977 = vshrl.u32 %v976, 7
      %v978 = vsub.s32 %v975, %v977
      %v979 = vrot.slane %v969, %v978
      %v981 = vunpack.c.l.s4 1966171168
      %v982 = vunpack.c.0.s8 %v981
      %v983 = vlaneseq
      %v984 = vshrl.u32 %v983, 7
      %v985 = vsub.s32 %v982, %v984
      %v986 = vrot.slane %v970, %v985
      %v988 = vunpack.c.l.s4 1966171168
      %v989 = vunpack.c.0.s8 %v988
      %v990 = vlaneseq
      %v991 = vshrl.u32 %v990, 7
      %v992 = vsub.s32 %v989, %v991
      %v993 = vrot.slane %v971, %v992
      %v995 = vunpack.c.l.s4 1966171168
      %v996 = vunpack.c.0.s8 %v995
      %v997 = vlaneseq
      %v998 = vshrl.u32 %v997, 7
      %v999 = vsub.s32 %v996, %v998
      %v1000 = vrot.slane %v972, %v999
      %v1001 = vcombine.low %v979, %v986
      %v1002 = vcombine.low %v993, %v1000
      %v1004 = vunpack.c.l.s4 1966171168
      %v1005 = vunpack.c.0.s8 %v1004
      %v1006 = vlaneseq
      %v1007 = vshrl.u32 %v1006, 7
      %v1008 = vsub.s32 %v1005, %v1007
      %v1009 = vrot.slane %v1001, %v1008
      %v1011 = vunpack.c.l.s4 1966171168
      %v1012 = vunpack.c.0.s8 %v1011
      %v1013 = vlaneseq
      %v1014 = vshrl.u32 %v1013, 7
      %v1015 = vsub.s32 %v1012, %v1014
      %v1016 = vrot.slane %v1002, %v1015
      %v1017 = vcombine.low %v1009, %v1016
      %v1018 = vcombine.low %v673, %v675
      %v1019 = vcombine.low %v700, %v714
      %v1020 = vcombine.low %v722, %v724
      %v1021 = vcombine.low %v707, %v721
      %v1023 = vunpack.c.l.s4 1966171168
      %v1024 = vunpack.c.0.s8 %v1023
      %v1025 = vlaneseq
      %v1026 = vshrl.u32 %v1025, 7
      %v1027 = vsub.s32 %v1024, %v1026
      %v1028 = vrot.slane %v1018, %v1027
      %v1030 = vunpack.c.l.s4 1966171168
      %v1031 = vunpack.c.0.s8 %v1030
      %v1032 = vlaneseq
      %v1033 = vshrl.u32 %v1032, 7
      %v1034 = vsub.s32 %v1031, %v1033
      %v1035 = vrot.slane %v1019, %v1034
      %v1037 = vunpack.c.l.s4 1966171168
      %v1038 = vunpack.c.0.s8 %v1037
      %v1039 = vlaneseq
      %v1040 = vshrl.u32 %v1039, 7
      %v1041 = vsub.s32 %v1038, %v1040
      %v1042 = vrot.slane %v1020, %v1041
      %v1044 = vunpack.c.l.s4 1966171168
      %v1045 = vunpack.c.0.s8 %v1044
      %v1046 = vlaneseq
      %v1047 = vshrl.u32 %v1046, 7
      %v1048 = vsub.s32 %v1045, %v1047
      %v1049 = vrot.slane %v1021, %v1048
      %v1050 = vcombine.low %v1028, %v1035
      %v1051 = vcombine.low %v1042, %v1049
      %v1053 = vunpack.c.l.s4 1966171168
      %v1054 = vunpack.c.0.s8 %v1053
      %v1055 = vlaneseq
      %v1056 = vshrl.u32 %v1055, 7
      %v1057 = vsub.s32 %v1054, %v1056
      %v1058 = vrot.slane %v1050, %v1057
      %v1060 = vunpack.c.l.s4 1966171168
      %v1061 = vunpack.c.0.s8 %v1060
      %v1062 = vlaneseq
      %v1063 = vshrl.u32 %v1062, 7
      %v1064 = vsub.s32 %v1061, %v1063
      %v1065 = vrot.slane %v1051, %v1064
      %v1066 = vcombine.low %v1058, %v1065
      %v1067 = vcombine.low %v723, %v748
      %v1068 = vcombine.low %v762, %v770
      %v1069 = vcombine.low %v772, %v755
      %v1070 = vcombine.low %v769, %v771
      %v1072 = vunpack.c.l.s4 1966171168
      %v1073 = vunpack.c.0.s8 %v1072
      %v1074 = vlaneseq
      %v1075 = vshrl.u32 %v1074, 7
      %v1076 = vsub.s32 %v1073, %v1075
      %v1077 = vrot.slane %v1067, %v1076
      %v1079 = vunpack.c.l.s4 1966171168
      %v1080 = vunpack.c.0.s8 %v1079
      %v1081 = vlaneseq
      %v1082 = vshrl.u32 %v1081, 7
      %v1083 = vsub.s32 %v1080, %v1082
      %v1084 = vrot.slane %v1068, %v1083
      %v1086 = vunpack.c.l.s4 1966171168
      %v1087 = vunpack.c.0.s8 %v1086
      %v1088 = vlaneseq
      %v1089 = vshrl.u32 %v1088, 7
      %v1090 = vsub.s32 %v1087, %v1089
      %v1091 = vrot.slane %v1069, %v1090
      %v1093 = vunpack.c.l.s4 1966171168
      %v1094 = vunpack.c.0.s8 %v1093
      %v1095 = vlaneseq
      %v1096 = vshrl.u32 %v1095, 7
      %v1097 = vsub.s32 %v1094, %v1096
      %v1098 = vrot.slane %v1070, %v1097
      %v1099 = vcombine.low %v1077, %v1084
      %v1100 = vcombine.low %v1091, %v1098
      %v1102 = vunpack.c.l.s4 1966171168
      %v1103 = vunpack.c.0.s8 %v1102
      %v1104 = vlaneseq
      %v1105 = vshrl.u32 %v1104, 7
      %v1106 = vsub.s32 %v1103, %v1105
      %v1107 = vrot.slane %v1099, %v1106
      %v1109 = vunpack.c.l.s4 1966171168
      %v1110 = vunpack.c.0.s8 %v1109
      %v1111 = vlaneseq
      %v1112 = vshrl.u32 %v1111, 7
      %v1113 = vsub.s32 %v1110, %v1112
      %v1114 = vrot.slane %v1100, %v1113
      %v1115 = vcombine.low %v1107, %v1114
      %v1123 = vpack.c.bf16 %v870, %v821
      %v1124 = vpack.c.bf16 %v968, %v919
      %v1125 = vpack.c.bf16 %v1066, %v1017
      %v1126 = vpack.c.bf16 %v1115, %v1115
      %v1127 = vld [vmem:[%s2] sm:$0xf]
      %v1128 = vld [vmem:[%s2 + $0x4] sm:$0xf]
      %v1129 = vld [vmem:[%s2 + $0x8] sm:$0xf]
      %v1130 = vld [vmem:[%s2 + $0xc] sm:$0xf]
      %v1131 = vld [vmem:[%s3] sm:$0x1]
      %v1133 = vlaneseq
      %v1134 = vshrl.u32 %v1133, 7
      %v1135 = vsub.s32 0, %v1134
      %v1136 = vrot.slane %v1131, %v1135
      %v1142 = vunpack.c.l.b16 %v1127
      %v1143 = vunpack.c.l.b16 %v1128
      %v1144 = vunpack.c.l.b16 %v1129
      %v1145 = vunpack.c.l.b16 %v1130
      %v1146 = vpack.c.b16 %v1143, %v1142
      %v1147 = vpack.c.b16 %v1145, %v1144
      %vm1150 = vcmask 261120
      %v1152 = vsel %vm1150, %v1123, 0
      %v1155 = vsel %vm1150, %v1124, 0
      %v1158 = vsel %vm1150, %v1125, 0
      %v1161 = vsel %vm1150, %v1126, 0
      %1163 = vmatprep.subr.bf16.mxu0 0
      %1164 = vmatpush1.bf16.msra.mxu0 %v1146
      %1165 = vmatprep.subr.bf16.mxu0 0
      %1166 = vmatpush1.bf16.msra.mxu0 %v1147
      %1167 = vmatprep.subr.bf16.mxu0 0
      %1168 = vmatpush1.bf16.msra.mxu0 0
      %1169 = vmatprep.subr.bf16.mxu0 0
      %1170 = vmatpush1.bf16.msra.mxu0 0
      %1171 = vmatprep.subr.bf16.mxu0 0
      %1172 = vmatpush1.bf16.msra.mxu0 0
      %1173 = vmatprep.subr.bf16.mxu0 0
      %1174 = vmatpush1.bf16.msra.mxu0 0
      %1175 = vmatprep.subr.bf16.mxu0 0
      %1176 = vmatpush1.bf16.msra.mxu0 0
      %1177 = vmatprep.subr.bf16.mxu0 0
      %1178 = vmatpush1.bf16.msra.mxu0 0
      %1179 = vmatprep.subr.bf16.mxu0 0
      %1180 = vmatpush1.bf16.msra.mxu0 0
      %1181 = vmatprep.subr.bf16.mxu0 0
      %1182 = vmatpush1.bf16.msra.mxu0 0
      %1183 = vmatprep.subr.bf16.mxu0 0
      %1184 = vmatpush1.bf16.msra.mxu0 0
      %1185 = vmatprep.subr.bf16.mxu0 0
      %1186 = vmatpush1.bf16.msra.mxu0 0
      %1187 = vmatprep.subr.bf16.mxu0 0
      %1188 = vmatpush1.bf16.msra.mxu0 0
      %1189 = vmatprep.subr.bf16.mxu0 0
      %1190 = vmatpush1.bf16.msra.mxu0 0
      %1191 = vmatprep.subr.bf16.mxu0 0
      %1192 = vmatpush1.bf16.msra.mxu0 0
      %1193 = vmatprep.subr.bf16.mxu0 0
      %1194 = vmatpush1.bf16.msra.mxu0 0
      %1195 = vmatprep.mubr.bf16.mxu0 0
      %1196 = vmatmul.mubr.bf16.gmra.mrb[0].mxu0 %v1152
      %v1197 = vpop.f32.mrb[0].mxu0
      %v1198 = vadd.f32 %v1136, %v1197
      %v1199 = vpop.f32.mrb[0].mxu0
      %v1200 = vpop.f32.mrb[0].mxu0
      %v1201 = vadd.f32 %v1136, %v1200
      %v1202 = vpop.f32.mrb[0].mxu0
      %1203 = vmatprep.mubr.bf16.mxu0 0
      %1204 = vmatmul.mubr.bf16.gmra.mrb[0].mxu0 %v1155
      %v1205 = vpop.f32.mrb[0].mxu0
      %v1206 = vadd.f32 %v1136, %v1205
      %v1207 = vpop.f32.mrb[0].mxu0
      %v1208 = vpop.f32.mrb[0].mxu0
      %v1209 = vadd.f32 %v1136, %v1208
      %v1210 = vpop.f32.mrb[0].mxu0
      %1211 = vmatprep.mubr.bf16.mxu0 0
      %1212 = vmatmul.mubr.bf16.gmra.mrb[0].mxu0 %v1158
      %v1213 = vpop.f32.mrb[0].mxu0
      %v1214 = vadd.f32 %v1136, %v1213
      %v1215 = vpop.f32.mrb[0].mxu0
      %v1216 = vpop.f32.mrb[0].mxu0
      %v1217 = vadd.f32 %v1136, %v1216
      %v1218 = vpop.f32.mrb[0].mxu0
      %1219 = vmatprep.mubr.bf16.mxu0 0
      %1220 = vmatmul.mubr.bf16.gmra.mrb[0].mxu0 %v1161
      %v1221 = vpop.f32.mrb[0].mxu0
      %v1222 = vadd.f32 %v1136, %v1221
      %v1223 = vpop.f32.mrb[0].mxu0
      %v1224 = vpop.f32.mrb[0].mxu0
      %v1225 = vpop.f32.mrb[0].mxu0
      %1226 = vdwg.mxu0
      %v1234 = vcombine.high %v1198, %v1198
      %v1236 = vunpack.c.l.s4 1966171168
      %v1237 = vunpack.c.0.s8 %v1236
      %v1238 = vlaneseq
      %v1239 = vshrl.u32 %v1238, 7
      %v1240 = vsub.s32 %v1237, %v1239
      %v1241 = vrot.slane %v1198, %v1240
      %v1243 = vunpack.c.l.s4 1966171168
      %v1244 = vunpack.c.0.s8 %v1243
      %v1245 = vlaneseq
      %v1246 = vshrl.u32 %v1245, 7
      %v1247 = vsub.s32 %v1244, %v1246
      %v1248 = vrot.slane %v1234, %v1247
      %v1249 = vcombine.high %v1241, %v1241
      %v1250 = vcombine.high %v1248, %v1248
      %v1252 = vunpack.c.l.s4 1966171168
      %v1253 = vunpack.c.0.s8 %v1252
      %v1254 = vlaneseq
      %v1255 = vshrl.u32 %v1254, 7
      %v1256 = vsub.s32 %v1253, %v1255
      %v1257 = vrot.slane %v1241, %v1256
      %v1259 = vunpack.c.l.s4 1966171168
      %v1260 = vunpack.c.0.s8 %v1259
      %v1261 = vlaneseq
      %v1262 = vshrl.u32 %v1261, 7
      %v1263 = vsub.s32 %v1260, %v1262
      %v1264 = vrot.slane %v1248, %v1263
      %v1266 = vunpack.c.l.s4 1966171168
      %v1267 = vunpack.c.0.s8 %v1266
      %v1268 = vlaneseq
      %v1269 = vshrl.u32 %v1268, 7
      %v1270 = vsub.s32 %v1267, %v1269
      %v1271 = vrot.slane %v1249, %v1270
      %v1273 = vunpack.c.l.s4 1966171168
      %v1274 = vunpack.c.0.s8 %v1273
      %v1275 = vlaneseq
      %v1276 = vshrl.u32 %v1275, 7
      %v1277 = vsub.s32 %v1274, %v1276
      %v1278 = vrot.slane %v1250, %v1277
      %v1279 = vcombine.high %v1257, %v1257
      %v1280 = vcombine.high %v1264, %v1264
      %v1281 = vcombine.high %v1271, %v1271
      %v1282 = vcombine.high %v1278, %v1278
      %v1283 = vcombine.high %v1201, %v1201
      %v1285 = vunpack.c.l.s4 1966171168
      %v1286 = vunpack.c.0.s8 %v1285
      %v1287 = vlaneseq
      %v1288 = vshrl.u32 %v1287, 7
      %v1289 = vsub.s32 %v1286, %v1288
      %v1290 = vrot.slane %v1201, %v1289
      %v1292 = vunpack.c.l.s4 1966171168
      %v1293 = vunpack.c.0.s8 %v1292
      %v1294 = vlaneseq
      %v1295 = vshrl.u32 %v1294, 7
      %v1296 = vsub.s32 %v1293, %v1295
      %v1297 = vrot.slane %v1283, %v1296
      %v1298 = vcombine.high %v1290, %v1290
      %v1299 = vcombine.high %v1297, %v1297
      %v1301 = vunpack.c.l.s4 1966171168
      %v1302 = vunpack.c.0.s8 %v1301
      %v1303 = vlaneseq
      %v1304 = vshrl.u32 %v1303, 7
      %v1305 = vsub.s32 %v1302, %v1304
      %v1306 = vrot.slane %v1290, %v1305
      %v1308 = vunpack.c.l.s4 1966171168
      %v1309 = vunpack.c.0.s8 %v1308
      %v1310 = vlaneseq
      %v1311 = vshrl.u32 %v1310, 7
      %v1312 = vsub.s32 %v1309, %v1311
      %v1313 = vrot.slane %v1297, %v1312
      %v1315 = vunpack.c.l.s4 1966171168
      %v1316 = vunpack.c.0.s8 %v1315
      %v1317 = vlaneseq
      %v1318 = vshrl.u32 %v1317, 7
      %v1319 = vsub.s32 %v1316, %v1318
      %v1320 = vrot.slane %v1298, %v1319
      %v1322 = vunpack.c.l.s4 1966171168
      %v1323 = vunpack.c.0.s8 %v1322
      %v1324 = vlaneseq
      %v1325 = vshrl.u32 %v1324, 7
      %v1326 = vsub.s32 %v1323, %v1325
      %v1327 = vrot.slane %v1299, %v1326
      %v1328 = vcombine.high %v1306, %v1306
      %v1329 = vcombine.high %v1313, %v1313
      %v1330 = vcombine.high %v1320, %v1320
      %v1331 = vcombine.high %v1327, %v1327
      %v1332 = vcombine.high %v1206, %v1206
      %v1334 = vunpack.c.l.s4 1966171168
      %v1335 = vunpack.c.0.s8 %v1334
      %v1336 = vlaneseq
      %v1337 = vshrl.u32 %v1336, 7
      %v1338 = vsub.s32 %v1335, %v1337
      %v1339 = vrot.slane %v1206, %v1338
      %v1341 = vunpack.c.l.s4 1966171168
      %v1342 = vunpack.c.0.s8 %v1341
      %v1343 = vlaneseq
      %v1344 = vshrl.u32 %v1343, 7
      %v1345 = vsub.s32 %v1342, %v1344
      %v1346 = vrot.slane %v1332, %v1345
      %v1347 = vcombine.high %v1339, %v1339
      %v1348 = vcombine.high %v1346, %v1346
      %v1350 = vunpack.c.l.s4 1966171168
      %v1351 = vunpack.c.0.s8 %v1350
      %v1352 = vlaneseq
      %v1353 = vshrl.u32 %v1352, 7
      %v1354 = vsub.s32 %v1351, %v1353
      %v1355 = vrot.slane %v1339, %v1354
      %v1357 = vunpack.c.l.s4 1966171168
      %v1358 = vunpack.c.0.s8 %v1357
      %v1359 = vlaneseq
      %v1360 = vshrl.u32 %v1359, 7
      %v1361 = vsub.s32 %v1358, %v1360
      %v1362 = vrot.slane %v1346, %v1361
      %v1364 = vunpack.c.l.s4 1966171168
      %v1365 = vunpack.c.0.s8 %v1364
      %v1366 = vlaneseq
      %v1367 = vshrl.u32 %v1366, 7
      %v1368 = vsub.s32 %v1365, %v1367
      %v1369 = vrot.slane %v1347, %v1368
      %v1371 = vunpack.c.l.s4 1966171168
      %v1372 = vunpack.c.0.s8 %v1371
      %v1373 = vlaneseq
      %v1374 = vshrl.u32 %v1373, 7
      %v1375 = vsub.s32 %v1372, %v1374
      %v1376 = vrot.slane %v1348, %v1375
      %v1377 = vcombine.high %v1355, %v1355
      %v1378 = vcombine.high %v1362, %v1362
      %v1379 = vcombine.high %v1369, %v1369
      %v1380 = vcombine.high %v1376, %v1376
      %v1381 = vcombine.high %v1209, %v1209
      %v1383 = vunpack.c.l.s4 1966171168
      %v1384 = vunpack.c.0.s8 %v1383
      %v1385 = vlaneseq
      %v1386 = vshrl.u32 %v1385, 7
      %v1387 = vsub.s32 %v1384, %v1386
      %v1388 = vrot.slane %v1209, %v1387
      %v1390 = vunpack.c.l.s4 1966171168
      %v1391 = vunpack.c.0.s8 %v1390
      %v1392 = vlaneseq
      %v1393 = vshrl.u32 %v1392, 7
      %v1394 = vsub.s32 %v1391, %v1393
      %v1395 = vrot.slane %v1381, %v1394
      %v1396 = vcombine.high %v1388, %v1388
      %v1397 = vcombine.high %v1395, %v1395
      %v1399 = vunpack.c.l.s4 1966171168
      %v1400 = vunpack.c.0.s8 %v1399
      %v1401 = vlaneseq
      %v1402 = vshrl.u32 %v1401, 7
      %v1403 = vsub.s32 %v1400, %v1402
      %v1404 = vrot.slane %v1388, %v1403
      %v1406 = vunpack.c.l.s4 1966171168
      %v1407 = vunpack.c.0.s8 %v1406
      %v1408 = vlaneseq
      %v1409 = vshrl.u32 %v1408, 7
      %v1410 = vsub.s32 %v1407, %v1409
      %v1411 = vrot.slane %v1395, %v1410
      %v1413 = vunpack.c.l.s4 1966171168
      %v1414 = vunpack.c.0.s8 %v1413
      %v1415 = vlaneseq
      %v1416 = vshrl.u32 %v1415, 7
      %v1417 = vsub.s32 %v1414, %v1416
      %v1418 = vrot.slane %v1396, %v1417
      %v1420 = vunpack.c.l.s4 1966171168
      %v1421 = vunpack.c.0.s8 %v1420
      %v1422 = vlaneseq
      %v1423 = vshrl.u32 %v1422, 7
      %v1424 = vsub.s32 %v1421, %v1423
      %v1425 = vrot.slane %v1397, %v1424
      %v1426 = vcombine.high %v1404, %v1404
      %v1427 = vcombine.high %v1411, %v1411
      %v1428 = vcombine.high %v1418, %v1418
      %v1429 = vcombine.high %v1425, %v1425
      %v1430 = vcombine.high %v1214, %v1214
      %v1432 = vunpack.c.l.s4 1966171168
      %v1433 = vunpack.c.0.s8 %v1432
      %v1434 = vlaneseq
      %v1435 = vshrl.u32 %v1434, 7
      %v1436 = vsub.s32 %v1433, %v1435
      %v1437 = vrot.slane %v1214, %v1436
      %v1439 = vunpack.c.l.s4 1966171168
      %v1440 = vunpack.c.0.s8 %v1439
      %v1441 = vlaneseq
      %v1442 = vshrl.u32 %v1441, 7
      %v1443 = vsub.s32 %v1440, %v1442
      %v1444 = vrot.slane %v1430, %v1443
      %v1445 = vcombine.high %v1437, %v1437
      %v1446 = vcombine.high %v1444, %v1444
      %v1448 = vunpack.c.l.s4 1966171168
      %v1449 = vunpack.c.0.s8 %v1448
      %v1450 = vlaneseq
      %v1451 = vshrl.u32 %v1450, 7
      %v1452 = vsub.s32 %v1449, %v1451
      %v1453 = vrot.slane %v1437, %v1452
      %v1455 = vunpack.c.l.s4 1966171168
      %v1456 = vunpack.c.0.s8 %v1455
      %v1457 = vlaneseq
      %v1458 = vshrl.u32 %v1457, 7
      %v1459 = vsub.s32 %v1456, %v1458
      %v1460 = vrot.slane %v1444, %v1459
      %v1462 = vunpack.c.l.s4 1966171168
      %v1463 = vunpack.c.0.s8 %v1462
      %v1464 = vlaneseq
      %v1465 = vshrl.u32 %v1464, 7
      %v1466 = vsub.s32 %v1463, %v1465
      %v1467 = vrot.slane %v1445, %v1466
      %v1469 = vunpack.c.l.s4 1966171168
      %v1470 = vunpack.c.0.s8 %v1469
      %v1471 = vlaneseq
      %v1472 = vshrl.u32 %v1471, 7
      %v1473 = vsub.s32 %v1470, %v1472
      %v1474 = vrot.slane %v1446, %v1473
      %v1475 = vcombine.high %v1453, %v1453
      %v1476 = vcombine.high %v1460, %v1460
      %v1477 = vcombine.high %v1467, %v1467
      %v1478 = vcombine.high %v1474, %v1474
      %v1479 = vcombine.high %v1217, %v1217
      %v1481 = vunpack.c.l.s4 1966171168
      %v1482 = vunpack.c.0.s8 %v1481
      %v1483 = vlaneseq
      %v1484 = vshrl.u32 %v1483, 7
      %v1485 = vsub.s32 %v1482, %v1484
      %v1486 = vrot.slane %v1217, %v1485
      %v1488 = vunpack.c.l.s4 1966171168
      %v1489 = vunpack.c.0.s8 %v1488
      %v1490 = vlaneseq
      %v1491 = vshrl.u32 %v1490, 7
      %v1492 = vsub.s32 %v1489, %v1491
      %v1493 = vrot.slane %v1479, %v1492
      %v1494 = vcombine.high %v1486, %v1486
      %v1495 = vcombine.high %v1493, %v1493
      %v1497 = vunpack.c.l.s4 1966171168
      %v1498 = vunpack.c.0.s8 %v1497
      %v1499 = vlaneseq
      %v1500 = vshrl.u32 %v1499, 7
      %v1501 = vsub.s32 %v1498, %v1500
      %v1502 = vrot.slane %v1486, %v1501
      %v1504 = vunpack.c.l.s4 1966171168
      %v1505 = vunpack.c.0.s8 %v1504
      %v1506 = vlaneseq
      %v1507 = vshrl.u32 %v1506, 7
      %v1508 = vsub.s32 %v1505, %v1507
      %v1509 = vrot.slane %v1493, %v1508
      %v1511 = vunpack.c.l.s4 1966171168
      %v1512 = vunpack.c.0.s8 %v1511
      %v1513 = vlaneseq
      %v1514 = vshrl.u32 %v1513, 7
      %v1515 = vsub.s32 %v1512, %v1514
      %v1516 = vrot.slane %v1494, %v1515
      %v1518 = vunpack.c.l.s4 1966171168
      %v1519 = vunpack.c.0.s8 %v1518
      %v1520 = vlaneseq
      %v1521 = vshrl.u32 %v1520, 7
      %v1522 = vsub.s32 %v1519, %v1521
      %v1523 = vrot.slane %v1495, %v1522
      %v1524 = vcombine.high %v1502, %v1502
      %v1525 = vcombine.high %v1509, %v1509
      %v1526 = vcombine.high %v1516, %v1516
      %v1527 = vcombine.high %v1523, %v1523
      %v1528 = vcombine.high %v1222, %v1222
      %v1530 = vunpack.c.l.s4 1966171168
      %v1531 = vunpack.c.0.s8 %v1530
      %v1532 = vlaneseq
      %v1533 = vshrl.u32 %v1532, 7
      %v1534 = vsub.s32 %v1531, %v1533
      %v1535 = vrot.slane %v1222, %v1534
      %v1537 = vunpack.c.l.s4 1966171168
      %v1538 = vunpack.c.0.s8 %v1537
      %v1539 = vlaneseq
      %v1540 = vshrl.u32 %v1539, 7
      %v1541 = vsub.s32 %v1538, %v1540
      %v1542 = vrot.slane %v1528, %v1541
      %v1543 = vcombine.high %v1535, %v1535
      %v1544 = vcombine.high %v1542, %v1542
      %v1546 = vunpack.c.l.s4 1966171168
      %v1547 = vunpack.c.0.s8 %v1546
      %v1548 = vlaneseq
      %v1549 = vshrl.u32 %v1548, 7
      %v1550 = vsub.s32 %v1547, %v1549
      %v1551 = vrot.slane %v1535, %v1550
      %v1553 = vunpack.c.l.s4 1966171168
      %v1554 = vunpack.c.0.s8 %v1553
      %v1555 = vlaneseq
      %v1556 = vshrl.u32 %v1555, 7
      %v1557 = vsub.s32 %v1554, %v1556
      %v1558 = vrot.slane %v1542, %v1557
      %v1560 = vunpack.c.l.s4 1966171168
      %v1561 = vunpack.c.0.s8 %v1560
      %v1562 = vlaneseq
      %v1563 = vshrl.u32 %v1562, 7
      %v1564 = vsub.s32 %v1561, %v1563
      %v1565 = vrot.slane %v1543, %v1564
      %v1567 = vunpack.c.l.s4 1966171168
      %v1568 = vunpack.c.0.s8 %v1567
      %v1569 = vlaneseq
      %v1570 = vshrl.u32 %v1569, 7
      %v1571 = vsub.s32 %v1568, %v1570
      %v1572 = vrot.slane %v1544, %v1571
      %v1573 = vcombine.high %v1551, %v1551
      %v1574 = vcombine.high %v1558, %v1558
      %v1575 = vcombine.high %v1565, %v1565
      %v1576 = vcombine.high %v1572, %v1572
      %v1577 = vcombine.low %v1257, %v1271
      %v1578 = vcombine.low %v1279, %v1281
      %v1579 = vcombine.low %v1264, %v1278
      %v1581 = vunpack.c.l.s4 1966171168
      %v1582 = vunpack.c.0.s8 %v1581
      %v1583 = vlaneseq
      %v1584 = vshrl.u32 %v1583, 7
      %v1585 = vsub.s32 %v1582, %v1584
      %v1586 = vrot.slane %v1577, %v1585
      %v1588 = vunpack.c.l.s4 1966171168
      %v1589 = vunpack.c.0.s8 %v1588
      %v1590 = vlaneseq
      %v1591 = vshrl.u32 %v1590, 7
      %v1592 = vsub.s32 %v1589, %v1591
      %v1593 = vrot.slane %v1578, %v1592
      %v1595 = vunpack.c.l.s4 1966171168
      %v1596 = vunpack.c.0.s8 %v1595
      %v1597 = vlaneseq
      %v1598 = vshrl.u32 %v1597, 7
      %v1599 = vsub.s32 %v1596, %v1598
      %v1600 = vrot.slane %v1579, %v1599
      %v1602 = vunpack.c.l.s4 1966171168
      %v1603 = vunpack.c.0.s8 %v1602
      %v1604 = vlaneseq
      %v1605 = vshrl.u32 %v1604, 7
      %v1606 = vsub.s32 %v1603, %v1605
      %v1607 = vrot.slane %v1280, %v1606
      %v1608 = vcombine.low %v1586, %v1593
      %v1609 = vcombine.low %v1600, %v1607
      %v1611 = vunpack.c.l.s4 1966171168
      %v1612 = vunpack.c.0.s8 %v1611
      %v1613 = vlaneseq
      %v1614 = vshrl.u32 %v1613, 7
      %v1615 = vsub.s32 %v1612, %v1614
      %v1616 = vrot.slane %v1608, %v1615
      %v1618 = vunpack.c.l.s4 1966171168
      %v1619 = vunpack.c.0.s8 %v1618
      %v1620 = vlaneseq
      %v1621 = vshrl.u32 %v1620, 7
      %v1622 = vsub.s32 %v1619, %v1621
      %v1623 = vrot.slane %v1609, %v1622
      %v1624 = vcombine.low %v1616, %v1623
      %v1625 = vcombine.low %v1282, %v1306
      %v1626 = vcombine.low %v1320, %v1328
      %v1627 = vcombine.low %v1330, %v1313
      %v1629 = vunpack.c.l.s4 1966171168
      %v1630 = vunpack.c.0.s8 %v1629
      %v1631 = vlaneseq
      %v1632 = vshrl.u32 %v1631, 7
      %v1633 = vsub.s32 %v1630, %v1632
      %v1634 = vrot.slane %v1625, %v1633
      %v1636 = vunpack.c.l.s4 1966171168
      %v1637 = vunpack.c.0.s8 %v1636
      %v1638 = vlaneseq
      %v1639 = vshrl.u32 %v1638, 7
      %v1640 = vsub.s32 %v1637, %v1639
      %v1641 = vrot.slane %v1626, %v1640
      %v1643 = vunpack.c.l.s4 1966171168
      %v1644 = vunpack.c.0.s8 %v1643
      %v1645 = vlaneseq
      %v1646 = vshrl.u32 %v1645, 7
      %v1647 = vsub.s32 %v1644, %v1646
      %v1648 = vrot.slane %v1627, %v1647
      %v1650 = vunpack.c.l.s4 1966171168
      %v1651 = vunpack.c.0.s8 %v1650
      %v1652 = vlaneseq
      %v1653 = vshrl.u32 %v1652, 7
      %v1654 = vsub.s32 %v1651, %v1653
      %v1655 = vrot.slane %v1327, %v1654
      %v1656 = vcombine.low %v1634, %v1641
      %v1657 = vcombine.low %v1648, %v1655
      %v1659 = vunpack.c.l.s4 1966171168
      %v1660 = vunpack.c.0.s8 %v1659
      %v1661 = vlaneseq
      %v1662 = vshrl.u32 %v1661, 7
      %v1663 = vsub.s32 %v1660, %v1662
      %v1664 = vrot.slane %v1656, %v1663
      %v1666 = vunpack.c.l.s4 1966171168
      %v1667 = vunpack.c.0.s8 %v1666
      %v1668 = vlaneseq
      %v1669 = vshrl.u32 %v1668, 7
      %v1670 = vsub.s32 %v1667, %v1669
      %v1671 = vrot.slane %v1657, %v1670
      %v1672 = vcombine.low %v1664, %v1671
      %v1673 = vcombine.low %v1329, %v1331
      %v1674 = vcombine.low %v1355, %v1369
      %v1675 = vcombine.low %v1377, %v1379
      %v1677 = vunpack.c.l.s4 1966171168
      %v1678 = vunpack.c.0.s8 %v1677
      %v1679 = vlaneseq
      %v1680 = vshrl.u32 %v1679, 7
      %v1681 = vsub.s32 %v1678, %v1680
      %v1682 = vrot.slane %v1673, %v1681
      %v1684 = vunpack.c.l.s4 1966171168
      %v1685 = vunpack.c.0.s8 %v1684
      %v1686 = vlaneseq
      %v1687 = vshrl.u32 %v1686, 7
      %v1688 = vsub.s32 %v1685, %v1687
      %v1689 = vrot.slane %v1674, %v1688
      %v1691 = vunpack.c.l.s4 1966171168
      %v1692 = vunpack.c.0.s8 %v1691
      %v1693 = vlaneseq
      %v1694 = vshrl.u32 %v1693, 7
      %v1695 = vsub.s32 %v1692, %v1694
      %v1696 = vrot.slane %v1675, %v1695
      %v1698 = vunpack.c.l.s4 1966171168
      %v1699 = vunpack.c.0.s8 %v1698
      %v1700 = vlaneseq
      %v1701 = vshrl.u32 %v1700, 7
      %v1702 = vsub.s32 %v1699, %v1701
      %v1703 = vrot.slane %v1362, %v1702
      %v1704 = vcombine.low %v1682, %v1689
      %v1705 = vcombine.low %v1696, %v1703
      %v1707 = vunpack.c.l.s4 1966171168
      %v1708 = vunpack.c.0.s8 %v1707
      %v1709 = vlaneseq
      %v1710 = vshrl.u32 %v1709, 7
      %v1711 = vsub.s32 %v1708, %v1710
      %v1712 = vrot.slane %v1704, %v1711
      %v1714 = vunpack.c.l.s4 1966171168
      %v1715 = vunpack.c.0.s8 %v1714
      %v1716 = vlaneseq
      %v1717 = vshrl.u32 %v1716, 7
      %v1718 = vsub.s32 %v1715, %v1717
      %v1719 = vrot.slane %v1705, %v1718
      %v1720 = vcombine.low %v1712, %v1719
      %v1721 = vcombine.low %v1376, %v1378
      %v1722 = vcombine.low %v1380, %v1404
      %v1723 = vcombine.low %v1418, %v1426
      %v1725 = vunpack.c.l.s4 1966171168
      %v1726 = vunpack.c.0.s8 %v1725
      %v1727 = vlaneseq
      %v1728 = vshrl.u32 %v1727, 7
      %v1729 = vsub.s32 %v1726, %v1728
      %v1730 = vrot.slane %v1721, %v1729
      %v1732 = vunpack.c.l.s4 1966171168
      %v1733 = vunpack.c.0.s8 %v1732
      %v1734 = vlaneseq
      %v1735 = vshrl.u32 %v1734, 7
      %v1736 = vsub.s32 %v1733, %v1735
      %v1737 = vrot.slane %v1722, %v1736
      %v1739 = vunpack.c.l.s4 1966171168
      %v1740 = vunpack.c.0.s8 %v1739
      %v1741 = vlaneseq
      %v1742 = vshrl.u32 %v1741, 7
      %v1743 = vsub.s32 %v1740, %v1742
      %v1744 = vrot.slane %v1723, %v1743
      %v1746 = vunpack.c.l.s4 1966171168
      %v1747 = vunpack.c.0.s8 %v1746
      %v1748 = vlaneseq
      %v1749 = vshrl.u32 %v1748, 7
      %v1750 = vsub.s32 %v1747, %v1749
      %v1751 = vrot.slane %v1428, %v1750
      %v1752 = vcombine.low %v1730, %v1737
      %v1753 = vcombine.low %v1744, %v1751
      %v1755 = vunpack.c.l.s4 1966171168
      %v1756 = vunpack.c.0.s8 %v1755
      %v1757 = vlaneseq
      %v1758 = vshrl.u32 %v1757, 7
      %v1759 = vsub.s32 %v1756, %v1758
      %v1760 = vrot.slane %v1752, %v1759
      %v1762 = vunpack.c.l.s4 1966171168
      %v1763 = vunpack.c.0.s8 %v1762
      %v1764 = vlaneseq
      %v1765 = vshrl.u32 %v1764, 7
      %v1766 = vsub.s32 %v1763, %v1765
      %v1767 = vrot.slane %v1753, %v1766
      %v1768 = vcombine.low %v1760, %v1767
      %v1769 = vcombine.low %v1411, %v1425
      %v1770 = vcombine.low %v1427, %v1429
      %v1771 = vcombine.low %v1453, %v1467
      %v1773 = vunpack.c.l.s4 1966171168
      %v1774 = vunpack.c.0.s8 %v1773
      %v1775 = vlaneseq
      %v1776 = vshrl.u32 %v1775, 7
      %v1777 = vsub.s32 %v1774, %v1776
      %v1778 = vrot.slane %v1769, %v1777
      %v1780 = vunpack.c.l.s4 1966171168
      %v1781 = vunpack.c.0.s8 %v1780
      %v1782 = vlaneseq
      %v1783 = vshrl.u32 %v1782, 7
      %v1784 = vsub.s32 %v1781, %v1783
      %v1785 = vrot.slane %v1770, %v1784
      %v1787 = vunpack.c.l.s4 1966171168
      %v1788 = vunpack.c.0.s8 %v1787
      %v1789 = vlaneseq
      %v1790 = vshrl.u32 %v1789, 7
      %v1791 = vsub.s32 %v1788, %v1790
      %v1792 = vrot.slane %v1771, %v1791
      %v1794 = vunpack.c.l.s4 1966171168
      %v1795 = vunpack.c.0.s8 %v1794
      %v1796 = vlaneseq
      %v1797 = vshrl.u32 %v1796, 7
      %v1798 = vsub.s32 %v1795, %v1797
      %v1799 = vrot.slane %v1475, %v1798
      %v1800 = vcombine.low %v1778, %v1785
      %v1801 = vcombine.low %v1792, %v1799
      %v1803 = vunpack.c.l.s4 1966171168
      %v1804 = vunpack.c.0.s8 %v1803
      %v1805 = vlaneseq
      %v1806 = vshrl.u32 %v1805, 7
      %v1807 = vsub.s32 %v1804, %v1806
      %v1808 = vrot.slane %v1800, %v1807
      %v1810 = vunpack.c.l.s4 1966171168
      %v1811 = vunpack.c.0.s8 %v1810
      %v1812 = vlaneseq
      %v1813 = vshrl.u32 %v1812, 7
      %v1814 = vsub.s32 %v1811, %v1813
      %v1815 = vrot.slane %v1801, %v1814
      %v1816 = vcombine.low %v1808, %v1815
      %v1817 = vcombine.low %v1477, %v1460
      %v1818 = vcombine.low %v1474, %v1476
      %v1819 = vcombine.low %v1478, %v1502
      %v1821 = vunpack.c.l.s4 1966171168
      %v1822 = vunpack.c.0.s8 %v1821
      %v1823 = vlaneseq
      %v1824 = vshrl.u32 %v1823, 7
      %v1825 = vsub.s32 %v1822, %v1824
      %v1826 = vrot.slane %v1817, %v1825
      %v1828 = vunpack.c.l.s4 1966171168
      %v1829 = vunpack.c.0.s8 %v1828
      %v1830 = vlaneseq
      %v1831 = vshrl.u32 %v1830, 7
      %v1832 = vsub.s32 %v1829, %v1831
      %v1833 = vrot.slane %v1818, %v1832
      %v1835 = vunpack.c.l.s4 1966171168
      %v1836 = vunpack.c.0.s8 %v1835
      %v1837 = vlaneseq
      %v1838 = vshrl.u32 %v1837, 7
      %v1839 = vsub.s32 %v1836, %v1838
      %v1840 = vrot.slane %v1819, %v1839
      %v1842 = vunpack.c.l.s4 1966171168
      %v1843 = vunpack.c.0.s8 %v1842
      %v1844 = vlaneseq
      %v1845 = vshrl.u32 %v1844, 7
      %v1846 = vsub.s32 %v1843, %v1845
      %v1847 = vrot.slane %v1516, %v1846
      %v1848 = vcombine.low %v1826, %v1833
      %v1849 = vcombine.low %v1840, %v1847
      %v1851 = vunpack.c.l.s4 1966171168
      %v1852 = vunpack.c.0.s8 %v1851
      %v1853 = vlaneseq
      %v1854 = vshrl.u32 %v1853, 7
      %v1855 = vsub.s32 %v1852, %v1854
      %v1856 = vrot.slane %v1848, %v1855
      %v1858 = vunpack.c.l.s4 1966171168
      %v1859 = vunpack.c.0.s8 %v1858
      %v1860 = vlaneseq
      %v1861 = vshrl.u32 %v1860, 7
      %v1862 = vsub.s32 %v1859, %v1861
      %v1863 = vrot.slane %v1849, %v1862
      %v1864 = vcombine.low %v1856, %v1863
      %v1865 = vcombine.low %v1524, %v1526
      %v1866 = vcombine.low %v1509, %v1523
      %v1867 = vcombine.low %v1525, %v1527
      %v1869 = vunpack.c.l.s4 1966171168
      %v1870 = vunpack.c.0.s8 %v1869
      %v1871 = vlaneseq
      %v1872 = vshrl.u32 %v1871, 7
      %v1873 = vsub.s32 %v1870, %v1872
      %v1874 = vrot.slane %v1865, %v1873
      %v1876 = vunpack.c.l.s4 1966171168
      %v1877 = vunpack.c.0.s8 %v1876
      %v1878 = vlaneseq
      %v1879 = vshrl.u32 %v1878, 7
      %v1880 = vsub.s32 %v1877, %v1879
      %v1881 = vrot.slane %v1866, %v1880
      %v1883 = vunpack.c.l.s4 1966171168
      %v1884 = vunpack.c.0.s8 %v1883
      %v1885 = vlaneseq
      %v1886 = vshrl.u32 %v1885, 7
      %v1887 = vsub.s32 %v1884, %v1886
      %v1888 = vrot.slane %v1867, %v1887
      %v1890 = vunpack.c.l.s4 1966171168
      %v1891 = vunpack.c.0.s8 %v1890
      %v1892 = vlaneseq
      %v1893 = vshrl.u32 %v1892, 7
      %v1894 = vsub.s32 %v1891, %v1893
      %v1895 = vrot.slane %v1551, %v1894
      %v1896 = vcombine.low %v1874, %v1881
      %v1897 = vcombine.low %v1888, %v1895
      %v1899 = vunpack.c.l.s4 1966171168
      %v1900 = vunpack.c.0.s8 %v1899
      %v1901 = vlaneseq
      %v1902 = vshrl.u32 %v1901, 7
      %v1903 = vsub.s32 %v1900, %v1902
      %v1904 = vrot.slane %v1896, %v1903
      %v1906 = vunpack.c.l.s4 1966171168
      %v1907 = vunpack.c.0.s8 %v1906
      %v1908 = vlaneseq
      %v1909 = vshrl.u32 %v1908, 7
      %v1910 = vsub.s32 %v1907, %v1909
      %v1911 = vrot.slane %v1897, %v1910
      %v1912 = vcombine.low %v1904, %v1911
      %v1913 = vcombine.low %v1565, %v1573
      %v1914 = vcombine.low %v1575, %v1558
      %v1915 = vcombine.low %v1572, %v1574
      %v1917 = vunpack.c.l.s4 1966171168
      %v1918 = vunpack.c.0.s8 %v1917
      %v1919 = vlaneseq
      %v1920 = vshrl.u32 %v1919, 7
      %v1921 = vsub.s32 %v1918, %v1920
      %v1922 = vrot.slane %v1913, %v1921
      %v1924 = vunpack.c.l.s4 1966171168
      %v1925 = vunpack.c.0.s8 %v1924
      %v1926 = vlaneseq
      %v1927 = vshrl.u32 %v1926, 7
      %v1928 = vsub.s32 %v1925, %v1927
      %v1929 = vrot.slane %v1914, %v1928
      %v1931 = vunpack.c.l.s4 1966171168
      %v1932 = vunpack.c.0.s8 %v1931
      %v1933 = vlaneseq
      %v1934 = vshrl.u32 %v1933, 7
      %v1935 = vsub.s32 %v1932, %v1934
      %v1936 = vrot.slane %v1915, %v1935
      %v1938 = vunpack.c.l.s4 1966171168
      %v1939 = vunpack.c.0.s8 %v1938
      %v1940 = vlaneseq
      %v1941 = vshrl.u32 %v1940, 7
      %v1942 = vsub.s32 %v1939, %v1941
      %v1943 = vrot.slane %v1576, %v1942
      %v1944 = vcombine.low %v1922, %v1929
      %v1945 = vcombine.low %v1936, %v1943
      %v1947 = vunpack.c.l.s4 1966171168
      %v1948 = vunpack.c.0.s8 %v1947
      %v1949 = vlaneseq
      %v1950 = vshrl.u32 %v1949, 7
      %v1951 = vsub.s32 %v1948, %v1950
      %v1952 = vrot.slane %v1944, %v1951
      %v1954 = vunpack.c.l.s4 1966171168
      %v1955 = vunpack.c.0.s8 %v1954
      %v1956 = vlaneseq
      %v1957 = vshrl.u32 %v1956, 7
      %v1958 = vsub.s32 %v1955, %v1957
      %v1959 = vrot.slane %v1945, %v1958
      %v1960 = vcombine.low %v1952, %v1959
      %vm1969 = vcmask 129024
      %1970 = vst.msk [vmem:[%s270] sm:$0x7f] %vm1969, %v1624
      %1971 = vst.msk [vmem:[%s270 + $0x8] sm:$0x7f] %vm1969, %v1672
      %1972 = vst.msk [vmem:[%s270 + $0x10] sm:$0x7f] %vm1969, %v1720
      %1973 = vst.msk [vmem:[%s270 + $0x18] sm:$0x7f] %vm1969, %v1768
      %1974 = vst.msk [vmem:[%s270 + $0x20] sm:$0x7f] %vm1969, %v1816
      %1975 = vst.msk [vmem:[%s270 + $0x28] sm:$0x7f] %vm1969, %v1864
      %1976 = vst.msk [vmem:[%s270 + $0x30] sm:$0x7f] %vm1969, %v1912
      %1977 = vst.msk [vmem:[%s270 + $0x38] sm:$0x7f] %vm1969, %v1960
      %s1978 = smul.u32 8, %s21
      %p1979 = scmp.lt.s32.totalorder %s20, 1
      %s1980 = scalar_select %p1979, %s20, 1
      %p1981 = scmp.lt.s32.totalorder %s1978, 7
      %s1982 = scalar_select %p1981, %s1978, 7
      %p1983 = scmp.lt.s32.totalorder %s22, 0
      %s1984 = scalar_select %p1983, %s22, 0
      %s1985 = sadd.s32 %s1984, %s1982
      %s1986 = smul.addr %s1980, 8
      %s1987 = sadd.s32 %s1985, %s1986
      %s1988 = smul.addr %s1987, 8
      %s1989 = scalar_lea.vmem %s4, %s1988
      // Predicated region
      $region37: #{rnnt_forward.17} parent=35 // pred_check
        %p1990 = pneg %p154
      $region38: #{rnnt_forward.17} parent=35 // pred_check_branch
        %1992 = sbr.rel (%p1990) target = $region40
      $region39: #{rnnt_forward.17} parent=35 // pred_region
        %s1993 = smul.u32 8, %s21
      $region40: #{rnnt_forward.17} parent=35 // pred_fallthru
        _
    $region36: #{rnnt_forward.17} parent=5 // pred_fallthru
      _
    %p1994 = scmp.le.s32.totalorder 2, %s10
    // Predicated region
    $region41: #{rnnt_forward.17} parent=5 // pred_check
      %p1995 = pneg %p1994
    $region42: #{rnnt_forward.17} parent=5 // pred_check_branch
      %1997 = sbr.rel (%p1995) target = $region44
    $region43: #{rnnt_forward.17} parent=5 // pred_region
      %s1998 = ssub.s32 %s10, 2
      // Predicated region
      $region45: #{rnnt_forward.17} parent=43 // pred_check
        %p1999 = pneg %p160
      $region46: #{rnnt_forward.17} parent=43 // pred_check_branch
        %2001 = sbr.rel (%p1999) target = $region48
      $region47: #{rnnt_forward.17} parent=43 // pred_region
        %s2002 = smul.u32 8, %s24
        %p2003 = scmp.lt.s32.totalorder %s23, 1
        %s2004 = scalar_select %p2003, %s23, 1
        %p2005 = scmp.lt.s32.totalorder %s2002, 7
        %s2006 = scalar_select %p2005, %s2002, 7
        %p2007 = scmp.lt.s32.totalorder %s25, 0
        %s2008 = scalar_select %p2007, %s25, 0
        %s2009 = sadd.s32 %s2008, %s2006
        %s2010 = smul.addr %s2004, 8
        %s2011 = sadd.s32 %s2009, %s2010
        %s2012 = smul.addr %s2011, 8
        %s2013 = scalar_lea.vmem %s4, %s2012
      $region48: #{rnnt_forward.17} parent=43 // pred_fallthru
        _
    $region44: #{rnnt_forward.17} parent=5 // pred_fallthru
      _
  $region6: #{rnnt_forward.17} parent=0 // loop_footer
    %s14 = sadd.s32 1, %s10
  $region7: #{rnnt_forward.17} parent=0 // loop_footer_branch
    %9 = sbr.rel target = $region3
  $region8: #{rnnt_forward.17} parent=0 // loop_exit
    _

// kernel: rnnt_forward.10
$region0: #{rnnt_forward.10}
  #allocation0 [shape = 'u32[]', space=smem, size = 0x4, offset = 0x4, fixed_abs, tag = 'smem constant byte address 0x4 - core index']
  #allocation1 [shape = 'u32[144,128]{1,0:T(1,128)}', space=vmem, size = 0x12000, scoped, tag = 'internal scratch']
  #allocation2 [shape = 'f32[2,32]{1,0:T(2,128)}', space=vmem, size = 0x400, scoped, tag = 'scratch operand']
  #allocation3 [shape = 'f32[2,32]{1,0:T(2,128)}', space=vmem, size = 0x400, scoped, tag = 'scratch operand']
  %s0 = inlined_call_operand.vmem [shape: f32[8,2,128], index: 0, kind: input, shape index: {}]
  %s1 = inlined_call_operand.vmem [shape: bf16[32,128], index: 1, kind: input, shape index: {}]
  %s2 = inlined_call_operand.vmem [shape: bf16[8,2,32], index: 2, kind: output, shape index: {}]
  %s3 = sld [smem:[#allocation0]]
  $region22: #{rnnt_forward.10} parent=0
    _
  %s5 = ssub.s32 1, %s3
  %s6 = scalar_select 0, %s5, %s3
  // Predicated region
  $region2: #{rnnt_forward.10} parent=0 // pred_check
    _
  $region3: #{rnnt_forward.10} parent=0 // pred_check_branch
    %8 = sbr.rel (0) target = $region5
  $region4: #{rnnt_forward.10} parent=0 // pred_region
    _
  $region5: #{rnnt_forward.10} parent=0 // pred_fallthru
    _
  // Predicated region
  $region6: #{rnnt_forward.10} parent=0 // pred_check
    _
  $region7: #{rnnt_forward.10} parent=0 // pred_check_branch
    %10 = sbr.rel (0) target = $region9
  $region8: #{rnnt_forward.10} parent=0 // pred_region
    _
  $region9: #{rnnt_forward.10} parent=0 // pred_fallthru
    _
  %p12 = scmp.eq.s32.totalorder 0, 0
  // Predicated region
  $region10: #{rnnt_forward.10} parent=0 // pred_check
    %p13 = pneg %p12
  $region11: #{rnnt_forward.10} parent=0 // pred_check_branch
    %15 = sbr.rel (%p13) target = $region13
  $region12: #{rnnt_forward.10} parent=0 // pred_region
    %vm16 = vcmask 254976
    %17 = vst.msk [vmem:[#allocation2] sm:$0x3] %vm16, 0.0
    %18 = vst.msk [vmem:[#allocation3] sm:$0x3] %vm16, 0.0
  $region13: #{rnnt_forward.10} parent=0 // pred_fallthru
    _
  %v19 = vld [vmem:[%s0] sm:$0x3]
  %v20 = vld [vmem:[#allocation2] sm:$0x3]
  %v21 = vpack.c.bf16 %v20, %v20
  %v22 = vld [vmem:[%s1] sm:$0xf]
  %v23 = vld [vmem:[%s1 + $0x4] sm:$0xf]
  %v24 = vld [vmem:[%s1 + $0x8] sm:$0xf]
  %v25 = vld [vmem:[%s1 + $0xc] sm:$0xf]
  %v30 = vunpack.c.l.b16 %v22
  %v31 = vunpack.c.l.b16 %v23
  %v32 = vunpack.c.l.b16 %v24
  %v33 = vunpack.c.l.b16 %v25
  %v34 = vpack.c.b16 %v31, %v30
  %v35 = vpack.c.b16 %v33, %v32
  %vm38 = vcmask 261120
  %v40 = vsel %vm38, %v21, 0
  %42 = vmatprep.subr.bf16.mxu0 0
  %43 = vmatpush1.bf16.msra.mxu0 %v34
  %44 = vmatprep.subr.bf16.mxu0 0
  %45 = vmatpush1.bf16.msra.mxu0 %v35
  %46 = vmatprep.subr.bf16.mxu0 0
  %47 = vmatpush1.bf16.msra.mxu0 0
  %48 = vmatprep.subr.bf16.mxu0 0
  %49 = vmatpush1.bf16.msra.mxu0 0
  %50 = vmatprep.subr.bf16.mxu0 0
  %51 = vmatpush1.bf16.msra.mxu0 0
  %52 = vmatprep.subr.bf16.mxu0 0
  %53 = vmatpush1.bf16.msra.mxu0 0
  %54 = vmatprep.subr.bf16.mxu0 0
  %55 = vmatpush1.bf16.msra.mxu0 0
  %56 = vmatprep.subr.bf16.mxu0 0
  %57 = vmatpush1.bf16.msra.mxu0 0
  %58 = vmatprep.subr.bf16.mxu0 0
  %59 = vmatpush1.bf16.msra.mxu0 0
  %60 = vmatprep.subr.bf16.mxu0 0
  %61 = vmatpush1.bf16.msra.mxu0 0
  %62 = vmatprep.subr.bf16.mxu0 0
  %63 = vmatpush1.bf16.msra.mxu0 0
  %64 = vmatprep.subr.bf16.mxu0 0
  %65 = vmatpush1.bf16.msra.mxu0 0
  %66 = vmatprep.subr.bf16.mxu0 0
  %67 = vmatpush1.bf16.msra.mxu0 0
  %68 = vmatprep.subr.bf16.mxu0 0
  %69 = vmatpush1.bf16.msra.mxu0 0
  %70 = vmatprep.subr.bf16.mxu0 0
  %71 = vmatpush1.bf16.msra.mxu0 0
  %72 = vmatprep.subr.bf16.mxu0 0
  %73 = vmatpush1.bf16.msra.mxu0 0
  %74 = vmatprep.mubr.bf16.mxu0 0
  %75 = vmatmul.mubr.bf16.gmra.mrb[0].mxu0 %v40
  %v76 = vpop.f32.mrb[0].mxu0
  %v77 = vadd.f32 0.0, %v76
  %v78 = vpop.f32.mrb[0].mxu0
  %v79 = vpop.f32.mrb[0].mxu0
  %v80 = vpop.f32.mrb[0].mxu0
  %81 = vdwg.mxu0
  %v82 = vadd.f32 %v19, %v77
  %v83 = vxor.u32 %v82, 2147483648
  %v84 = vmul.f32 %v83, 1.442695
  %v85 = vpow.pop %v84
  %v86 = vadd.f32 %v85, 1.0
  %v87 = vrcp.pop %v86
  %v88 = vmul.f32 1.0, %v87
  %v89 = vtanh.pop %v82
  %v90 = vld [vmem:[#allocation3] sm:$0x3]
  %92 = vrot.lane.b32.xlu0 %v90, 32
  %v93 = vpop.permute.xlu0 %92
  %v95 = vmul.f32 %v88, %v93
  %97 = vrot.lane.b32.xlu0 %v89, 64
  %v98 = vpop.permute.xlu0 %97
  %v100 = vmul.f32 %v88, %v98
  %102 = vrot.lane.b32.xlu0 %v100, 32
  %v103 = vpop.permute.xlu0 %102
  %v105 = vadd.f32 %v95, %v103
  %v106 = vtanh.pop %v105
  %108 = vrot.lane.b32.xlu0 %v106, 64
  %v109 = vpop.permute.xlu0 %108
  %v111 = vmul.f32 %v88, %v109
  %113 = vrot.lane.b32.xlu0 %v105, 96
  %v114 = vpop.permute.xlu0 %113
  %vm116 = vcmask 254976
  %117 = vst.msk [vmem:[#allocation3] sm:$0x3] %vm116, %v114
  %119 = vrot.lane.b32.xlu0 %v111, 32
  %v120 = vpop.permute.xlu0 %119
  %122 = vst.msk [vmem:[#allocation2] sm:$0x3] %vm116, %v120
  %v123 = vpack.c.bf16 %v111, %v111
  %v126 = vunpack.c.l.s4 1966171168
  %v127 = vunpack.c.0.s8 %v126
  %v128 = vlaneseq
  %v129 = vshrl.u32 %v128, 7
  %v130 = vsub.s32 %v127, %v129
  %v131 = vrot.slane %v123, %v130
  %v133 = vunpack.c.l.s4 1966171168
  %v134 = vunpack.c.0.s8 %v133
  %v135 = vlaneseq
  %v136 = vshrl.u32 %v135, 7
  %v137 = vsub.s32 %v134, %v136
  %v138 = vrot.slane %v131, %v137
  %139 = vrot.lane.b32.xlu0 %v138, 32
  %v140 = vpop.permute.xlu0 %139
  %vm142 = vcmask 253952
  %143 = vst.msk [vmem:[%s2] sm:$0x1] %vm142, %v140
  %s144 = scalar_lea.vmem %s0, 2
  %v145 = vld [vmem:[%s144] sm:$0x3]
  %v146 = vld [vmem:[#allocation2] sm:$0x3]
  %v147 = vpack.c.bf16 %v146, %v146
  %v148 = vld [vmem:[%s1] sm:$0xf]
  %v149 = vld [vmem:[%s1 + $0x4] sm:$0xf]
  %v150 = vld [vmem:[%s1 + $0x8] sm:$0xf]
  %v151 = vld [vmem:[%s1 + $0xc] sm:$0xf]
  %v156 = vunpack.c.l.b16 %v148
  %v157 = vunpack.c.l.b16 %v149
  %v158 = vunpack.c.l.b16 %v150
  %v159 = vunpack.c.l.b16 %v151
  %v160 = vpack.c.b16 %v157, %v156
  %v161 = vpack.c.b16 %v159, %v158
  %v165 = vsel %vm38, %v147, 0
  %167 = vmatprep.subr.bf16.mxu0 0
  %168 = vmatpush1.bf16.msra.mxu0 %v160
  %169 = vmatprep.subr.bf16.mxu0 0
  %170 = vmatpush1.bf16.msra.mxu0 %v161
  %171 = vmatprep.subr.bf16.mxu0 0
  %172 = vmatpush1.bf16.msra.mxu0 0
  %173 = vmatprep.subr.bf16.mxu0 0
  %174 = vmatpush1.bf16.msra.mxu0 0
  %175 = vmatprep.subr.bf16.mxu0 0
  %176 = vmatpush1.bf16.msra.mxu0 0
  %177 = vmatprep.subr.bf16.mxu0 0
  %178 = vmatpush1.bf16.msra.mxu0 0
  %179 = vmatprep.subr.bf16.mxu0 0
  %180 = vmatpush1.bf16.msra.mxu0 0
  %181 = vmatprep.subr.bf16.mxu0 0
  %182 = vmatpush1.bf16.msra.mxu0 0
  %183 = vmatprep.subr.bf16.mxu0 0
  %184 = vmatpush1.bf16.msra.mxu0 0
  %185 = vmatprep.subr.bf16.mxu0 0
  %186 = vmatpush1.bf16.msra.mxu0 0
  %187 = vmatprep.subr.bf16.mxu0 0
  %188 = vmatpush1.bf16.msra.mxu0 0
  %189 = vmatprep.subr.bf16.mxu0 0
  %190 = vmatpush1.bf16.msra.mxu0 0
  %191 = vmatprep.subr.bf16.mxu0 0
  %192 = vmatpush1.bf16.msra.mxu0 0
  %193 = vmatprep.subr.bf16.mxu0 0
  %194 = vmatpush1.bf16.msra.mxu0 0
  %195 = vmatprep.subr.bf16.mxu0 0
  %196 = vmatpush1.bf16.msra.mxu0 0
  %197 = vmatprep.subr.bf16.mxu0 0
  %198 = vmatpush1.bf16.msra.mxu0 0
  %199 = vmatprep.mubr.bf16.mxu0 0
  %200 = vmatmul.mubr.bf16.gmra.mrb[0].mxu0 %v165
  %v201 = vpop.f32.mrb[0].mxu0
  %v202 = vadd.f32 0.0, %v201
  %v203 = vpop.f32.mrb[0].mxu0
  %v204 = vpop.f32.mrb[0].mxu0
  %v205 = vpop.f32.mrb[0].mxu0
  %206 = vdwg.mxu0
  %v207 = vadd.f32 %v145, %v202
  %v208 = vxor.u32 %v207, 2147483648
  %v209 = vmul.f32 %v208, 1.442695
  %v210 = vpow.pop %v209
  %v211 = vadd.f32 %v210, 1.0
  %v212 = vrcp.pop %v211
  %v213 = vmul.f32 1.0, %v212
  %v214 = vtanh.pop %v207
  %v215 = vld [vmem:[#allocation3] sm:$0x3]
  %217 = vrot.lane.b32.xlu0 %v215, 32
  %v218 = vpop.permute.xlu0 %217
  %v220 = vmul.f32 %v213, %v218
  %222 = vrot.lane.b32.xlu0 %v214, 64
  %v223 = vpop.permute.xlu0 %222
  %v225 = vmul.f32 %v213, %v223
  %227 = vrot.lane.b32.xlu0 %v225, 32
  %v228 = vpop.permute.xlu0 %227
  %v230 = vadd.f32 %v220, %v228
  %v231 = vtanh.pop %v230
  %233 = vrot.lane.b32.xlu0 %v231, 64
  %v234 = vpop.permute.xlu0 %233
  %v236 = vmul.f32 %v213, %v234
  %238 = vrot.lane.b32.xlu0 %v230, 96
  %v239 = vpop.permute.xlu0 %238
  %241 = vst.msk [vmem:[#allocation3] sm:$0x3] %vm116, %v239
  %243 = vrot.lane.b32.xlu0 %v236, 32
  %v244 = vpop.permute.xlu0 %243
  %246 = vst.msk [vmem:[#allocation2] sm:$0x3] %vm116, %v244
  %v247 = vpack.c.bf16 %v236, %v236
  %v250 = vunpack.c.l.s4 1966171168
  %v251 = vunpack.c.0.s8 %v250
  %v252 = vlaneseq
  %v253 = vshrl.u32 %v252, 7
  %v254 = vsub.s32 %v251, %v253
  %v255 = vrot.slane %v247, %v254
  %v257 = vunpack.c.l.s4 1966171168
  %v258 = vunpack.c.0.s8 %v257
  %v259 = vlaneseq
  %v260 = vshrl.u32 %v259, 7
  %v261 = vsub.s32 %v258, %v260
  %v262 = vrot.slane %v255, %v261
  %263 = vrot.lane.b32.xlu0 %v262, 32
  %v264 = vpop.permute.xlu0 %263
  %s266 = scalar_lea.vmem %s2, 1
  %267 = vst.msk [vmem:[%s266] sm:$0x1] %vm142, %v264
  %s268 = scalar_lea.vmem %s0, 4
  %v269 = vld [vmem:[%s268] sm:$0x3]
  %v270 = vld [vmem:[#allocation2] sm:$0x3]
  %v271 = vpack.c.bf16 %v270, %v270
  %v272 = vld [vmem:[%s1] sm:$0xf]
  %v273 = vld [vmem:[%s1 + $0x4] sm:$0xf]
  %v274 = vld [vmem:[%s1 + $0x8] sm:$0xf]
  %v275 = vld [vmem:[%s1 + $0xc] sm:$0xf]
  %v280 = vunpack.c.l.b16 %v272
  %v281 = vunpack.c.l.b16 %v273
  %v282 = vunpack.c.l.b16 %v274
  %v283 = vunpack.c.l.b16 %v275
  %v284 = vpack.c.b16 %v281, %v280
  %v285 = vpack.c.b16 %v283, %v282
  %v289 = vsel %vm38, %v271, 0
  %291 = vmatprep.subr.bf16.mxu0 0
  %292 = vmatpush1.bf16.msra.mxu0 %v284
  %293 = vmatprep.subr.bf16.mxu0 0
  %294 = vmatpush1.bf16.msra.mxu0 %v285
  %295 = vmatprep.subr.bf16.mxu0 0
  %296 = vmatpush1.bf16.msra.mxu0 0
  %297 = vmatprep.subr.bf16.mxu0 0
  %298 = vmatpush1.bf16.msra.mxu0 0
  %299 = vmatprep.subr.bf16.mxu0 0
  %300 = vmatpush1.bf16.msra.mxu0 0
  %301 = vmatprep.subr.bf16.mxu0 0
  %302 = vmatpush1.bf16.msra.mxu0 0
  %303 = vmatprep.subr.bf16.mxu0 0
  %304 = vmatpush1.bf16.msra.mxu0 0
  %305 = vmatprep.subr.bf16.mxu0 0
  %306 = vmatpush1.bf16.msra.mxu0 0
  %307 = vmatprep.subr.bf16.mxu0 0
  %308 = vmatpush1.bf16.msra.mxu0 0
  %309 = vmatprep.subr.bf16.mxu0 0
  %310 = vmatpush1.bf16.msra.mxu0 0
  %311 = vmatprep.subr.bf16.mxu0 0
  %312 = vmatpush1.bf16.msra.mxu0 0
  %313 = vmatprep.subr.bf16.mxu0 0
  %314 = vmatpush1.bf16.msra.mxu0 0
  %315 = vmatprep.subr.bf16.mxu0 0
  %316 = vmatpush1.bf16.msra.mxu0 0
  %317 = vmatprep.subr.bf16.mxu0 0
  %318 = vmatpush1.bf16.msra.mxu0 0
  %319 = vmatprep.subr.bf16.mxu0 0
  %320 = vmatpush1.bf16.msra.mxu0 0
  %321 = vmatprep.subr.bf16.mxu0 0
  %322 = vmatpush1.bf16.msra.mxu0 0
  %323 = vmatprep.mubr.bf16.mxu0 0
  %324 = vmatmul.mubr.bf16.gmra.mrb[0].mxu0 %v289
  %v325 = vpop.f32.mrb[0].mxu0
  %v326 = vadd.f32 0.0, %v325
  %v327 = vpop.f32.mrb[0].mxu0
  %v328 = vpop.f32.mrb[0].mxu0
  %v329 = vpop.f32.mrb[0].mxu0
  %330 = vdwg.mxu0
  %v331 = vadd.f32 %v269, %v326
  %v332 = vxor.u32 %v331, 2147483648
  %v333 = vmul.f32 %v332, 1.442695
  %v334 = vpow.pop %v333
  %v335 = vadd.f32 %v334, 1.0
  %v336 = vrcp.pop %v335
  %v337 = vmul.f32 1.0, %v336
  %v338 = vtanh.pop %v331
  %v339 = vld [vmem:[#allocation3] sm:$0x3]
  %341 = vrot.lane.b32.xlu0 %v339, 32
  %v342 = vpop.permute.xlu0 %341
  %v344 = vmul.f32 %v337, %v342
  %346 = vrot.lane.b32.xlu0 %v338, 64
  %v347 = vpop.permute.xlu0 %346
  %v349 = vmul.f32 %v337, %v347
  %351 = vrot.lane.b32.xlu0 %v349, 32
  %v352 = vpop.permute.xlu0 %351
  %v354 = vadd.f32 %v344, %v352
  %v355 = vtanh.pop %v354
  %357 = vrot.lane.b32.xlu0 %v355, 64
  %v358 = vpop.permute.xlu0 %357
  %v360 = vmul.f32 %v337, %v358
  %362 = vrot.lane.b32.xlu0 %v354, 96
  %v363 = vpop.permute.xlu0 %362
  %365 = vst.msk [vmem:[#allocation3] sm:$0x3] %vm116, %v363
  %367 = vrot.lane.b32.xlu0 %v360, 32
  %v368 = vpop.permute.xlu0 %367
  %370 = vst.msk [vmem:[#allocation2] sm:$0x3] %vm116, %v368
  %v371 = vpack.c.bf16 %v360, %v360
  %v374 = vunpack.c.l.s4 1966171168
  %v375 = vunpack.c.0.s8 %v374
  %v376 = vlaneseq
  %v377 = vshrl.u32 %v376, 7
  %v378 = vsub.s32 %v375, %v377
  %v379 = vrot.slane %v371, %v378
  %v381 = vunpack.c.l.s4 1966171168
  %v382 = vunpack.c.0.s8 %v381
  %v383 = vlaneseq
  %v384 = vshrl.u32 %v383, 7
  %v385 = vsub.s32 %v382, %v384
  %v386 = vrot.slane %v379, %v385
  %387 = vrot.lane.b32.xlu0 %v386, 32
  %v388 = vpop.permute.xlu0 %387
  %s390 = scalar_lea.vmem %s2, 2
  %391 = vst.msk [vmem:[%s390] sm:$0x1] %vm142, %v388
  %s392 = scalar_lea.vmem %s0, 6
  %v393 = vld [vmem:[%s392] sm:$0x3]
  %v394 = vld [vmem:[#allocation2] sm:$0x3]
  %v395 = vpack.c.bf16 %v394, %v394
  %v396 = vld [vmem:[%s1] sm:$0xf]
  %v397 = vld [vmem:[%s1 + $0x4] sm:$0xf]
  %v398 = vld [vmem:[%s1 + $0x8] sm:$0xf]
  %v399 = vld [vmem:[%s1 + $0xc] sm:$0xf]
  %v404 = vunpack.c.l.b16 %v396
  %v405 = vunpack.c.l.b16 %v397
  %v406 = vunpack.c.l.b16 %v398
  %v407 = vunpack.c.l.b16 %v399
  %v408 = vpack.c.b16 %v405, %v404
  %v409 = vpack.c.b16 %v407, %v406
  %v413 = vsel %vm38, %v395, 0
  %415 = vmatprep.subr.bf16.mxu0 0
  %416 = vmatpush1.bf16.msra.mxu0 %v408
  %417 = vmatprep.subr.bf16.mxu0 0
  %418 = vmatpush1.bf16.msra.mxu0 %v409
  %419 = vmatprep.subr.bf16.mxu0 0
  %420 = vmatpush1.bf16.msra.mxu0 0
  %421 = vmatprep.subr.bf16.mxu0 0
  %422 = vmatpush1.bf16.msra.mxu0 0
  %423 = vmatprep.subr.bf16.mxu0 0
  %424 = vmatpush1.bf16.msra.mxu0 0
  %425 = vmatprep.subr.bf16.mxu0 0
  %426 = vmatpush1.bf16.msra.mxu0 0
  %427 = vmatprep.subr.bf16.mxu0 0
  %428 = vmatpush1.bf16.msra.mxu0 0
  %429 = vmatprep.subr.bf16.mxu0 0
  %430 = vmatpush1.bf16.msra.mxu0 0
  %431 = vmatprep.subr.bf16.mxu0 0
  %432 = vmatpush1.bf16.msra.mxu0 0
  %433 = vmatprep.subr.bf16.mxu0 0
  %434 = vmatpush1.bf16.msra.mxu0 0
  %435 = vmatprep.subr.bf16.mxu0 0
  %436 = vmatpush1.bf16.msra.mxu0 0
  %437 = vmatprep.subr.bf16.mxu0 0
  %438 = vmatpush1.bf16.msra.mxu0 0
  %439 = vmatprep.subr.bf16.mxu0 0
  %440 = vmatpush1.bf16.msra.mxu0 0
  %441 = vmatprep.subr.bf16.mxu0 0
  %442 = vmatpush1.bf16.msra.mxu0 0
  %443 = vmatprep.subr.bf16.mxu0 0
  %444 = vmatpush1.bf16.msra.mxu0 0
  %445 = vmatprep.subr.bf16.mxu0 0
  %446 = vmatpush1.bf16.msra.mxu0 0
  %447 = vmatprep.mubr.bf16.mxu0 0
  %448 = vmatmul.mubr.bf16.gmra.mrb[0].mxu0 %v413
  %v449 = vpop.f32.mrb[0].mxu0
  %v450 = vadd.f32 0.0, %v449
  %v451 = vpop.f32.mrb[0].mxu0
  %v452 = vpop.f32.mrb[0].mxu0
  %v453 = vpop.f32.mrb[0].mxu0
  %454 = vdwg.mxu0
  %v455 = vadd.f32 %v393, %v450
  %v456 = vxor.u32 %v455, 2147483648
  %v457 = vmul.f32 %v456, 1.442695
  %v458 = vpow.pop %v457
  %v459 = vadd.f32 %v458, 1.0
  %v460 = vrcp.pop %v459
  %v461 = vmul.f32 1.0, %v460
  %v462 = vtanh.pop %v455
  %v463 = vld [vmem:[#allocation3] sm:$0x3]
  %465 = vrot.lane.b32.xlu0 %v463, 32
  %v466 = vpop.permute.xlu0 %465
  %v468 = vmul.f32 %v461, %v466
  %470 = vrot.lane.b32.xlu0 %v462, 64
  %v471 = vpop.permute.xlu0 %470
  %v473 = vmul.f32 %v461, %v471
  %475 = vrot.lane.b32.xlu0 %v473, 32
  %v476 = vpop.permute.xlu0 %475
  %v478 = vadd.f32 %v468, %v476
  %v479 = vtanh.pop %v478
  %481 = vrot.lane.b32.xlu0 %v479, 64
  %v482 = vpop.permute.xlu0 %481
  %v484 = vmul.f32 %v461, %v482
  %486 = vrot.lane.b32.xlu0 %v478, 96
  %v487 = vpop.permute.xlu0 %486
  %489 = vst.msk [vmem:[#allocation3] sm:$0x3] %vm116, %v487
  %491 = vrot.lane.b32.xlu0 %v484, 32
  %v492 = vpop.permute.xlu0 %491
  %494 = vst.msk [vmem:[#allocation2] sm:$0x3] %vm116, %v492
  %v495 = vpack.c.bf16 %v484, %v484
  %v498 = vunpack.c.l.s4 1966171168
  %v499 = vunpack.c.0.s8 %v498
  %v500 = vlaneseq
  %v501 = vshrl.u32 %v500, 7
  %v502 = vsub.s32 %v499, %v501
  %v503 = vrot.slane %v495, %v502
  %v505 = vunpack.c.l.s4 1966171168
  %v506 = vunpack.c.0.s8 %v505
  %v507 = vlaneseq
  %v508 = vshrl.u32 %v507, 7
  %v509 = vsub.s32 %v506, %v508
  %v510 = vrot.slane %v503, %v509
  %511 = vrot.lane.b32.xlu0 %v510, 32
  %v512 = vpop.permute.xlu0 %511
  %s514 = scalar_lea.vmem %s2, 3
  %515 = vst.msk [vmem:[%s514] sm:$0x1] %vm142, %v512
  %s516 = scalar_lea.vmem %s0, 8
  %v517 = vld [vmem:[%s516] sm:$0x3]
  %v518 = vld [vmem:[#allocation2] sm:$0x3]
  %v519 = vpack.c.bf16 %v518, %v518
  %v520 = vld [vmem:[%s1] sm:$0xf]
  %v521 = vld [vmem:[%s1 + $0x4] sm:$0xf]
  %v522 = vld [vmem:[%s1 + $0x8] sm:$0xf]
  %v523 = vld [vmem:[%s1 + $0xc] sm:$0xf]
  %v528 = vunpack.c.l.b16 %v520
  %v529 = vunpack.c.l.b16 %v521
  %v530 = vunpack.c.l.b16 %v522
  %v531 = vunpack.c.l.b16 %v523
  %v532 = vpack.c.b16 %v529, %v528
  %v533 = vpack.c.b16 %v531, %v530
  %v537 = vsel %vm38, %v519, 0
  %539 = vmatprep.subr.bf16.mxu0 0
  %540 = vmatpush1.bf16.msra.mxu0 %v532
  %541 = vmatprep.subr.bf16.mxu0 0
  %542 = vmatpush1.bf16.msra.mxu0 %v533
  %543 = vmatprep.subr.bf16.mxu0 0
  %544 = vmatpush1.bf16.msra.mxu0 0
  %545 = vmatprep.subr.bf16.mxu0 0
  %546 = vmatpush1.bf16.msra.mxu0 0
  %547 = vmatprep.subr.bf16.mxu0 0
  %548 = vmatpush1.bf16.msra.mxu0 0
  %549 = vmatprep.subr.bf16.mxu0 0
  %550 = vmatpush1.bf16.msra.mxu0 0
  %551 = vmatprep.subr.bf16.mxu0 0
  %552 = vmatpush1.bf16.msra.mxu0 0
  %553 = vmatprep.subr.bf16.mxu0 0
  %554 = vmatpush1.bf16.msra.mxu0 0
  %555 = vmatprep.subr.bf16.mxu0 0
  %556 = vmatpush1.bf16.msra.mxu0 0
  %557 = vmatprep.subr.bf16.mxu0 0
  %558 = vmatpush1.bf16.msra.mxu0 0
  %559 = vmatprep.subr.bf16.mxu0 0
  %560 = vmatpush1.bf16.msra.mxu0 0
  %561 = vmatprep.subr.bf16.mxu0 0
  %562 = vmatpush1.bf16.msra.mxu0 0
  %563 = vmatprep.subr.bf16.mxu0 0
  %564 = vmatpush1.bf16.msra.mxu0 0
  %565 = vmatprep.subr.bf16.mxu0 0
  %566 = vmatpush1.bf16.msra.mxu0 0
  %567 = vmatprep.subr.bf16.mxu0 0
  %568 = vmatpush1.bf16.msra.mxu0 0
  %569 = vmatprep.subr.bf16.mxu0 0
  %570 = vmatpush1.bf16.msra.mxu0 0
  %571 = vmatprep.mubr.bf16.mxu0 0
  %572 = vmatmul.mubr.bf16.gmra.mrb[0].mxu0 %v537
  %v573 = vpop.f32.mrb[0].mxu0
  %v574 = vadd.f32 0.0, %v573
  %v575 = vpop.f32.mrb[0].mxu0
  %v576 = vpop.f32.mrb[0].mxu0
  %v577 = vpop.f32.mrb[0].mxu0
  %578 = vdwg.mxu0
  %v579 = vadd.f32 %v517, %v574
  %v580 = vxor.u32 %v579, 2147483648
  %v581 = vmul.f32 %v580, 1.442695
  %v582 = vpow.pop %v581
  %v583 = vadd.f32 %v582, 1.0
  %v584 = vrcp.pop %v583
  %v585 = vmul.f32 1.0, %v584
  %v586 = vtanh.pop %v579
  %v587 = vld [vmem:[#allocation3] sm:$0x3]
  %589 = vrot.lane.b32.xlu0 %v587, 32
  %v590 = vpop.permute.xlu0 %589
  %v592 = vmul.f32 %v585, %v590
  %594 = vrot.lane.b32.xlu0 %v586, 64
  %v595 = vpop.permute.xlu0 %594
  %v597 = vmul.f32 %v585, %v595
  %599 = vrot.lane.b32.xlu0 %v597, 32
  %v600 = vpop.permute.xlu0 %599
  %v602 = vadd.f32 %v592, %v600
  %v603 = vtanh.pop %v602
  %605 = vrot.lane.b32.xlu0 %v603, 64
  %v606 = vpop.permute.xlu0 %605
  %v608 = vmul.f32 %v585, %v606
  %610 = vrot.lane.b32.xlu0 %v602, 96
  %v611 = vpop.permute.xlu0 %610
  %613 = vst.msk [vmem:[#allocation3] sm:$0x3] %vm116, %v611
  %615 = vrot.lane.b32.xlu0 %v608, 32
  %v616 = vpop.permute.xlu0 %615
  %618 = vst.msk [vmem:[#allocation2] sm:$0x3] %vm116, %v616
  %v619 = vpack.c.bf16 %v608, %v608
  %v622 = vunpack.c.l.s4 1966171168
  %v623 = vunpack.c.0.s8 %v622
  %v624 = vlaneseq
  %v625 = vshrl.u32 %v624, 7
  %v626 = vsub.s32 %v623, %v625
  %v627 = vrot.slane %v619, %v626
  %v629 = vunpack.c.l.s4 1966171168
  %v630 = vunpack.c.0.s8 %v629
  %v631 = vlaneseq
  %v632 = vshrl.u32 %v631, 7
  %v633 = vsub.s32 %v630, %v632
  %v634 = vrot.slane %v627, %v633
  %635 = vrot.lane.b32.xlu0 %v634, 32
  %v636 = vpop.permute.xlu0 %635
  %s638 = scalar_lea.vmem %s2, 4
  %639 = vst.msk [vmem:[%s638] sm:$0x1] %vm142, %v636
  %s640 = scalar_lea.vmem %s0, 10
  %v641 = vld [vmem:[%s640] sm:$0x3]
  %v642 = vld [vmem:[#allocation2] sm:$0x3]
  %v643 = vpack.c.bf16 %v642, %v642
  %v644 = vld [vmem:[%s1] sm:$0xf]
  %v645 = vld [vmem:[%s1 + $0x4] sm:$0xf]
  %v646 = vld [vmem:[%s1 + $0x8] sm:$0xf]
  %v647 = vld [vmem:[%s1 + $0xc] sm:$0xf]
  %v652 = vunpack.c.l.b16 %v644
  %v653 = vunpack.c.l.b16 %v645
  %v654 = vunpack.c.l.b16 %v646
  %v655 = vunpack.c.l.b16 %v647
  %v656 = vpack.c.b16 %v653, %v652
  %v657 = vpack.c.b16 %v655, %v654
  %v661 = vsel %vm38, %v643, 0
  %663 = vmatprep.subr.bf16.mxu0 0
  %664 = vmatpush1.bf16.msra.mxu0 %v656
  %665 = vmatprep.subr.bf16.mxu0 0
  %666 = vmatpush1.bf16.msra.mxu0 %v657
  %667 = vmatprep.subr.bf16.mxu0 0
  %668 = vmatpush1.bf16.msra.mxu0 0
  %669 = vmatprep.subr.bf16.mxu0 0
  %670 = vmatpush1.bf16.msra.mxu0 0
  %671 = vmatprep.subr.bf16.mxu0 0
  %672 = vmatpush1.bf16.msra.mxu0 0
  %673 = vmatprep.subr.bf16.mxu0 0
  %674 = vmatpush1.bf16.msra.mxu0 0
  %675 = vmatprep.subr.bf16.mxu0 0
  %676 = vmatpush1.bf16.msra.mxu0 0
  %677 = vmatprep.subr.bf16.mxu0 0
  %678 = vmatpush1.bf16.msra.mxu0 0
  %679 = vmatprep.subr.bf16.mxu0 0
  %680 = vmatpush1.bf16.msra.mxu0 0
  %681 = vmatprep.subr.bf16.mxu0 0
  %682 = vmatpush1.bf16.msra.mxu0 0
  %683 = vmatprep.subr.bf16.mxu0 0
  %684 = vmatpush1.bf16.msra.mxu0 0
  %685 = vmatprep.subr.bf16.mxu0 0
  %686 = vmatpush1.bf16.msra.mxu0 0
  %687 = vmatprep.subr.bf16.mxu0 0
  %688 = vmatpush1.bf16.msra.mxu0 0
  %689 = vmatprep.subr.bf16.mxu0 0
  %690 = vmatpush1.bf16.msra.mxu0 0
  %691 = vmatprep.subr.bf16.mxu0 0
  %692 = vmatpush1.bf16.msra.mxu0 0
  %693 = vmatprep.subr.bf16.mxu0 0
  %694 = vmatpush1.bf16.msra.mxu0 0
  %695 = vmatprep.mubr.bf16.mxu0 0
  %696 = vmatmul.mubr.bf16.gmra.mrb[0].mxu0 %v661
  %v697 = vpop.f32.mrb[0].mxu0
  %v698 = vadd.f32 0.0, %v697
  %v699 = vpop.f32.mrb[0].mxu0
  %v700 = vpop.f32.mrb[0].mxu0
  %v701 = vpop.f32.mrb[0].mxu0
  %702 = vdwg.mxu0
  %v703 = vadd.f32 %v641, %v698
  %v704 = vxor.u32 %v703, 2147483648
  %v705 = vmul.f32 %v704, 1.442695
  %v706 = vpow.pop %v705
  %v707 = vadd.f32 %v706, 1.0
  %v708 = vrcp.pop %v707
  %v709 = vmul.f32 1.0, %v708
  %v710 = vtanh.pop %v703
  %v711 = vld [vmem:[#allocation3] sm:$0x3]
  %713 = vrot.lane.b32.xlu0 %v711, 32
  %v714 = vpop.permute.xlu0 %713
  %v716 = vmul.f32 %v709, %v714
  %718 = vrot.lane.b32.xlu0 %v710, 64
  %v719 = vpop.permute.xlu0 %718
  %v721 = vmul.f32 %v709, %v719
  %723 = vrot.lane.b32.xlu0 %v721, 32
  %v724 = vpop.permute.xlu0 %723
  %v726 = vadd.f32 %v716, %v724
  %v727 = vtanh.pop %v726
  %729 = vrot.lane.b32.xlu0 %v727, 64
  %v730 = vpop.permute.xlu0 %729
  %v732 = vmul.f32 %v709, %v730
  %734 = vrot.lane.b32.xlu0 %v726, 96
  %v735 = vpop.permute.xlu0 %734
  %737 = vst.msk [vmem:[#allocation3] sm:$0x3] %vm116, %v735
  %739 = vrot.lane.b32.xlu0 %v732, 32
  %v740 = vpop.permute.xlu0 %739
  %742 = vst.msk [vmem:[#allocation2] sm:$0x3] %vm116, %v740
  %v743 = vpack.c.bf16 %v732, %v732
  %v746 = vunpack.c.l.s4 1966171168
  %v747 = vunpack.c.0.s8 %v746
  %v748 = vlaneseq
  %v749 = vshrl.u32 %v748, 7
  %v750 = vsub.s32 %v747, %v749
  %v751 = vrot.slane %v743, %v750
  %v753 = vunpack.c.l.s4 1966171168
  %v754 = vunpack.c.0.s8 %v753
  %v755 = vlaneseq
  %v756 = vshrl.u32 %v755, 7
  %v757 = vsub.s32 %v754, %v756
  %v758 = vrot.slane %v751, %v757
  %759 = vrot.lane.b32.xlu0 %v758, 32
  %v760 = vpop.permute.xlu0 %759
  %s762 = scalar_lea.vmem %s2, 5
  %763 = vst.msk [vmem:[%s762] sm:$0x1] %vm142, %v760
  %s764 = scalar_lea.vmem %s0, 12
  %v765 = vld [vmem:[%s764] sm:$0x3]
  %v766 = vld [vmem:[#allocation2] sm:$0x3]
  %v767 = vpack.c.bf16 %v766, %v766
  %v768 = vld [vmem:[%s1] sm:$0xf]
  %v769 = vld [vmem:[%s1 + $0x4] sm:$0xf]
  %v770 = vld [vmem:[%s1 + $0x8] sm:$0xf]
  %v771 = vld [vmem:[%s1 + $0xc] sm:$0xf]
  %v776 = vunpack.c.l.b16 %v768
  %v777 = vunpack.c.l.b16 %v769
  %v778 = vunpack.c.l.b16 %v770
  %v779 = vunpack.c.l.b16 %v771
  %v780 = vpack.c.b16 %v777, %v776
  %v781 = vpack.c.b16 %v779, %v778
  %v785 = vsel %vm38, %v767, 0
  %787 = vmatprep.subr.bf16.mxu0 0
  %788 = vmatpush1.bf16.msra.mxu0 %v780
  %789 = vmatprep.subr.bf16.mxu0 0
  %790 = vmatpush1.bf16.msra.mxu0 %v781
  %791 = vmatprep.subr.bf16.mxu0 0
  %792 = vmatpush1.bf16.msra.mxu0 0
  %793 = vmatprep.subr.bf16.mxu0 0
  %794 = vmatpush1.bf16.msra.mxu0 0
  %795 = vmatprep.subr.bf16.mxu0 0
  %796 = vmatpush1.bf16.msra.mxu0 0
  %797 = vmatprep.subr.bf16.mxu0 0
  %798 = vmatpush1.bf16.msra.mxu0 0
  %799 = vmatprep.subr.bf16.mxu0 0
  %800 = vmatpush1.bf16.msra.mxu0 0
  %801 = vmatprep.subr.bf16.mxu0 0
  %802 = vmatpush1.bf16.msra.mxu0 0
  %803 = vmatprep.subr.bf16.mxu0 0
  %804 = vmatpush1.bf16.msra.mxu0 0
  %805 = vmatprep.subr.bf16.mxu0 0
  %806 = vmatpush1.bf16.msra.mxu0 0
  %807 = vmatprep.subr.bf16.mxu0 0
  %808 = vmatpush1.bf16.msra.mxu0 0
  %809 = vmatprep.subr.bf16.mxu0 0
  %810 = vmatpush1.bf16.msra.mxu0 0
  %811 = vmatprep.subr.bf16.mxu0 0
  %812 = vmatpush1.bf16.msra.mxu0 0
  %813 = vmatprep.subr.bf16.mxu0 0
  %814 = vmatpush1.bf16.msra.mxu0 0
  %815 = vmatprep.subr.bf16.mxu0 0
  %816 = vmatpush1.bf16.msra.mxu0 0
  %817 = vmatprep.subr.bf16.mxu0 0
  %818 = vmatpush1.bf16.msra.mxu0 0
  %819 = vmatprep.mubr.bf16.mxu0 0
  %820 = vmatmul.mubr.bf16.gmra.mrb[0].mxu0 %v785
  %v821 = vpop.f32.mrb[0].mxu0
  %v822 = vadd.f32 0.0, %v821
  %v823 = vpop.f32.mrb[0].mxu0
  %v824 = vpop.f32.mrb[0].mxu0
  %v825 = vpop.f32.mrb[0].mxu0
  %826 = vdwg.mxu0
  %v827 = vadd.f32 %v765, %v822
  %v828 = vxor.u32 %v827, 2147483648
  %v829 = vmul.f32 %v828, 1.442695
  %v830 = vpow.pop %v829
  %v831 = vadd.f32 %v830, 1.0
  %v832 = vrcp.pop %v831
  %v833 = vmul.f32 1.0, %v832
  %v834 = vtanh.pop %v827
  %v835 = vld [vmem:[#allocation3] sm:$0x3]
  %837 = vrot.lane.b32.xlu0 %v835, 32
  %v838 = vpop.permute.xlu0 %837
  %v840 = vmul.f32 %v833, %v838
  %842 = vrot.lane.b32.xlu0 %v834, 64
  %v843 = vpop.permute.xlu0 %842
  %v845 = vmul.f32 %v833, %v843
  %847 = vrot.lane.b32.xlu0 %v845, 32
  %v848 = vpop.permute.xlu0 %847
  %v850 = vadd.f32 %v840, %v848
  %v851 = vtanh.pop %v850
  %853 = vrot.lane.b32.xlu0 %v851, 64
  %v854 = vpop.permute.xlu0 %853
  %v856 = vmul.f32 %v833, %v854
  %858 = vrot.lane.b32.xlu0 %v850, 96
  %v859 = vpop.permute.xlu0 %858
  %861 = vst.msk [vmem:[#allocation3] sm:$0x3] %vm116, %v859
  %863 = vrot.lane.b32.xlu0 %v856, 32
  %v864 = vpop.permute.xlu0 %863
  %866 = vst.msk [vmem:[#allocation2] sm:$0x3] %vm116, %v864
  %v867 = vpack.c.bf16 %v856, %v856
  %v870 = vunpack.c.l.s4 1966171168
  %v871 = vunpack.c.0.s8 %v870
  %v872 = vlaneseq
  %v873 = vshrl.u32 %v872, 7
  %v874 = vsub.s32 %v871, %v873
  %v875 = vrot.slane %v867, %v874
  %v877 = vunpack.c.l.s4 1966171168
  %v878 = vunpack.c.0.s8 %v877
  %v879 = vlaneseq
  %v880 = vshrl.u32 %v879, 7
  %v881 = vsub.s32 %v878, %v880
  %v882 = vrot.slane %v875, %v881
  %883 = vrot.lane.b32.xlu0 %v882, 32
  %v884 = vpop.permute.xlu0 %883
  %s886 = scalar_lea.vmem %s2, 6
  %887 = vst.msk [vmem:[%s886] sm:$0x1] %vm142, %v884
  %s888 = scalar_lea.vmem %s0, 14
  %v889 = vld [vmem:[%s888] sm:$0x3]
  %v890 = vld [vmem:[#allocation2] sm:$0x3]
  %v891 = vpack.c.bf16 %v890, %v890
  %v892 = vld [vmem:[%s1] sm:$0xf]
  %v893 = vld [vmem:[%s1 + $0x4] sm:$0xf]
  %v894 = vld [vmem:[%s1 + $0x8] sm:$0xf]
  %v895 = vld [vmem:[%s1 + $0xc] sm:$0xf]
  %v900 = vunpack.c.l.b16 %v892
  %v901 = vunpack.c.l.b16 %v893
  %v902 = vunpack.c.l.b16 %v894
  %v903 = vunpack.c.l.b16 %v895
  %v904 = vpack.c.b16 %v901, %v900
  %v905 = vpack.c.b16 %v903, %v902
  %v909 = vsel %vm38, %v891, 0
  %911 = vmatprep.subr.bf16.mxu0 0
  %912 = vmatpush1.bf16.msra.mxu0 %v904
  %913 = vmatprep.subr.bf16.mxu0 0
  %914 = vmatpush1.bf16.msra.mxu0 %v905
  %915 = vmatprep.subr.bf16.mxu0 0
  %916 = vmatpush1.bf16.msra.mxu0 0
  %917 = vmatprep.subr.bf16.mxu0 0
  %918 = vmatpush1.bf16.msra.mxu0 0
  %919 = vmatprep.subr.bf16.mxu0 0
  %920 = vmatpush1.bf16.msra.mxu0 0
  %921 = vmatprep.subr.bf16.mxu0 0
  %922 = vmatpush1.bf16.msra.mxu0 0
  %923 = vmatprep.subr.bf16.mxu0 0
  %924 = vmatpush1.bf16.msra.mxu0 0
  %925 = vmatprep.subr.bf16.mxu0 0
  %926 = vmatpush1.bf16.msra.mxu0 0
  %927 = vmatprep.subr.bf16.mxu0 0
  %928 = vmatpush1.bf16.msra.mxu0 0
  %929 = vmatprep.subr.bf16.mxu0 0
  %930 = vmatpush1.bf16.msra.mxu0 0
  %931 = vmatprep.subr.bf16.mxu0 0
  %932 = vmatpush1.bf16.msra.mxu0 0
  %933 = vmatprep.subr.bf16.mxu0 0
  %934 = vmatpush1.bf16.msra.mxu0 0
  %935 = vmatprep.subr.bf16.mxu0 0
  %936 = vmatpush1.bf16.msra.mxu0 0
  %937 = vmatprep.subr.bf16.mxu0 0
  %938 = vmatpush1.bf16.msra.mxu0 0
  %939 = vmatprep.subr.bf16.mxu0 0
  %940 = vmatpush1.bf16.msra.mxu0 0
  %941 = vmatprep.subr.bf16.mxu0 0
  %942 = vmatpush1.bf16.msra.mxu0 0
  %943 = vmatprep.mubr.bf16.mxu0 0
  %944 = vmatmul.mubr.bf16.gmra.mrb[0].mxu0 %v909
  %v945 = vpop.f32.mrb[0].mxu0
  %v946 = vadd.f32 0.0, %v945
  %v947 = vpop.f32.mrb[0].mxu0
  %v948 = vpop.f32.mrb[0].mxu0
  %v949 = vpop.f32.mrb[0].mxu0
  %950 = vdwg.mxu0
  %v951 = vadd.f32 %v889, %v946
  %v952 = vxor.u32 %v951, 2147483648
  %v953 = vmul.f32 %v952, 1.442695
  %v954 = vpow.pop %v953
  %v955 = vadd.f32 %v954, 1.0
  %v956 = vrcp.pop %v955
  %v957 = vmul.f32 1.0, %v956
  %v958 = vtanh.pop %v951
  %v959 = vld [vmem:[#allocation3] sm:$0x3]
  %961 = vrot.lane.b32.xlu0 %v959, 32
  %v962 = vpop.permute.xlu0 %961
  %v964 = vmul.f32 %v957, %v962
  %966 = vrot.lane.b32.xlu0 %v958, 64
  %v967 = vpop.permute.xlu0 %966
  %v969 = vmul.f32 %v957, %v967
  %971 = vrot.lane.b32.xlu0 %v969, 32
  %v972 = vpop.permute.xlu0 %971
  %v974 = vadd.f32 %v964, %v972
  %v975 = vtanh.pop %v974
  %977 = vrot.lane.b32.xlu0 %v975, 64
  %v978 = vpop.permute.xlu0 %977
  %v980 = vmul.f32 %v957, %v978
  %982 = vrot.lane.b32.xlu0 %v974, 96
  %v983 = vpop.permute.xlu0 %982
  %985 = vst.msk [vmem:[#allocation3] sm:$0x3] %vm116, %v983
  %987 = vrot.lane.b32.xlu0 %v980, 32
  %v988 = vpop.permute.xlu0 %987
  %990 = vst.msk [vmem:[#allocation2] sm:$0x3] %vm116, %v988
  %v991 = vpack.c.bf16 %v980, %v980
  %v994 = vunpack.c.l.s4 1966171168
  %v995 = vunpack.c.0.s8 %v994
  %v996 = vlaneseq
  %v997 = vshrl.u32 %v996, 7
  %v998 = vsub.s32 %v995, %v997
  %v999 = vrot.slane %v991, %v998
  %v1001 = vunpack.c.l.s4 1966171168
  %v1002 = vunpack.c.0.s8 %v1001
  %v1003 = vlaneseq
  %v1004 = vshrl.u32 %v1003, 7
  %v1005 = vsub.s32 %v1002, %v1004
  %v1006 = vrot.slane %v999, %v1005
  %1007 = vrot.lane.b32.xlu0 %v1006, 32
  %v1008 = vpop.permute.xlu0 %1007
  %s1010 = scalar_lea.vmem %s2, 7
  %1011 = vst.msk [vmem:[%s1010] sm:$0x1] %vm142, %v1008
  // Predicated region
  $region14: #{rnnt_forward.10} parent=0 // pred_check
    _
  $region15: #{rnnt_forward.10} parent=0 // pred_check_branch
    %1013 = sbr.rel (0) target = $region17
  $region16: #{rnnt_forward.10} parent=0 // pred_region
    _
  $region17: #{rnnt_forward.10} parent=0 // pred_fallthru
    _
  // Predicated region
  $region18: #{rnnt_forward.10} parent=0 // pred_check
    _
  $region19: #{rnnt_forward.10} parent=0 // pred_check_branch
    %1015 = sbr.rel (0) target = $region21
  $region20: #{rnnt_forward.10} parent=0 // pred_region
    _
  $region21: #{rnnt_forward.10} parent=0 // pred_fallthru
    _

</llo_original>
